<compile_context>
chip_gen: v6e
topology: v6e:2x2x1
jax: 0.10.0
libtpu: 0.0.40
codegen_flags: <defaults>
</compile_context>

<pallas_src>
import jax
import jax.numpy as jnp
from jax import lax
from jax.experimental import pallas as pl
from jax.experimental.pallas import tpu as pltpu


# --------------------------------------------------------------------------
# Pallas kernel 1: lane-packed bidirectional LSTM, grid=(2,) over ENCODER
# (question / header).  Input projection is hoisted out of the recurrence;
# the T-step loop is a static unroll (T <= 8).
# Packed column layout (8H lanes): [i_f|i_b|f_f|f_b|g_f|g_b|o_f|o_b].
# --------------------------------------------------------------------------
def _bilstm_pair_kernel(lens_ref, x_ref, w_ih_ref, w_hh_ref, b_ref,
                        h0_ref, c0_ref, out_f_ref, out_b_ref):
    T, N, H = out_f_ref.shape
    H2, G = 2 * H, 8 * H

    # Hoisted input projection for BOTH directions: one full-lane MXU pass.
    gx = (jnp.dot(x_ref[...], w_ih_ref[...], preferred_element_type=jnp.float32)
          + b_ref[...])                                               # [T*N, 8H]

    w_hh = w_hh_ref[...]                                              # [2H, 8H] block-diag per gate
    lens = lens_ref[...]                                              # [N, 1] int32

    # Compile-time lane selectors: first H of every 2H group = forward dir.
    fwd_gate_cols = (lax.broadcasted_iota(jnp.int32, (1, G), 1) % H2) < H
    fwd_state_cols = lax.broadcasted_iota(jnp.int32, (1, H2), 1) < H

    h = jnp.broadcast_to(h0_ref[...], (N, H2))                        # [N, 2H]
    c = jnp.broadcast_to(c0_ref[...], (N, H2))

    for s in range(T):                         # static unroll
        tb = T - 1 - s                         # backward direction walks T-1..0
        # fwd gate inputs come from time s, bwd gate inputs from time tb
        gin = jnp.where(fwd_gate_cols,
                        gx[s * N:(s + 1) * N, :],
                        gx[tb * N:(tb + 1) * N, :])                   # [N, 8H]
        gates = gin + jnp.dot(h, w_hh, preferred_element_type=jnp.float32)
        i_g = jax.nn.sigmoid(gates[:, 0 * H2:1 * H2])
        f_g = jax.nn.sigmoid(gates[:, 1 * H2:2 * H2])
        g_g = jnp.tanh(gates[:, 2 * H2:3 * H2])
        o_g = jax.nn.sigmoid(gates[:, 3 * H2:4 * H2])
        c_new = f_g * c + i_g * g_g
        h_new = o_g * jnp.tanh(c_new)

        # packed-sequence masking: state frozen / output zeroed at padded steps
        valid_f = s < lens                                            # [N, 1]
        valid_b = tb < lens                                           # [N, 1]
        t_per_col = jnp.where(fwd_state_cols, s, tb)                  # [1, 2H] constant
        valid = t_per_col < lens                                      # [N, 2H]

        h = jnp.where(valid, h_new, h)
        c = jnp.where(valid, c_new, c)
        out_f_ref[s] = jnp.where(valid_f, h_new[:, 0:H], 0.0)         # pad_packed -> 0
        out_b_ref[tb] = jnp.where(valid_b, h_new[:, H:H2], 0.0)


def _run_bilstm_pair(lens2, x2, w_ih2, w_hh2, b2, h02, c02, T, N, D, H):
    H2, G = 2 * H, 8 * H
    flops = 2 * (2 * T * N * G * (D + H2))                 # both encoders
    transcend = 2 * (T * N * 5 * H2)
    bytes_acc = 4 * (2 * N + 2 * T * N * D + 2 * D * G + 2 * H2 * G + 2 * G
                     + 4 * H2 + 2 * 2 * T * N * H)
    return pl.pallas_call(
        _bilstm_pair_kernel,
        out_shape=(jax.ShapeDtypeStruct((2, T, N, H), jnp.float32),   # forward outputs
                   jax.ShapeDtypeStruct((2, T, N, H), jnp.float32)),  # backward outputs
        grid_spec=pltpu.PrefetchScalarGridSpec(
            num_scalar_prefetch=0,
            grid=(2,),                                                # which encoder
            in_specs=[
                pl.BlockSpec((None, N, 1), lambda e: (e, 0, 0)),      # lens
                pl.BlockSpec((None, T * N, D), lambda e: (e, 0, 0)),  # x (time-major rows)
                pl.BlockSpec((None, D, G), lambda e: (e, 0, 0)),      # packed W_ih
                pl.BlockSpec((None, H2, G), lambda e: (e, 0, 0)),     # packed block-diag W_hh
                pl.BlockSpec((None, 1, G), lambda e: (e, 0, 0)),      # packed bias
                pl.BlockSpec((None, 1, H2), lambda e: (e, 0, 0)),     # h0 (fwd|bwd packed)
                pl.BlockSpec((None, 1, H2), lambda e: (e, 0, 0)),     # c0
            ],
            out_specs=(pl.BlockSpec((None, T, N, H), lambda e: (e, 0, 0, 0)),
                       pl.BlockSpec((None, T, N, H), lambda e: (e, 0, 0, 0))),
        ),
        compiler_params=pltpu.CompilerParams(dimension_semantics=("arbitrary",)),
        cost_estimate=pl.CostEstimate(flops=int(flops),
                                      transcendentals=int(transcend),
                                      bytes_accessed=int(bytes_acc)),
    )(lens2, x2, w_ih2, w_hh2, b2, h02, c02)


def encode_question_and_headers(q_emb, q_lens, h_emb_flat, h_lens_flat, enc_q, enc_h):
    """Run both BiLSTM encoders in one pallas_call.  Returns
    (q_enc [B, T_q, 2H], h_enc [B*max_h, T_h, 2H])."""
    B, T_q, D = q_emb.shape
    NH, T_h, _ = h_emb_flat.shape
    H = enc_q["h0"].shape[-1] // 2
    T, N = max(T_q, T_h), max(B, NH)

    def prep(x, lens):
        n, t, d = x.shape
        x = jnp.pad(x, ((0, N - n), (0, T - t), (0, 0)))
        lens = jnp.pad(lens.astype(jnp.int32), (0, N - n))
        return (jnp.transpose(x, (1, 0, 2)).reshape(T * N, d),        # time-major rows
                lens.reshape(N, 1))

    xq, lq = prep(q_emb, q_lens)
    xh, lh = prep(h_emb_flat, h_lens_flat)

    stack = lambda k: jnp.stack([enc_q[k], enc_h[k]], axis=0)
    out_f, out_b = _run_bilstm_pair(
        jnp.stack([lq, lh], axis=0), jnp.stack([xq, xh], axis=0),
        stack("w_ih"), stack("w_hh"), stack("b"), stack("h0"), stack("c0"),
        T, N, D, H)

    def unpack(e, n_rows, t_len):
        enc = jnp.concatenate([out_f[e], out_b[e]], axis=-1)          # [T, N, 2H]
        return jnp.transpose(enc, (1, 0, 2))[:n_rows, :t_len, :]      # [rows, t_len, 2H]

    return unpack(0, B, T_q), unpack(1, NH, T_h)


# --------------------------------------------------------------------------
# Pallas kernel 2: fused attention (W_att, scores, masked softmax, context)
# + output MLP (W_q, W_h, W_out).  Only the per-example softmax/context path
# runs in a tiny unrolled loop (contexts into a VMEM scratch); the output MLP
# is batched over all B*W rows and stored once as a [B*W, n_op] slab.
# --------------------------------------------------------------------------
def where_op_scores(q_enc, q_lens, h_where, p):
    B, T, D = q_enc.shape
    W = h_where.shape[1]
    n_op = p["w_out2"].shape[1]

    q2 = q_enc.reshape(B * T, D)
    hw2 = h_where.reshape(B * W, D)

    def kernel(qlens_ref, q_ref, hw_ref,
               watt_ref, batt_ref, wq_ref, bq_ref, wh_ref, bh_ref,
               w1q_ref, w1h_ref, b1_ref, w2_ref, b2_ref,
               out_ref, ctx_ref):
        q = q_ref[...]                                                # [B*T, D]
        hw = hw_ref[...]                                              # [B*W, D]

        # batched row-wise Linear over ALL question rows (one MXU pass)
        q_att = (jnp.dot(q, watt_ref[...], preferred_element_type=jnp.float32)
                 + batt_ref[...])                                     # [B*T, D]

        # per-example attention: scores -> masked softmax -> context
        for b in range(B):                     # static unroll over tiny batch
            q_b = q[b * T:(b + 1) * T, :]                             # [T, D]
            qa_b = q_att[b * T:(b + 1) * T, :]                        # [T, D]
            hw_b = hw[b * W:(b + 1) * W, :]                           # [W, D]

            # att_weights[w, t] = < W_att(q_enc)[t, :], h_pooling_where[w, :] >
            scores = lax.dot_general(hw_b, qa_b, (((1,), (1,)), ((), ())),
                                     preferred_element_type=jnp.float32)  # [W, T]

            # masked softmax over question length (guard len==0 -> no NaN)
            qlen = jnp.maximum(qlens_ref[b], 1)
            mask = lax.broadcasted_iota(jnp.int32, (W, T), 1) < qlen
            s = jnp.where(mask, scores, -jnp.inf)
            m = jnp.max(s, axis=-1, keepdims=True)
            e = jnp.where(mask, jnp.exp(s - m), 0.0)
            att = e / jnp.sum(e, axis=-1, keepdims=True)              # [W, T]

            # q_context = sum_t att[w, t] * q_enc[t, :]  -> VMEM scratch
            ctx_ref[b * W:(b + 1) * W, :] = jnp.dot(
                att, q_b, preferred_element_type=jnp.float32)         # [W, D]

        # batched output MLP over all B*W rows, single lane-dense store
        ctx = ctx_ref[...]
        wq_ctx = (jnp.dot(ctx, wq_ref[...], preferred_element_type=jnp.float32)
                  + bq_ref[...])                                      # [B*W, D]
        wh_all = (jnp.dot(hw, wh_ref[...], preferred_element_type=jnp.float32)
                  + bh_ref[...])                                      # [B*W, D]
        hidden = jnp.tanh(
            jnp.dot(wq_ctx, w1q_ref[...], preferred_element_type=jnp.float32)
            + jnp.dot(wh_all, w1h_ref[...], preferred_element_type=jnp.float32)
            + b1_ref[...])                                            # [B*W, D]
        out_ref[...] = (jnp.dot(hidden, w2_ref[...],
                                preferred_element_type=jnp.float32) + b2_ref[...])

    full = lambda i, ql: (0, 0)
    flops = 2 * (B * T * D * D + 4 * B * W * D * D + 2 * B * W * T * D
                 + B * W * D * n_op)
    transcend = B * W * (T + D)
    bytes_acc = 4 * (B + B * T * D + B * W * D + 5 * D * D + 4 * D
                     + D * n_op + n_op + B * W * n_op)

    out = pl.pallas_call(
        kernel,
        out_shape=jax.ShapeDtypeStruct((B * W, n_op), jnp.float32),
        grid_spec=pltpu.PrefetchScalarGridSpec(
            num_scalar_prefetch=1,                                    # q_lens -> SMEM
            grid=(1,),                                                # whole batch, one step
            in_specs=[
                pl.BlockSpec((B * T, D), full),                       # q_enc rows
                pl.BlockSpec((B * W, D), full),                       # h_pooling_where rows
                pl.BlockSpec((D, D), full), pl.BlockSpec((1, D), full),        # W_att
                pl.BlockSpec((D, D), full), pl.BlockSpec((1, D), full),        # W_q
                pl.BlockSpec((D, D), full), pl.BlockSpec((1, D), full),        # W_h
                pl.BlockSpec((D, D), full),                                    # W_out[0] (q half)
                pl.BlockSpec((D, D), full),                                    # W_out[0] (h half)
                pl.BlockSpec((1, D), full),                                    # W_out[0] bias
                pl.BlockSpec((D, n_op), full), pl.BlockSpec((1, n_op), full),  # W_out[2]
            ],
            out_specs=pl.BlockSpec((B * W, n_op), full),
            scratch_shapes=[pltpu.VMEM((B * W, D), jnp.float32)],     # contexts
        ),
        compiler_params=pltpu.CompilerParams(dimension_semantics=("arbitrary",)),
        cost_estimate=pl.CostEstimate(flops=int(flops),
                                      transcendentals=int(transcend),
                                      bytes_accessed=int(bytes_acc)),
    )(q_lens.astype(jnp.int32), q2, hw2,
      p["w_att"], p["b_att"], p["w_q"], p["b_q"], p["w_h"], p["b_h"],
      p["w_out1_q"], p["w_out1_h"], p["b_out1"], p["w_out2"], p["b_out2"])
    return out.reshape(B, W, n_op)


# --------------------------------------------------------------------------
# Parameter construction (deterministic, synthetic; LSTM weights stored in
# the lane-packed layout the kernel consumes) and full forward glue.
# --------------------------------------------------------------------------
def init_params(key, d_in, d_h, n_op):
    H = d_h // 2
    H2, G = 2 * H, 8 * H
    INI = 0.01
    keys = list(jax.random.split(key, 32))
    ki = iter(keys)

    def unif(shape, bound):
        return jax.random.uniform(next(ki), shape, minval=-bound, maxval=bound,
                                  dtype=jnp.float32)

    def pack_cols(wf, wb):
        # [R, 4H] fwd / bwd -> [R, 8H] with per-gate interleave [i_f|i_b|f_f|f_b|...]
        R = wf.shape[0]
        return jnp.stack([wf.reshape(R, 4, H), wb.reshape(R, 4, H)],
                         axis=2).reshape(R, G)

    def encoder(d_input):
        bound = 1.0 / float(H) ** 0.5
        w_ih_f, w_hh_f = unif((d_input, 4 * H), bound), unif((H, 4 * H), bound)
        b_f = unif((1, 4 * H), bound) + unif((1, 4 * H), bound)      # b_ih + b_hh
        w_ih_b, w_hh_b = unif((d_input, 4 * H), bound), unif((H, 4 * H), bound)
        b_b = unif((1, 4 * H), bound) + unif((1, 4 * H), bound)
        init_h, init_c = unif((2, H), INI), unif((2, H), INI)
        w_hh = jnp.concatenate(
            [pack_cols(w_hh_f, jnp.zeros_like(w_hh_f)),               # fwd-h rows
             pack_cols(jnp.zeros_like(w_hh_b), w_hh_b)], axis=0)      # bwd-h rows
        return dict(w_ih=pack_cols(w_ih_f, w_ih_b),                   # [D, 8H]
                    w_hh=w_hh,                                        # [2H, 8H]
                    b=pack_cols(b_f, b_b),                            # [1, 8H]
                    h0=init_h.reshape(1, H2),                         # [1, 2H]  (fwd|bwd)
                    c0=init_c.reshape(1, H2))

    def linear(d1, d2):
        bound = 1.0 / float(d1) ** 0.5
        return unif((d1, d2), bound), unif((1, d2), bound)

    q_encoder = encoder(d_in)
    h_encoder = encoder(d_in)
    w_att, b_att = linear(d_h, d_h)
    w_q, b_q = linear(d_h, d_h)
    w_h, b_h = linear(d_h, d_h)
    w_out1, b_out1 = linear(2 * d_h, d_h)
    w_out2, b_out2 = linear(d_h, n_op)

    return dict(q_encoder=q_encoder, h_encoder=h_encoder,
                w_att=w_att, b_att=b_att, w_q=w_q, b_q=b_q, w_h=w_h, b_h=b_h,
                w_out1_q=w_out1[:d_h], w_out1_h=w_out1[d_h:], b_out1=b_out1,
                w_out2=w_out2, b_out2=b_out2)


def where_operator_forward(params, q_emb, q_lens, h_emb, h_lens, h_nums,
                           where_cols, max_where_num):
    B, T_q, d_in = q_emb.shape
    _, max_h, T_h, _ = h_emb.shape
    d_h = params["w_att"].shape[0]

    # One fused pallas_call encodes question tokens AND all header token
    # sequences (both bidirectional LSTMs, lane-packed).
    h_flat = h_emb.reshape(B * max_h, T_h, d_in)
    hl_flat = h_lens.reshape(B * max_h)
    q_enc, h_enc = encode_question_and_headers(
        q_emb, q_lens, h_flat, hl_flat,
        params["q_encoder"], params["h_encoder"])     # [B,T_q,d_h], [B*max_h,T_h,d_h]

    # encode_header pooling over valid tokens (padded positions are zero).
    # TODO(synk): upstream encode_header's pooling_type implementation is not
    # shown; 'avg' pooling over valid token positions is assumed here.
    h_pool = h_enc.sum(axis=1) / jnp.maximum(hl_flat, 1)[:, None].astype(jnp.float32)
    h_pool = h_pool.reshape(B, max_h, d_h)
    col_idx = jnp.arange(max_h)[None, :]
    h_pool = jnp.where((col_idx < h_nums[:, None])[:, :, None], h_pool, 0.0)

    # gather where-columns, pad with zero rows (static python lists -> host glue)
    rows = []
    for b, cols in enumerate(where_cols):
        parts = []
        if len(cols) > 0:
            parts.append(h_pool[b, jnp.asarray(cols, jnp.int32), :])
        parts.append(jnp.zeros((max_where_num - len(cols), d_h), jnp.float32))
        rows.append(jnp.concatenate(parts, axis=0))
    h_where = jnp.stack(rows, axis=0)                                 # [B, W, d_h]
    # Note: zero-padded where-rows still flow through attention/MLP; their
    # outputs are finite-but-meaningless (caller masks downstream, as in torch).

    # fused attention + output MLP kernel (single grid step over the batch)
    return where_op_scores(q_enc, q_lens, h_where, params)            # [B, W, n_op]


if __name__ == "__main__":
    B, T_q, T_h = 2, 8, 6
    d_in, d_h = 32, 32
    n_op, max_where_num, max_h = 4, 4, 5

    root = jax.random.PRNGKey(0)
    k_par, k_q, k_h = jax.random.split(root, 3)
    params = init_params(k_par, d_in, d_h, n_op)

    q_emb = jax.random.normal(k_q, (B, T_q, d_in), dtype=jnp.float32)
    h_emb = jax.random.normal(k_h, (B, max_h, T_h, d_in), dtype=jnp.float32)
    q_lens = jnp.array([8, 6], dtype=jnp.int32)
    h_lens = jnp.array([[6, 4, 5, 3, 6],
                        [5, 6, 2, 4, 3]], dtype=jnp.int32)
    h_nums = jnp.array([5, 3], dtype=jnp.int32)
    where_cols = [[0, 2], [1]]

    score = where_operator_forward(params, q_emb, q_lens, h_emb, h_lens,
                                   h_nums, where_cols, max_where_num)
    score = jax.block_until_ready(score)
    assert score.shape == (B, max_where_num, n_op)
    assert bool(jnp.all(jnp.isfinite(score)))
    print("KERNEL_OK")
</pallas_src>

<mosaic_0001>
module attributes {stable_mosaic.version = 11 : i64} {
  func.func @_bilstm_pair_kernel(%arg0: i32, %arg1: memref<1x10x1xi32, #tpu.memory_space<vmem>>, %arg2: memref<1x80x32xf32, #tpu.memory_space<vmem>>, %arg3: memref<1x32x128xf32, #tpu.memory_space<vmem>>, %arg4: memref<1x32x128xf32, #tpu.memory_space<vmem>>, %arg5: memref<1x1x128xf32, #tpu.memory_space<vmem>>, %arg6: memref<1x1x32xf32, #tpu.memory_space<vmem>>, %arg7: memref<1x1x32xf32, #tpu.memory_space<vmem>>, %arg8: memref<1x8x10x16xf32, #tpu.memory_space<vmem>>, %arg9: memref<1x8x10x16xf32, #tpu.memory_space<vmem>>) attributes {dimension_semantics = [#tpu.dimension_semantics<arbitrary>], iteration_bounds = array<i64: 2>, scalar_prefetch = 0 : i64, scratch_operands = 0 : i64, tpu.core_type = #tpu.core_type<tc>, window_params = [{transform_indices = @transform_0, window_bounds = array<i64: 1, 10, 1>}, {transform_indices = @transform_1, window_bounds = array<i64: 1, 80, 32>}, {transform_indices = @transform_2, window_bounds = array<i64: 1, 32, 128>}, {transform_indices = @transform_3, window_bounds = array<i64: 1, 32, 128>}, {transform_indices = @transform_4, window_bounds = array<i64: 1, 1, 128>}, {transform_indices = @transform_5, window_bounds = array<i64: 1, 1, 32>}, {transform_indices = @transform_6, window_bounds = array<i64: 1, 1, 32>}, {transform_indices = @transform_7, window_bounds = array<i64: 1, 8, 10, 16>}, {transform_indices = @transform_8, window_bounds = array<i64: 1, 8, 10, 16>}]} {
    %c0 = arith.constant 0 : index
    %c0_0 = arith.constant 0 : index
    %c0_1 = arith.constant 0 : index
    %0 = vector.load %arg2[%c0, %c0_0, %c0_1] : memref<1x80x32xf32, #tpu.memory_space<vmem>>, vector<1x80x32xf32>
    %1 = vector.shape_cast %0 : vector<1x80x32xf32> to vector<80x32xf32>
    %c0_2 = arith.constant 0 : index
    %c0_3 = arith.constant 0 : index
    %c0_4 = arith.constant 0 : index
    %2 = vector.load %arg3[%c0_2, %c0_3, %c0_4] : memref<1x32x128xf32, #tpu.memory_space<vmem>>, vector<1x32x128xf32>
    %3 = vector.shape_cast %2 : vector<1x32x128xf32> to vector<32x128xf32>
    %cst = arith.constant dense<0.000000e+00> : vector<80x128xf32>
    %4 = tpu.matmul %1, %3, %cst {dimension_numbers = #tpu.dot_dimension_numbers<[1], [0], [0], [1], [0, 0, 1, 1], [], []>} : vector<80x32xf32>, vector<32x128xf32>, vector<80x128xf32> -> vector<80x128xf32>
    %c0_5 = arith.constant 0 : index
    %c0_6 = arith.constant 0 : index
    %c0_7 = arith.constant 0 : index
    %5 = vector.load %arg5[%c0_5, %c0_6, %c0_7] : memref<1x1x128xf32, #tpu.memory_space<vmem>>, vector<1x1x128xf32>
    %6 = vector.shape_cast %5 : vector<1x1x128xf32> to vector<1x128xf32>
    %7 = vector.broadcast %6 : vector<1x128xf32> to vector<80x128xf32>
    %8 = arith.addf %4, %7 : vector<80x128xf32>
    %c0_8 = arith.constant 0 : index
    %c0_9 = arith.constant 0 : index
    %c0_10 = arith.constant 0 : index
    %9 = vector.load %arg4[%c0_8, %c0_9, %c0_10] : memref<1x32x128xf32, #tpu.memory_space<vmem>>, vector<1x32x128xf32>
    %10 = vector.shape_cast %9 : vector<1x32x128xf32> to vector<32x128xf32>
    %c0_11 = arith.constant 0 : index
    %c0_12 = arith.constant 0 : index
    %c0_13 = arith.constant 0 : index
    %11 = vector.load %arg1[%c0_11, %c0_12, %c0_13] : memref<1x10x1xi32, #tpu.memory_space<vmem>>, vector<1x10x1xi32>
    %12 = vector.shape_cast %11 : vector<1x10x1xi32> to vector<10x1xi32>
    %13 = tpu.iota {dimensions = array<i32: 1>} : vector<1x128xi32>
    %c32_i32 = arith.constant 32 : i32
    %c0_i32 = arith.constant 0 : i32
    %14 = arith.cmpi eq, %c32_i32, %c0_i32 : i32
    %c1_i32 = arith.constant 1 : i32
    %15 = arith.select %14, %c1_i32, %c32_i32 : i32
    %16 = vector.broadcast %15 : i32 to vector<1x128xi32>
    %17 = arith.remsi %13, %16 : vector<1x128xi32>
    %c0_i32_14 = arith.constant 0 : i32
    %18 = vector.broadcast %c0_i32_14 : i32 to vector<1x128xi32>
    %19 = arith.cmpi ne, %17, %18 : vector<1x128xi32>
    %c0_i32_15 = arith.constant 0 : i32
    %20 = vector.broadcast %c0_i32_15 : i32 to vector<1x128xi32>
    %21 = arith.cmpi slt, %17, %20 : vector<1x128xi32>
    %c0_i32_16 = arith.constant 0 : i32
    %22 = arith.cmpi slt, %15, %c0_i32_16 : i32
    %23 = vector.broadcast %22 : i1 to vector<1x128xi1>
    %24 = vector.broadcast %23 : vector<1x128xi1> to vector<1x128xi1>
    %25 = arith.xori %21, %24 : vector<1x128xi1>
    %26 = arith.andi %25, %19 : vector<1x128xi1>
    %27 = vector.broadcast %15 : i32 to vector<1x128xi32>
    %28 = arith.addi %17, %27 : vector<1x128xi32>
    %29 = arith.select %26, %28, %17 : vector<1x128xi1>, vector<1x128xi32>
    %c16_i32 = arith.constant 16 : i32
    %30 = vector.broadcast %c16_i32 : i32 to vector<1x128xi32>
    %31 = arith.cmpi slt, %29, %30 : vector<1x128xi32>
    %32 = tpu.iota {dimensions = array<i32: 1>} : vector<1x32xi32>
    %c16_i32_17 = arith.constant 16 : i32
    %33 = vector.broadcast %c16_i32_17 : i32 to vector<1x32xi32>
    %34 = arith.cmpi slt, %32, %33 : vector<1x32xi32>
    %c0_18 = arith.constant 0 : index
    %c0_19 = arith.constant 0 : index
    %c0_20 = arith.constant 0 : index
    %35 = vector.load %arg6[%c0_18, %c0_19, %c0_20] : memref<1x1x32xf32, #tpu.memory_space<vmem>>, vector<1x1x32xf32>
    %36 = vector.shape_cast %35 : vector<1x1x32xf32> to vector<1x32xf32>
    %37 = vector.shape_cast %36 : vector<1x32xf32> to vector<1x32xf32>
    %38 = vector.broadcast %37 : vector<1x32xf32> to vector<10x32xf32>
    %c0_21 = arith.constant 0 : index
    %c0_22 = arith.constant 0 : index
    %c0_23 = arith.constant 0 : index
    %39 = vector.load %arg7[%c0_21, %c0_22, %c0_23] : memref<1x1x32xf32, #tpu.memory_space<vmem>>, vector<1x1x32xf32>
    %40 = vector.shape_cast %39 : vector<1x1x32xf32> to vector<1x32xf32>
    %41 = vector.shape_cast %40 : vector<1x32xf32> to vector<1x32xf32>
    %42 = vector.broadcast %41 : vector<1x32xf32> to vector<10x32xf32>
    %43 = vector.extract_strided_slice %8 {offsets = [0, 0], sizes = [10, 128], strides = [1, 1]} : vector<80x128xf32> to vector<10x128xf32>
    %44 = vector.extract_strided_slice %8 {offsets = [70, 0], sizes = [10, 128], strides = [1, 1]} : vector<80x128xf32> to vector<10x128xf32>
    %45 = vector.shape_cast %31 : vector<1x128xi1> to vector<1x128xi1>
    %46 = vector.broadcast %45 : vector<1x128xi1> to vector<10x128xi1>
    %47 = arith.select %46, %43, %44 : vector<10x128xi1>, vector<10x128xf32>
    %cst_24 = arith.constant dense<0.000000e+00> : vector<10x128xf32>
    %48 = tpu.matmul %38, %10, %cst_24 {dimension_numbers = #tpu.dot_dimension_numbers<[1], [0], [0], [1], [0, 0, 1, 1], [], []>} : vector<10x32xf32>, vector<32x128xf32>, vector<10x128xf32> -> vector<10x128xf32>
    %49 = arith.addf %47, %48 : vector<10x128xf32>
    %50 = vector.extract_strided_slice %49 {offsets = [0, 0], sizes = [10, 32], strides = [1, 1]} : vector<10x128xf32> to vector<10x32xf32>
    %51 = arith.negf %50 : vector<10x32xf32>
    %52 = math.exp %51 : vector<10x32xf32>
    %cst_25 = arith.constant 1.000000e+00 : f32
    %53 = vector.broadcast %cst_25 : f32 to vector<10x32xf32>
    %54 = arith.addf %53, %52 : vector<10x32xf32>
    %55 = arith.divf %53, %54 : vector<10x32xf32>
    %56 = vector.extract_strided_slice %49 {offsets = [0, 32], sizes = [10, 32], strides = [1, 1]} : vector<10x128xf32> to vector<10x32xf32>
    %57 = arith.negf %56 : vector<10x32xf32>
    %58 = math.exp %57 : vector<10x32xf32>
    %cst_26 = arith.constant 1.000000e+00 : f32
    %59 = vector.broadcast %cst_26 : f32 to vector<10x32xf32>
    %60 = arith.addf %59, %58 : vector<10x32xf32>
    %61 = arith.divf %59, %60 : vector<10x32xf32>
    %62 = vector.extract_strided_slice %49 {offsets = [0, 64], sizes = [10, 32], strides = [1, 1]} : vector<10x128xf32> to vector<10x32xf32>
    %63 = math.tanh %62 : vector<10x32xf32>
    %64 = vector.extract_strided_slice %49 {offsets = [0, 96], sizes = [10, 32], strides = [1, 1]} : vector<10x128xf32> to vector<10x32xf32>
    %65 = arith.negf %64 : vector<10x32xf32>
    %66 = math.exp %65 : vector<10x32xf32>
    %cst_27 = arith.constant 1.000000e+00 : f32
    %67 = vector.broadcast %cst_27 : f32 to vector<10x32xf32>
    %68 = arith.addf %67, %66 : vector<10x32xf32>
    %69 = arith.divf %67, %68 : vector<10x32xf32>
    %70 = arith.mulf %61, %42 : vector<10x32xf32>
    %71 = arith.mulf %55, %63 : vector<10x32xf32>
    %72 = arith.addf %70, %71 : vector<10x32xf32>
    %73 = math.tanh %72 : vector<10x32xf32>
    %74 = arith.mulf %69, %73 : vector<10x32xf32>
    %c0_i32_28 = arith.constant 0 : i32
    %75 = vector.broadcast %c0_i32_28 : i32 to vector<10x1xi32>
    %76 = arith.cmpi sgt, %12, %75 : vector<10x1xi32>
    %c7_i32 = arith.constant 7 : i32
    %77 = vector.broadcast %c7_i32 : i32 to vector<10x1xi32>
    %78 = arith.cmpi sgt, %12, %77 : vector<10x1xi32>
    %c0_i32_29 = arith.constant 0 : i32
    %c7_i32_30 = arith.constant 7 : i32
    %79 = vector.broadcast %c0_i32_29 : i32 to vector<1x32xi32>
    %80 = vector.broadcast %c7_i32_30 : i32 to vector<1x32xi32>
    %81 = arith.select %34, %79, %80 : vector<1x32xi1>, vector<1x32xi32>
    %82 = vector.broadcast %81 : vector<1x32xi32> to vector<10x32xi32>
    %83 = vector.broadcast %12 : vector<10x1xi32> to vector<10x32xi32>
    %84 = arith.cmpi slt, %82, %83 : vector<10x32xi32>
    %85 = arith.select %84, %74, %38 : vector<10x32xi1>, vector<10x32xf32>
    %86 = arith.select %84, %72, %42 : vector<10x32xi1>, vector<10x32xf32>
    %87 = vector.extract_strided_slice %74 {offsets = [0, 0], sizes = [10, 16], strides = [1, 1]} : vector<10x32xf32> to vector<10x16xf32>
    %cst_31 = arith.constant 0.000000e+00 : f32
    %88 = vector.shape_cast %76 : vector<10x1xi1> to vector<10x1xi1>
    %89 = vector.broadcast %88 : vector<10x1xi1> to vector<10x16xi1>
    %90 = vector.broadcast %cst_31 : f32 to vector<10x16xf32>
    %91 = arith.select %89, %87, %90 : vector<10x16xi1>, vector<10x16xf32>
    %c0_32 = arith.constant 0 : index
    %c0_33 = arith.constant 0 : index
    %c0_34 = arith.constant 0 : index
    %c0_35 = arith.constant 0 : index
    %92 = vector.load %arg8[%c0_32, %c0_33, %c0_34, %c0_35] : memref<1x8x10x16xf32, #tpu.memory_space<vmem>>, vector<1x1x10x16xf32>
    %93 = vector.shape_cast %92 : vector<1x1x10x16xf32> to vector<10x16xf32>
    %94 = vector.shape_cast %91 : vector<10x16xf32> to vector<1x1x10x16xf32>
    tpu.vector_store %arg8[%c0_32, %c0_33, %c0_34, %c0_35], %94 {strides = array<i32>} : memref<1x8x10x16xf32, #tpu.memory_space<vmem>>, vector<1x1x10x16xf32>,
    %95 = vector.extract_strided_slice %74 {offsets = [0, 16], sizes = [10, 16], strides = [1, 1]} : vector<10x32xf32> to vector<10x16xf32>
    %cst_36 = arith.constant 0.000000e+00 : f32
    %96 = vector.shape_cast %78 : vector<10x1xi1> to vector<10x1xi1>
    %97 = vector.broadcast %96 : vector<10x1xi1> to vector<10x16xi1>
    %98 = vector.broadcast %cst_36 : f32 to vector<10x16xf32>
    %99 = arith.select %97, %95, %98 : vector<10x16xi1>, vector<10x16xf32>
    %c0_37 = arith.constant 0 : index
    %c7 = arith.constant 7 : index
    %c0_38 = arith.constant 0 : index
    %c0_39 = arith.constant 0 : index
    %100 = vector.load %arg9[%c0_37, %c7, %c0_38, %c0_39] : memref<1x8x10x16xf32, #tpu.memory_space<vmem>>, vector<1x1x10x16xf32>
    %101 = vector.shape_cast %100 : vector<1x1x10x16xf32> to vector<10x16xf32>
    %102 = vector.shape_cast %99 : vector<10x16xf32> to vector<1x1x10x16xf32>
    tpu.vector_store %arg9[%c0_37, %c7, %c0_38, %c0_39], %102 {strides = array<i32>} : memref<1x8x10x16xf32, #tpu.memory_space<vmem>>, vector<1x1x10x16xf32>,
    %103 = vector.extract_strided_slice %8 {offsets = [10, 0], sizes = [10, 128], strides = [1, 1]} : vector<80x128xf32> to vector<10x128xf32>
    %104 = vector.extract_strided_slice %8 {offsets = [60, 0], sizes = [10, 128], strides = [1, 1]} : vector<80x128xf32> to vector<10x128xf32>
    %105 = vector.shape_cast %31 : vector<1x128xi1> to vector<1x128xi1>
    %106 = vector.broadcast %105 : vector<1x128xi1> to vector<10x128xi1>
    %107 = arith.select %106, %103, %104 : vector<10x128xi1>, vector<10x128xf32>
    %cst_40 = arith.constant dense<0.000000e+00> : vector<10x128xf32>
    %108 = tpu.matmul %85, %10, %cst_40 {dimension_numbers = #tpu.dot_dimension_numbers<[1], [0], [0], [1], [0, 0, 1, 1], [], []>} : vector<10x32xf32>, vector<32x128xf32>, vector<10x128xf32> -> vector<10x128xf32>
    %109 = arith.addf %107, %108 : vector<10x128xf32>
    %110 = vector.extract_strided_slice %109 {offsets = [0, 0], sizes = [10, 32], strides = [1, 1]} : vector<10x128xf32> to vector<10x32xf32>
    %111 = arith.negf %110 : vector<10x32xf32>
    %112 = math.exp %111 : vector<10x32xf32>
    %cst_41 = arith.constant 1.000000e+00 : f32
    %113 = vector.broadcast %cst_41 : f32 to vector<10x32xf32>
    %114 = arith.addf %113, %112 : vector<10x32xf32>
    %115 = arith.divf %113, %114 : vector<10x32xf32>
    %116 = vector.extract_strided_slice %109 {offsets = [0, 32], sizes = [10, 32], strides = [1, 1]} : vector<10x128xf32> to vector<10x32xf32>
    %117 = arith.negf %116 : vector<10x32xf32>
    %118 = math.exp %117 : vector<10x32xf32>
    %cst_42 = arith.constant 1.000000e+00 : f32
    %119 = vector.broadcast %cst_42 : f32 to vector<10x32xf32>
    %120 = arith.addf %119, %118 : vector<10x32xf32>
    %121 = arith.divf %119, %120 : vector<10x32xf32>
    %122 = vector.extract_strided_slice %109 {offsets = [0, 64], sizes = [10, 32], strides = [1, 1]} : vector<10x128xf32> to vector<10x32xf32>
    %123 = math.tanh %122 : vector<10x32xf32>
    %124 = vector.extract_strided_slice %109 {offsets = [0, 96], sizes = [10, 32], strides = [1, 1]} : vector<10x128xf32> to vector<10x32xf32>
    %125 = arith.negf %124 : vector<10x32xf32>
    %126 = math.exp %125 : vector<10x32xf32>
    %cst_43 = arith.constant 1.000000e+00 : f32
    %127 = vector.broadcast %cst_43 : f32 to vector<10x32xf32>
    %128 = arith.addf %127, %126 : vector<10x32xf32>
    %129 = arith.divf %127, %128 : vector<10x32xf32>
    %130 = arith.mulf %121, %86 : vector<10x32xf32>
    %131 = arith.mulf %115, %123 : vector<10x32xf32>
    %132 = arith.addf %130, %131 : vector<10x32xf32>
    %133 = math.tanh %132 : vector<10x32xf32>
    %134 = arith.mulf %129, %133 : vector<10x32xf32>
    %c1_i32_44 = arith.constant 1 : i32
    %135 = vector.broadcast %c1_i32_44 : i32 to vector<10x1xi32>
    %136 = arith.cmpi sgt, %12, %135 : vector<10x1xi32>
    %c6_i32 = arith.constant 6 : i32
    %137 = vector.broadcast %c6_i32 : i32 to vector<10x1xi32>
    %138 = arith.cmpi sgt, %12, %137 : vector<10x1xi32>
    %c1_i32_45 = arith.constant 1 : i32
    %c6_i32_46 = arith.constant 6 : i32
    %139 = vector.broadcast %c1_i32_45 : i32 to vector<1x32xi32>
    %140 = vector.broadcast %c6_i32_46 : i32 to vector<1x32xi32>
    %141 = arith.select %34, %139, %140 : vector<1x32xi1>, vector<1x32xi32>
    %142 = vector.broadcast %141 : vector<1x32xi32> to vector<10x32xi32>
    %143 = vector.broadcast %12 : vector<10x1xi32> to vector<10x32xi32>
    %144 = arith.cmpi slt, %142, %143 : vector<10x32xi32>
    %145 = arith.select %144, %134, %85 : vector<10x32xi1>, vector<10x32xf32>
    %146 = arith.select %144, %132, %86 : vector<10x32xi1>, vector<10x32xf32>
    %147 = vector.extract_strided_slice %134 {offsets = [0, 0], sizes = [10, 16], strides = [1, 1]} : vector<10x32xf32> to vector<10x16xf32>
    %cst_47 = arith.constant 0.000000e+00 : f32
    %148 = vector.shape_cast %136 : vector<10x1xi1> to vector<10x1xi1>
    %149 = vector.broadcast %148 : vector<10x1xi1> to vector<10x16xi1>
    %150 = vector.broadcast %cst_47 : f32 to vector<10x16xf32>
    %151 = arith.select %149, %147, %150 : vector<10x16xi1>, vector<10x16xf32>
    %c0_48 = arith.constant 0 : index
    %c1 = arith.constant 1 : index
    %c0_49 = arith.constant 0 : index
    %c0_50 = arith.constant 0 : index
    %152 = vector.load %arg8[%c0_48, %c1, %c0_49, %c0_50] : memref<1x8x10x16xf32, #tpu.memory_space<vmem>>, vector<1x1x10x16xf32>
    %153 = vector.shape_cast %152 : vector<1x1x10x16xf32> to vector<10x16xf32>
    %154 = vector.shape_cast %151 : vector<10x16xf32> to vector<1x1x10x16xf32>
    tpu.vector_store %arg8[%c0_48, %c1, %c0_49, %c0_50], %154 {strides = array<i32>} : memref<1x8x10x16xf32, #tpu.memory_space<vmem>>, vector<1x1x10x16xf32>,
    %155 = vector.extract_strided_slice %134 {offsets = [0, 16], sizes = [10, 16], strides = [1, 1]} : vector<10x32xf32> to vector<10x16xf32>
    %cst_51 = arith.constant 0.000000e+00 : f32
    %156 = vector.shape_cast %138 : vector<10x1xi1> to vector<10x1xi1>
    %157 = vector.broadcast %156 : vector<10x1xi1> to vector<10x16xi1>
    %158 = vector.broadcast %cst_51 : f32 to vector<10x16xf32>
    %159 = arith.select %157, %155, %158 : vector<10x16xi1>, vector<10x16xf32>
    %c0_52 = arith.constant 0 : index
    %c6 = arith.constant 6 : index
    %c0_53 = arith.constant 0 : index
    %c0_54 = arith.constant 0 : index
    %160 = vector.load %arg9[%c0_52, %c6, %c0_53, %c0_54] : memref<1x8x10x16xf32, #tpu.memory_space<vmem>>, vector<1x1x10x16xf32>
    %161 = vector.shape_cast %160 : vector<1x1x10x16xf32> to vector<10x16xf32>
    %162 = vector.shape_cast %159 : vector<10x16xf32> to vector<1x1x10x16xf32>
    tpu.vector_store %arg9[%c0_52, %c6, %c0_53, %c0_54], %162 {strides = array<i32>} : memref<1x8x10x16xf32, #tpu.memory_space<vmem>>, vector<1x1x10x16xf32>,
    %163 = vector.extract_strided_slice %8 {offsets = [20, 0], sizes = [10, 128], strides = [1, 1]} : vector<80x128xf32> to vector<10x128xf32>
    %164 = vector.extract_strided_slice %8 {offsets = [50, 0], sizes = [10, 128], strides = [1, 1]} : vector<80x128xf32> to vector<10x128xf32>
    %165 = vector.shape_cast %31 : vector<1x128xi1> to vector<1x128xi1>
    %166 = vector.broadcast %165 : vector<1x128xi1> to vector<10x128xi1>
    %167 = arith.select %166, %163, %164 : vector<10x128xi1>, vector<10x128xf32>
    %cst_55 = arith.constant dense<0.000000e+00> : vector<10x128xf32>
    %168 = tpu.matmul %145, %10, %cst_55 {dimension_numbers = #tpu.dot_dimension_numbers<[1], [0], [0], [1], [0, 0, 1, 1], [], []>} : vector<10x32xf32>, vector<32x128xf32>, vector<10x128xf32> -> vector<10x128xf32>
    %169 = arith.addf %167, %168 : vector<10x128xf32>
    %170 = vector.extract_strided_slice %169 {offsets = [0, 0], sizes = [10, 32], strides = [1, 1]} : vector<10x128xf32> to vector<10x32xf32>
    %171 = arith.negf %170 : vector<10x32xf32>
    %172 = math.exp %171 : vector<10x32xf32>
    %cst_56 = arith.constant 1.000000e+00 : f32
    %173 = vector.broadcast %cst_56 : f32 to vector<10x32xf32>
    %174 = arith.addf %173, %172 : vector<10x32xf32>
    %175 = arith.divf %173, %174 : vector<10x32xf32>
    %176 = vector.extract_strided_slice %169 {offsets = [0, 32], sizes = [10, 32], strides = [1, 1]} : vector<10x128xf32> to vector<10x32xf32>
    %177 = arith.negf %176 : vector<10x32xf32>
    %178 = math.exp %177 : vector<10x32xf32>
    %cst_57 = arith.constant 1.000000e+00 : f32
    %179 = vector.broadcast %cst_57 : f32 to vector<10x32xf32>
    %180 = arith.addf %179, %178 : vector<10x32xf32>
    %181 = arith.divf %179, %180 : vector<10x32xf32>
    %182 = vector.extract_strided_slice %169 {offsets = [0, 64], sizes = [10, 32], strides = [1, 1]} : vector<10x128xf32> to vector<10x32xf32>
    %183 = math.tanh %182 : vector<10x32xf32>
    %184 = vector.extract_strided_slice %169 {offsets = [0, 96], sizes = [10, 32], strides = [1, 1]} : vector<10x128xf32> to vector<10x32xf32>
    %185 = arith.negf %184 : vector<10x32xf32>
    %186 = math.exp %185 : vector<10x32xf32>
    %cst_58 = arith.constant 1.000000e+00 : f32
    %187 = vector.broadcast %cst_58 : f32 to vector<10x32xf32>
    %188 = arith.addf %187, %186 : vector<10x32xf32>
    %189 = arith.divf %187, %188 : vector<10x32xf32>
    %190 = arith.mulf %181, %146 : vector<10x32xf32>
    %191 = arith.mulf %175, %183 : vector<10x32xf32>
    %192 = arith.addf %190, %191 : vector<10x32xf32>
    %193 = math.tanh %192 : vector<10x32xf32>
    %194 = arith.mulf %189, %193 : vector<10x32xf32>
    %c2_i32 = arith.constant 2 : i32
    %195 = vector.broadcast %c2_i32 : i32 to vector<10x1xi32>
    %196 = arith.cmpi sgt, %12, %195 : vector<10x1xi32>
    %c5_i32 = arith.constant 5 : i32
    %197 = vector.broadcast %c5_i32 : i32 to vector<10x1xi32>
    %198 = arith.cmpi sgt, %12, %197 : vector<10x1xi32>
    %c2_i32_59 = arith.constant 2 : i32
    %c5_i32_60 = arith.constant 5 : i32
    %199 = vector.broadcast %c2_i32_59 : i32 to vector<1x32xi32>
    %200 = vector.broadcast %c5_i32_60 : i32 to vector<1x32xi32>
    %201 = arith.select %34, %199, %200 : vector<1x32xi1>, vector<1x32xi32>
    %202 = vector.broadcast %201 : vector<1x32xi32> to vector<10x32xi32>
    %203 = vector.broadcast %12 : vector<10x1xi32> to vector<10x32xi32>
    %204 = arith.cmpi slt, %202, %203 : vector<10x32xi32>
    %205 = arith.select %204, %194, %145 : vector<10x32xi1>, vector<10x32xf32>
    %206 = arith.select %204, %192, %146 : vector<10x32xi1>, vector<10x32xf32>
    %207 = vector.extract_strided_slice %194 {offsets = [0, 0], sizes = [10, 16], strides = [1, 1]} : vector<10x32xf32> to vector<10x16xf32>
    %cst_61 = arith.constant 0.000000e+00 : f32
    %208 = vector.shape_cast %196 : vector<10x1xi1> to vector<10x1xi1>
    %209 = vector.broadcast %208 : vector<10x1xi1> to vector<10x16xi1>
    %210 = vector.broadcast %cst_61 : f32 to vector<10x16xf32>
    %211 = arith.select %209, %207, %210 : vector<10x16xi1>, vector<10x16xf32>
    %c0_62 = arith.constant 0 : index
    %c2 = arith.constant 2 : index
    %c0_63 = arith.constant 0 : index
    %c0_64 = arith.constant 0 : index
    %212 = vector.load %arg8[%c0_62, %c2, %c0_63, %c0_64] : memref<1x8x10x16xf32, #tpu.memory_space<vmem>>, vector<1x1x10x16xf32>
    %213 = vector.shape_cast %212 : vector<1x1x10x16xf32> to vector<10x16xf32>
    %214 = vector.shape_cast %211 : vector<10x16xf32> to vector<1x1x10x16xf32>
    tpu.vector_store %arg8[%c0_62, %c2, %c0_63, %c0_64], %214 {strides = array<i32>} : memref<1x8x10x16xf32, #tpu.memory_space<vmem>>, vector<1x1x10x16xf32>,
    %215 = vector.extract_strided_slice %194 {offsets = [0, 16], sizes = [10, 16], strides = [1, 1]} : vector<10x32xf32> to vector<10x16xf32>
    %cst_65 = arith.constant 0.000000e+00 : f32
    %216 = vector.shape_cast %198 : vector<10x1xi1> to vector<10x1xi1>
    %217 = vector.broadcast %216 : vector<10x1xi1> to vector<10x16xi1>
    %218 = vector.broadcast %cst_65 : f32 to vector<10x16xf32>
    %219 = arith.select %217, %215, %218 : vector<10x16xi1>, vector<10x16xf32>
    %c0_66 = arith.constant 0 : index
    %c5 = arith.constant 5 : index
    %c0_67 = arith.constant 0 : index
    %c0_68 = arith.constant 0 : index
    %220 = vector.load %arg9[%c0_66, %c5, %c0_67, %c0_68] : memref<1x8x10x16xf32, #tpu.memory_space<vmem>>, vector<1x1x10x16xf32>
    %221 = vector.shape_cast %220 : vector<1x1x10x16xf32> to vector<10x16xf32>
    %222 = vector.shape_cast %219 : vector<10x16xf32> to vector<1x1x10x16xf32>
    tpu.vector_store %arg9[%c0_66, %c5, %c0_67, %c0_68], %222 {strides = array<i32>} : memref<1x8x10x16xf32, #tpu.memory_space<vmem>>, vector<1x1x10x16xf32>,
    %223 = vector.extract_strided_slice %8 {offsets = [30, 0], sizes = [10, 128], strides = [1, 1]} : vector<80x128xf32> to vector<10x128xf32>
    %224 = vector.extract_strided_slice %8 {offsets = [40, 0], sizes = [10, 128], strides = [1, 1]} : vector<80x128xf32> to vector<10x128xf32>
    %225 = vector.shape_cast %31 : vector<1x128xi1> to vector<1x128xi1>
    %226 = vector.broadcast %225 : vector<1x128xi1> to vector<10x128xi1>
    %227 = arith.select %226, %223, %224 : vector<10x128xi1>, vector<10x128xf32>
    %cst_69 = arith.constant dense<0.000000e+00> : vector<10x128xf32>
    %228 = tpu.matmul %205, %10, %cst_69 {dimension_numbers = #tpu.dot_dimension_numbers<[1], [0], [0], [1], [0, 0, 1, 1], [], []>} : vector<10x32xf32>, vector<32x128xf32>, vector<10x128xf32> -> vector<10x128xf32>
    %229 = arith.addf %227, %228 : vector<10x128xf32>
    %230 = vector.extract_strided_slice %229 {offsets = [0, 0], sizes = [10, 32], strides = [1, 1]} : vector<10x128xf32> to vector<10x32xf32>
    %231 = arith.negf %230 : vector<10x32xf32>
    %232 = math.exp %231 : vector<10x32xf32>
    %cst_70 = arith.constant 1.000000e+00 : f32
    %233 = vector.broadcast %cst_70 : f32 to vector<10x32xf32>
    %234 = arith.addf %233, %232 : vector<10x32xf32>
    %235 = arith.divf %233, %234 : vector<10x32xf32>
    %236 = vector.extract_strided_slice %229 {offsets = [0, 32], sizes = [10, 32], strides = [1, 1]} : vector<10x128xf32> to vector<10x32xf32>
    %237 = arith.negf %236 : vector<10x32xf32>
    %238 = math.exp %237 : vector<10x32xf32>
    %cst_71 = arith.constant 1.000000e+00 : f32
    %239 = vector.broadcast %cst_71 : f32 to vector<10x32xf32>
    %240 = arith.addf %239, %238 : vector<10x32xf32>
    %241 = arith.divf %239, %240 : vector<10x32xf32>
    %242 = vector.extract_strided_slice %229 {offsets = [0, 64], sizes = [10, 32], strides = [1, 1]} : vector<10x128xf32> to vector<10x32xf32>
    %243 = math.tanh %242 : vector<10x32xf32>
    %244 = vector.extract_strided_slice %229 {offsets = [0, 96], sizes = [10, 32], strides = [1, 1]} : vector<10x128xf32> to vector<10x32xf32>
    %245 = arith.negf %244 : vector<10x32xf32>
    %246 = math.exp %245 : vector<10x32xf32>
    %cst_72 = arith.constant 1.000000e+00 : f32
    %247 = vector.broadcast %cst_72 : f32 to vector<10x32xf32>
    %248 = arith.addf %247, %246 : vector<10x32xf32>
    %249 = arith.divf %247, %248 : vector<10x32xf32>
    %250 = arith.mulf %241, %206 : vector<10x32xf32>
    %251 = arith.mulf %235, %243 : vector<10x32xf32>
    %252 = arith.addf %250, %251 : vector<10x32xf32>
    %253 = math.tanh %252 : vector<10x32xf32>
    %254 = arith.mulf %249, %253 : vector<10x32xf32>
    %c3_i32 = arith.constant 3 : i32
    %255 = vector.broadcast %c3_i32 : i32 to vector<10x1xi32>
    %256 = arith.cmpi sgt, %12, %255 : vector<10x1xi32>
    %c4_i32 = arith.constant 4 : i32
    %257 = vector.broadcast %c4_i32 : i32 to vector<10x1xi32>
    %258 = arith.cmpi sgt, %12, %257 : vector<10x1xi32>
    %c3_i32_73 = arith.constant 3 : i32
    %c4_i32_74 = arith.constant 4 : i32
    %259 = vector.broadcast %c3_i32_73 : i32 to vector<1x32xi32>
    %260 = vector.broadcast %c4_i32_74 : i32 to vector<1x32xi32>
    %261 = arith.select %34, %259, %260 : vector<1x32xi1>, vector<1x32xi32>
    %262 = vector.broadcast %261 : vector<1x32xi32> to vector<10x32xi32>
    %263 = vector.broadcast %12 : vector<10x1xi32> to vector<10x32xi32>
    %264 = arith.cmpi slt, %262, %263 : vector<10x32xi32>
    %265 = arith.select %264, %254, %205 : vector<10x32xi1>, vector<10x32xf32>
    %266 = arith.select %264, %252, %206 : vector<10x32xi1>, vector<10x32xf32>
    %267 = vector.extract_strided_slice %254 {offsets = [0, 0], sizes = [10, 16], strides = [1, 1]} : vector<10x32xf32> to vector<10x16xf32>
    %cst_75 = arith.constant 0.000000e+00 : f32
    %268 = vector.shape_cast %256 : vector<10x1xi1> to vector<10x1xi1>
    %269 = vector.broadcast %268 : vector<10x1xi1> to vector<10x16xi1>
    %270 = vector.broadcast %cst_75 : f32 to vector<10x16xf32>
    %271 = arith.select %269, %267, %270 : vector<10x16xi1>, vector<10x16xf32>
    %c0_76 = arith.constant 0 : index
    %c3 = arith.constant 3 : index
    %c0_77 = arith.constant 0 : index
    %c0_78 = arith.constant 0 : index
    %272 = vector.load %arg8[%c0_76, %c3, %c0_77, %c0_78] : memref<1x8x10x16xf32, #tpu.memory_space<vmem>>, vector<1x1x10x16xf32>
    %273 = vector.shape_cast %272 : vector<1x1x10x16xf32> to vector<10x16xf32>
    %274 = vector.shape_cast %271 : vector<10x16xf32> to vector<1x1x10x16xf32>
    tpu.vector_store %arg8[%c0_76, %c3, %c0_77, %c0_78], %274 {strides = array<i32>} : memref<1x8x10x16xf32, #tpu.memory_space<vmem>>, vector<1x1x10x16xf32>,
    %275 = vector.extract_strided_slice %254 {offsets = [0, 16], sizes = [10, 16], strides = [1, 1]} : vector<10x32xf32> to vector<10x16xf32>
    %cst_79 = arith.constant 0.000000e+00 : f32
    %276 = vector.shape_cast %258 : vector<10x1xi1> to vector<10x1xi1>
    %277 = vector.broadcast %276 : vector<10x1xi1> to vector<10x16xi1>
    %278 = vector.broadcast %cst_79 : f32 to vector<10x16xf32>
    %279 = arith.select %277, %275, %278 : vector<10x16xi1>, vector<10x16xf32>
    %c0_80 = arith.constant 0 : index
    %c4 = arith.constant 4 : index
    %c0_81 = arith.constant 0 : index
    %c0_82 = arith.constant 0 : index
    %280 = vector.load %arg9[%c0_80, %c4, %c0_81, %c0_82] : memref<1x8x10x16xf32, #tpu.memory_space<vmem>>, vector<1x1x10x16xf32>
    %281 = vector.shape_cast %280 : vector<1x1x10x16xf32> to vector<10x16xf32>
    %282 = vector.shape_cast %279 : vector<10x16xf32> to vector<1x1x10x16xf32>
    tpu.vector_store %arg9[%c0_80, %c4, %c0_81, %c0_82], %282 {strides = array<i32>} : memref<1x8x10x16xf32, #tpu.memory_space<vmem>>, vector<1x1x10x16xf32>,
    %283 = vector.extract_strided_slice %8 {offsets = [40, 0], sizes = [10, 128], strides = [1, 1]} : vector<80x128xf32> to vector<10x128xf32>
    %284 = vector.extract_strided_slice %8 {offsets = [30, 0], sizes = [10, 128], strides = [1, 1]} : vector<80x128xf32> to vector<10x128xf32>
    %285 = vector.shape_cast %31 : vector<1x128xi1> to vector<1x128xi1>
    %286 = vector.broadcast %285 : vector<1x128xi1> to vector<10x128xi1>
    %287 = arith.select %286, %283, %284 : vector<10x128xi1>, vector<10x128xf32>
    %cst_83 = arith.constant dense<0.000000e+00> : vector<10x128xf32>
    %288 = tpu.matmul %265, %10, %cst_83 {dimension_numbers = #tpu.dot_dimension_numbers<[1], [0], [0], [1], [0, 0, 1, 1], [], []>} : vector<10x32xf32>, vector<32x128xf32>, vector<10x128xf32> -> vector<10x128xf32>
    %289 = arith.addf %287, %288 : vector<10x128xf32>
    %290 = vector.extract_strided_slice %289 {offsets = [0, 0], sizes = [10, 32], strides = [1, 1]} : vector<10x128xf32> to vector<10x32xf32>
    %291 = arith.negf %290 : vector<10x32xf32>
    %292 = math.exp %291 : vector<10x32xf32>
    %cst_84 = arith.constant 1.000000e+00 : f32
    %293 = vector.broadcast %cst_84 : f32 to vector<10x32xf32>
    %294 = arith.addf %293, %292 : vector<10x32xf32>
    %295 = arith.divf %293, %294 : vector<10x32xf32>
    %296 = vector.extract_strided_slice %289 {offsets = [0, 32], sizes = [10, 32], strides = [1, 1]} : vector<10x128xf32> to vector<10x32xf32>
    %297 = arith.negf %296 : vector<10x32xf32>
    %298 = math.exp %297 : vector<10x32xf32>
    %cst_85 = arith.constant 1.000000e+00 : f32
    %299 = vector.broadcast %cst_85 : f32 to vector<10x32xf32>
    %300 = arith.addf %299, %298 : vector<10x32xf32>
    %301 = arith.divf %299, %300 : vector<10x32xf32>
    %302 = vector.extract_strided_slice %289 {offsets = [0, 64], sizes = [10, 32], strides = [1, 1]} : vector<10x128xf32> to vector<10x32xf32>
    %303 = math.tanh %302 : vector<10x32xf32>
    %304 = vector.extract_strided_slice %289 {offsets = [0, 96], sizes = [10, 32], strides = [1, 1]} : vector<10x128xf32> to vector<10x32xf32>
    %305 = arith.negf %304 : vector<10x32xf32>
    %306 = math.exp %305 : vector<10x32xf32>
    %cst_86 = arith.constant 1.000000e+00 : f32
    %307 = vector.broadcast %cst_86 : f32 to vector<10x32xf32>
    %308 = arith.addf %307, %306 : vector<10x32xf32>
    %309 = arith.divf %307, %308 : vector<10x32xf32>
    %310 = arith.mulf %301, %266 : vector<10x32xf32>
    %311 = arith.mulf %295, %303 : vector<10x32xf32>
    %312 = arith.addf %310, %311 : vector<10x32xf32>
    %313 = math.tanh %312 : vector<10x32xf32>
    %314 = arith.mulf %309, %313 : vector<10x32xf32>
    %c4_i32_87 = arith.constant 4 : i32
    %315 = vector.broadcast %c4_i32_87 : i32 to vector<10x1xi32>
    %316 = arith.cmpi sgt, %12, %315 : vector<10x1xi32>
    %c3_i32_88 = arith.constant 3 : i32
    %317 = vector.broadcast %c3_i32_88 : i32 to vector<10x1xi32>
    %318 = arith.cmpi sgt, %12, %317 : vector<10x1xi32>
    %c4_i32_89 = arith.constant 4 : i32
    %c3_i32_90 = arith.constant 3 : i32
    %319 = vector.broadcast %c4_i32_89 : i32 to vector<1x32xi32>
    %320 = vector.broadcast %c3_i32_90 : i32 to vector<1x32xi32>
    %321 = arith.select %34, %319, %320 : vector<1x32xi1>, vector<1x32xi32>
    %322 = vector.broadcast %321 : vector<1x32xi32> to vector<10x32xi32>
    %323 = vector.broadcast %12 : vector<10x1xi32> to vector<10x32xi32>
    %324 = arith.cmpi slt, %322, %323 : vector<10x32xi32>
    %325 = arith.select %324, %314, %265 : vector<10x32xi1>, vector<10x32xf32>
    %326 = arith.select %324, %312, %266 : vector<10x32xi1>, vector<10x32xf32>
    %327 = vector.extract_strided_slice %314 {offsets = [0, 0], sizes = [10, 16], strides = [1, 1]} : vector<10x32xf32> to vector<10x16xf32>
    %cst_91 = arith.constant 0.000000e+00 : f32
    %328 = vector.shape_cast %316 : vector<10x1xi1> to vector<10x1xi1>
    %329 = vector.broadcast %328 : vector<10x1xi1> to vector<10x16xi1>
    %330 = vector.broadcast %cst_91 : f32 to vector<10x16xf32>
    %331 = arith.select %329, %327, %330 : vector<10x16xi1>, vector<10x16xf32>
    %c0_92 = arith.constant 0 : index
    %c4_93 = arith.constant 4 : index
    %c0_94 = arith.constant 0 : index
    %c0_95 = arith.constant 0 : index
    %332 = vector.load %arg8[%c0_92, %c4_93, %c0_94, %c0_95] : memref<1x8x10x16xf32, #tpu.memory_space<vmem>>, vector<1x1x10x16xf32>
    %333 = vector.shape_cast %332 : vector<1x1x10x16xf32> to vector<10x16xf32>
    %334 = vector.shape_cast %331 : vector<10x16xf32> to vector<1x1x10x16xf32>
    tpu.vector_store %arg8[%c0_92, %c4_93, %c0_94, %c0_95], %334 {strides = array<i32>} : memref<1x8x10x16xf32, #tpu.memory_space<vmem>>, vector<1x1x10x16xf32>,
    %335 = vector.extract_strided_slice %314 {offsets = [0, 16], sizes = [10, 16], strides = [1, 1]} : vector<10x32xf32> to vector<10x16xf32>
    %cst_96 = arith.constant 0.000000e+00 : f32
    %336 = vector.shape_cast %318 : vector<10x1xi1> to vector<10x1xi1>
    %337 = vector.broadcast %336 : vector<10x1xi1> to vector<10x16xi1>
    %338 = vector.broadcast %cst_96 : f32 to vector<10x16xf32>
    %339 = arith.select %337, %335, %338 : vector<10x16xi1>, vector<10x16xf32>
    %c0_97 = arith.constant 0 : index
    %c3_98 = arith.constant 3 : index
    %c0_99 = arith.constant 0 : index
    %c0_100 = arith.constant 0 : index
    %340 = vector.load %arg9[%c0_97, %c3_98, %c0_99, %c0_100] : memref<1x8x10x16xf32, #tpu.memory_space<vmem>>, vector<1x1x10x16xf32>
    %341 = vector.shape_cast %340 : vector<1x1x10x16xf32> to vector<10x16xf32>
    %342 = vector.shape_cast %339 : vector<10x16xf32> to vector<1x1x10x16xf32>
    tpu.vector_store %arg9[%c0_97, %c3_98, %c0_99, %c0_100], %342 {strides = array<i32>} : memref<1x8x10x16xf32, #tpu.memory_space<vmem>>, vector<1x1x10x16xf32>,
    %343 = vector.extract_strided_slice %8 {offsets = [50, 0], sizes = [10, 128], strides = [1, 1]} : vector<80x128xf32> to vector<10x128xf32>
    %344 = vector.extract_strided_slice %8 {offsets = [20, 0], sizes = [10, 128], strides = [1, 1]} : vector<80x128xf32> to vector<10x128xf32>
    %345 = vector.shape_cast %31 : vector<1x128xi1> to vector<1x128xi1>
    %346 = vector.broadcast %345 : vector<1x128xi1> to vector<10x128xi1>
    %347 = arith.select %346, %343, %344 : vector<10x128xi1>, vector<10x128xf32>
    %cst_101 = arith.constant dense<0.000000e+00> : vector<10x128xf32>
    %348 = tpu.matmul %325, %10, %cst_101 {dimension_numbers = #tpu.dot_dimension_numbers<[1], [0], [0], [1], [0, 0, 1, 1], [], []>} : vector<10x32xf32>, vector<32x128xf32>, vector<10x128xf32> -> vector<10x128xf32>
    %349 = arith.addf %347, %348 : vector<10x128xf32>
    %350 = vector.extract_strided_slice %349 {offsets = [0, 0], sizes = [10, 32], strides = [1, 1]} : vector<10x128xf32> to vector<10x32xf32>
    %351 = arith.negf %350 : vector<10x32xf32>
    %352 = math.exp %351 : vector<10x32xf32>
    %cst_102 = arith.constant 1.000000e+00 : f32
    %353 = vector.broadcast %cst_102 : f32 to vector<10x32xf32>
    %354 = arith.addf %353, %352 : vector<10x32xf32>
    %355 = arith.divf %353, %354 : vector<10x32xf32>
    %356 = vector.extract_strided_slice %349 {offsets = [0, 32], sizes = [10, 32], strides = [1, 1]} : vector<10x128xf32> to vector<10x32xf32>
    %357 = arith.negf %356 : vector<10x32xf32>
    %358 = math.exp %357 : vector<10x32xf32>
    %cst_103 = arith.constant 1.000000e+00 : f32
    %359 = vector.broadcast %cst_103 : f32 to vector<10x32xf32>
    %360 = arith.addf %359, %358 : vector<10x32xf32>
    %361 = arith.divf %359, %360 : vector<10x32xf32>
    %362 = vector.extract_strided_slice %349 {offsets = [0, 64], sizes = [10, 32], strides = [1, 1]} : vector<10x128xf32> to vector<10x32xf32>
    %363 = math.tanh %362 : vector<10x32xf32>
    %364 = vector.extract_strided_slice %349 {offsets = [0, 96], sizes = [10, 32], strides = [1, 1]} : vector<10x128xf32> to vector<10x32xf32>
    %365 = arith.negf %364 : vector<10x32xf32>
    %366 = math.exp %365 : vector<10x32xf32>
    %cst_104 = arith.constant 1.000000e+00 : f32
    %367 = vector.broadcast %cst_104 : f32 to vector<10x32xf32>
    %368 = arith.addf %367, %366 : vector<10x32xf32>
    %369 = arith.divf %367, %368 : vector<10x32xf32>
    %370 = arith.mulf %361, %326 : vector<10x32xf32>
    %371 = arith.mulf %355, %363 : vector<10x32xf32>
    %372 = arith.addf %370, %371 : vector<10x32xf32>
    %373 = math.tanh %372 : vector<10x32xf32>
    %374 = arith.mulf %369, %373 : vector<10x32xf32>
    %c5_i32_105 = arith.constant 5 : i32
    %375 = vector.broadcast %c5_i32_105 : i32 to vector<10x1xi32>
    %376 = arith.cmpi sgt, %12, %375 : vector<10x1xi32>
    %c2_i32_106 = arith.constant 2 : i32
    %377 = vector.broadcast %c2_i32_106 : i32 to vector<10x1xi32>
    %378 = arith.cmpi sgt, %12, %377 : vector<10x1xi32>
    %c5_i32_107 = arith.constant 5 : i32
    %c2_i32_108 = arith.constant 2 : i32
    %379 = vector.broadcast %c5_i32_107 : i32 to vector<1x32xi32>
    %380 = vector.broadcast %c2_i32_108 : i32 to vector<1x32xi32>
    %381 = arith.select %34, %379, %380 : vector<1x32xi1>, vector<1x32xi32>
    %382 = vector.broadcast %381 : vector<1x32xi32> to vector<10x32xi32>
    %383 = vector.broadcast %12 : vector<10x1xi32> to vector<10x32xi32>
    %384 = arith.cmpi slt, %382, %383 : vector<10x32xi32>
    %385 = arith.select %384, %374, %325 : vector<10x32xi1>, vector<10x32xf32>
    %386 = arith.select %384, %372, %326 : vector<10x32xi1>, vector<10x32xf32>
    %387 = vector.extract_strided_slice %374 {offsets = [0, 0], sizes = [10, 16], strides = [1, 1]} : vector<10x32xf32> to vector<10x16xf32>
    %cst_109 = arith.constant 0.000000e+00 : f32
    %388 = vector.shape_cast %376 : vector<10x1xi1> to vector<10x1xi1>
    %389 = vector.broadcast %388 : vector<10x1xi1> to vector<10x16xi1>
    %390 = vector.broadcast %cst_109 : f32 to vector<10x16xf32>
    %391 = arith.select %389, %387, %390 : vector<10x16xi1>, vector<10x16xf32>
    %c0_110 = arith.constant 0 : index
    %c5_111 = arith.constant 5 : index
    %c0_112 = arith.constant 0 : index
    %c0_113 = arith.constant 0 : index
    %392 = vector.load %arg8[%c0_110, %c5_111, %c0_112, %c0_113] : memref<1x8x10x16xf32, #tpu.memory_space<vmem>>, vector<1x1x10x16xf32>
    %393 = vector.shape_cast %392 : vector<1x1x10x16xf32> to vector<10x16xf32>
    %394 = vector.shape_cast %391 : vector<10x16xf32> to vector<1x1x10x16xf32>
    tpu.vector_store %arg8[%c0_110, %c5_111, %c0_112, %c0_113], %394 {strides = array<i32>} : memref<1x8x10x16xf32, #tpu.memory_space<vmem>>, vector<1x1x10x16xf32>,
    %395 = vector.extract_strided_slice %374 {offsets = [0, 16], sizes = [10, 16], strides = [1, 1]} : vector<10x32xf32> to vector<10x16xf32>
    %cst_114 = arith.constant 0.000000e+00 : f32
    %396 = vector.shape_cast %378 : vector<10x1xi1> to vector<10x1xi1>
    %397 = vector.broadcast %396 : vector<10x1xi1> to vector<10x16xi1>
    %398 = vector.broadcast %cst_114 : f32 to vector<10x16xf32>
    %399 = arith.select %397, %395, %398 : vector<10x16xi1>, vector<10x16xf32>
    %c0_115 = arith.constant 0 : index
    %c2_116 = arith.constant 2 : index
    %c0_117 = arith.constant 0 : index
    %c0_118 = arith.constant 0 : index
    %400 = vector.load %arg9[%c0_115, %c2_116, %c0_117, %c0_118] : memref<1x8x10x16xf32, #tpu.memory_space<vmem>>, vector<1x1x10x16xf32>
    %401 = vector.shape_cast %400 : vector<1x1x10x16xf32> to vector<10x16xf32>
    %402 = vector.shape_cast %399 : vector<10x16xf32> to vector<1x1x10x16xf32>
    tpu.vector_store %arg9[%c0_115, %c2_116, %c0_117, %c0_118], %402 {strides = array<i32>} : memref<1x8x10x16xf32, #tpu.memory_space<vmem>>, vector<1x1x10x16xf32>,
    %403 = vector.extract_strided_slice %8 {offsets = [60, 0], sizes = [10, 128], strides = [1, 1]} : vector<80x128xf32> to vector<10x128xf32>
    %404 = vector.extract_strided_slice %8 {offsets = [10, 0], sizes = [10, 128], strides = [1, 1]} : vector<80x128xf32> to vector<10x128xf32>
    %405 = vector.shape_cast %31 : vector<1x128xi1> to vector<1x128xi1>
    %406 = vector.broadcast %405 : vector<1x128xi1> to vector<10x128xi1>
    %407 = arith.select %406, %403, %404 : vector<10x128xi1>, vector<10x128xf32>
    %cst_119 = arith.constant dense<0.000000e+00> : vector<10x128xf32>
    %408 = tpu.matmul %385, %10, %cst_119 {dimension_numbers = #tpu.dot_dimension_numbers<[1], [0], [0], [1], [0, 0, 1, 1], [], []>} : vector<10x32xf32>, vector<32x128xf32>, vector<10x128xf32> -> vector<10x128xf32>
    %409 = arith.addf %407, %408 : vector<10x128xf32>
    %410 = vector.extract_strided_slice %409 {offsets = [0, 0], sizes = [10, 32], strides = [1, 1]} : vector<10x128xf32> to vector<10x32xf32>
    %411 = arith.negf %410 : vector<10x32xf32>
    %412 = math.exp %411 : vector<10x32xf32>
    %cst_120 = arith.constant 1.000000e+00 : f32
    %413 = vector.broadcast %cst_120 : f32 to vector<10x32xf32>
    %414 = arith.addf %413, %412 : vector<10x32xf32>
    %415 = arith.divf %413, %414 : vector<10x32xf32>
    %416 = vector.extract_strided_slice %409 {offsets = [0, 32], sizes = [10, 32], strides = [1, 1]} : vector<10x128xf32> to vector<10x32xf32>
    %417 = arith.negf %416 : vector<10x32xf32>
    %418 = math.exp %417 : vector<10x32xf32>
    %cst_121 = arith.constant 1.000000e+00 : f32
    %419 = vector.broadcast %cst_121 : f32 to vector<10x32xf32>
    %420 = arith.addf %419, %418 : vector<10x32xf32>
    %421 = arith.divf %419, %420 : vector<10x32xf32>
    %422 = vector.extract_strided_slice %409 {offsets = [0, 64], sizes = [10, 32], strides = [1, 1]} : vector<10x128xf32> to vector<10x32xf32>
    %423 = math.tanh %422 : vector<10x32xf32>
    %424 = vector.extract_strided_slice %409 {offsets = [0, 96], sizes = [10, 32], strides = [1, 1]} : vector<10x128xf32> to vector<10x32xf32>
    %425 = arith.negf %424 : vector<10x32xf32>
    %426 = math.exp %425 : vector<10x32xf32>
    %cst_122 = arith.constant 1.000000e+00 : f32
    %427 = vector.broadcast %cst_122 : f32 to vector<10x32xf32>
    %428 = arith.addf %427, %426 : vector<10x32xf32>
    %429 = arith.divf %427, %428 : vector<10x32xf32>
    %430 = arith.mulf %421, %386 : vector<10x32xf32>
    %431 = arith.mulf %415, %423 : vector<10x32xf32>
    %432 = arith.addf %430, %431 : vector<10x32xf32>
    %433 = math.tanh %432 : vector<10x32xf32>
    %434 = arith.mulf %429, %433 : vector<10x32xf32>
    %c6_i32_123 = arith.constant 6 : i32
    %435 = vector.broadcast %c6_i32_123 : i32 to vector<10x1xi32>
    %436 = arith.cmpi sgt, %12, %435 : vector<10x1xi32>
    %c1_i32_124 = arith.constant 1 : i32
    %437 = vector.broadcast %c1_i32_124 : i32 to vector<10x1xi32>
    %438 = arith.cmpi sgt, %12, %437 : vector<10x1xi32>
    %c6_i32_125 = arith.constant 6 : i32
    %c1_i32_126 = arith.constant 1 : i32
    %439 = vector.broadcast %c6_i32_125 : i32 to vector<1x32xi32>
    %440 = vector.broadcast %c1_i32_126 : i32 to vector<1x32xi32>
    %441 = arith.select %34, %439, %440 : vector<1x32xi1>, vector<1x32xi32>
    %442 = vector.broadcast %441 : vector<1x32xi32> to vector<10x32xi32>
    %443 = vector.broadcast %12 : vector<10x1xi32> to vector<10x32xi32>
    %444 = arith.cmpi slt, %442, %443 : vector<10x32xi32>
    %445 = arith.select %444, %434, %385 : vector<10x32xi1>, vector<10x32xf32>
    %446 = arith.select %444, %432, %386 : vector<10x32xi1>, vector<10x32xf32>
    %447 = vector.extract_strided_slice %434 {offsets = [0, 0], sizes = [10, 16], strides = [1, 1]} : vector<10x32xf32> to vector<10x16xf32>
    %cst_127 = arith.constant 0.000000e+00 : f32
    %448 = vector.shape_cast %436 : vector<10x1xi1> to vector<10x1xi1>
    %449 = vector.broadcast %448 : vector<10x1xi1> to vector<10x16xi1>
    %450 = vector.broadcast %cst_127 : f32 to vector<10x16xf32>
    %451 = arith.select %449, %447, %450 : vector<10x16xi1>, vector<10x16xf32>
    %c0_128 = arith.constant 0 : index
    %c6_129 = arith.constant 6 : index
    %c0_130 = arith.constant 0 : index
    %c0_131 = arith.constant 0 : index
    %452 = vector.load %arg8[%c0_128, %c6_129, %c0_130, %c0_131] : memref<1x8x10x16xf32, #tpu.memory_space<vmem>>, vector<1x1x10x16xf32>
    %453 = vector.shape_cast %452 : vector<1x1x10x16xf32> to vector<10x16xf32>
    %454 = vector.shape_cast %451 : vector<10x16xf32> to vector<1x1x10x16xf32>
    tpu.vector_store %arg8[%c0_128, %c6_129, %c0_130, %c0_131], %454 {strides = array<i32>} : memref<1x8x10x16xf32, #tpu.memory_space<vmem>>, vector<1x1x10x16xf32>,
    %455 = vector.extract_strided_slice %434 {offsets = [0, 16], sizes = [10, 16], strides = [1, 1]} : vector<10x32xf32> to vector<10x16xf32>
    %cst_132 = arith.constant 0.000000e+00 : f32
    %456 = vector.shape_cast %438 : vector<10x1xi1> to vector<10x1xi1>
    %457 = vector.broadcast %456 : vector<10x1xi1> to vector<10x16xi1>
    %458 = vector.broadcast %cst_132 : f32 to vector<10x16xf32>
    %459 = arith.select %457, %455, %458 : vector<10x16xi1>, vector<10x16xf32>
    %c0_133 = arith.constant 0 : index
    %c1_134 = arith.constant 1 : index
    %c0_135 = arith.constant 0 : index
    %c0_136 = arith.constant 0 : index
    %460 = vector.load %arg9[%c0_133, %c1_134, %c0_135, %c0_136] : memref<1x8x10x16xf32, #tpu.memory_space<vmem>>, vector<1x1x10x16xf32>
    %461 = vector.shape_cast %460 : vector<1x1x10x16xf32> to vector<10x16xf32>
    %462 = vector.shape_cast %459 : vector<10x16xf32> to vector<1x1x10x16xf32>
    tpu.vector_store %arg9[%c0_133, %c1_134, %c0_135, %c0_136], %462 {strides = array<i32>} : memref<1x8x10x16xf32, #tpu.memory_space<vmem>>, vector<1x1x10x16xf32>,
    %463 = vector.extract_strided_slice %8 {offsets = [70, 0], sizes = [10, 128], strides = [1, 1]} : vector<80x128xf32> to vector<10x128xf32>
    %464 = vector.extract_strided_slice %8 {offsets = [0, 0], sizes = [10, 128], strides = [1, 1]} : vector<80x128xf32> to vector<10x128xf32>
    %465 = vector.shape_cast %31 : vector<1x128xi1> to vector<1x128xi1>
    %466 = vector.broadcast %465 : vector<1x128xi1> to vector<10x128xi1>
    %467 = arith.select %466, %463, %464 : vector<10x128xi1>, vector<10x128xf32>
    %cst_137 = arith.constant dense<0.000000e+00> : vector<10x128xf32>
    %468 = tpu.matmul %445, %10, %cst_137 {dimension_numbers = #tpu.dot_dimension_numbers<[1], [0], [0], [1], [0, 0, 1, 1], [], []>} : vector<10x32xf32>, vector<32x128xf32>, vector<10x128xf32> -> vector<10x128xf32>
    %469 = arith.addf %467, %468 : vector<10x128xf32>
    %470 = vector.extract_strided_slice %469 {offsets = [0, 0], sizes = [10, 32], strides = [1, 1]} : vector<10x128xf32> to vector<10x32xf32>
    %471 = arith.negf %470 : vector<10x32xf32>
    %472 = math.exp %471 : vector<10x32xf32>
    %cst_138 = arith.constant 1.000000e+00 : f32
    %473 = vector.broadcast %cst_138 : f32 to vector<10x32xf32>
    %474 = arith.addf %473, %472 : vector<10x32xf32>
    %475 = arith.divf %473, %474 : vector<10x32xf32>
    %476 = vector.extract_strided_slice %469 {offsets = [0, 32], sizes = [10, 32], strides = [1, 1]} : vector<10x128xf32> to vector<10x32xf32>
    %477 = arith.negf %476 : vector<10x32xf32>
    %478 = math.exp %477 : vector<10x32xf32>
    %cst_139 = arith.constant 1.000000e+00 : f32
    %479 = vector.broadcast %cst_139 : f32 to vector<10x32xf32>
    %480 = arith.addf %479, %478 : vector<10x32xf32>
    %481 = arith.divf %479, %480 : vector<10x32xf32>
    %482 = vector.extract_strided_slice %469 {offsets = [0, 64], sizes = [10, 32], strides = [1, 1]} : vector<10x128xf32> to vector<10x32xf32>
    %483 = math.tanh %482 : vector<10x32xf32>
    %484 = vector.extract_strided_slice %469 {offsets = [0, 96], sizes = [10, 32], strides = [1, 1]} : vector<10x128xf32> to vector<10x32xf32>
    %485 = arith.negf %484 : vector<10x32xf32>
    %486 = math.exp %485 : vector<10x32xf32>
    %cst_140 = arith.constant 1.000000e+00 : f32
    %487 = vector.broadcast %cst_140 : f32 to vector<10x32xf32>
    %488 = arith.addf %487, %486 : vector<10x32xf32>
    %489 = arith.divf %487, %488 : vector<10x32xf32>
    %490 = arith.mulf %481, %446 : vector<10x32xf32>
    %491 = arith.mulf %475, %483 : vector<10x32xf32>
    %492 = arith.addf %490, %491 : vector<10x32xf32>
    %493 = math.tanh %492 : vector<10x32xf32>
    %494 = arith.mulf %489, %493 : vector<10x32xf32>
    %c7_i32_141 = arith.constant 7 : i32
    %495 = vector.broadcast %c7_i32_141 : i32 to vector<10x1xi32>
    %496 = arith.cmpi sgt, %12, %495 : vector<10x1xi32>
    %c0_i32_142 = arith.constant 0 : i32
    %497 = vector.broadcast %c0_i32_142 : i32 to vector<10x1xi32>
    %498 = arith.cmpi sgt, %12, %497 : vector<10x1xi32>
    %499 = vector.extract_strided_slice %494 {offsets = [0, 0], sizes = [10, 16], strides = [1, 1]} : vector<10x32xf32> to vector<10x16xf32>
    %cst_143 = arith.constant 0.000000e+00 : f32
    %500 = vector.shape_cast %496 : vector<10x1xi1> to vector<10x1xi1>
    %501 = vector.broadcast %500 : vector<10x1xi1> to vector<10x16xi1>
    %502 = vector.broadcast %cst_143 : f32 to vector<10x16xf32>
    %503 = arith.select %501, %499, %502 : vector<10x16xi1>, vector<10x16xf32>
    %c0_144 = arith.constant 0 : index
    %c7_145 = arith.constant 7 : index
    %c0_146 = arith.constant 0 : index
    %c0_147 = arith.constant 0 : index
    %504 = vector.load %arg8[%c0_144, %c7_145, %c0_146, %c0_147] : memref<1x8x10x16xf32, #tpu.memory_space<vmem>>, vector<1x1x10x16xf32>
    %505 = vector.shape_cast %504 : vector<1x1x10x16xf32> to vector<10x16xf32>
    %506 = vector.shape_cast %503 : vector<10x16xf32> to vector<1x1x10x16xf32>
    tpu.vector_store %arg8[%c0_144, %c7_145, %c0_146, %c0_147], %506 {strides = array<i32>} : memref<1x8x10x16xf32, #tpu.memory_space<vmem>>, vector<1x1x10x16xf32>,
    %507 = vector.extract_strided_slice %494 {offsets = [0, 16], sizes = [10, 16], strides = [1, 1]} : vector<10x32xf32> to vector<10x16xf32>
    %cst_148 = arith.constant 0.000000e+00 : f32
    %508 = vector.shape_cast %498 : vector<10x1xi1> to vector<10x1xi1>
    %509 = vector.broadcast %508 : vector<10x1xi1> to vector<10x16xi1>
    %510 = vector.broadcast %cst_148 : f32 to vector<10x16xf32>
    %511 = arith.select %509, %507, %510 : vector<10x16xi1>, vector<10x16xf32>
    %c0_149 = arith.constant 0 : index
    %c0_150 = arith.constant 0 : index
    %c0_151 = arith.constant 0 : index
    %c0_152 = arith.constant 0 : index
    %512 = vector.load %arg9[%c0_149, %c0_150, %c0_151, %c0_152] : memref<1x8x10x16xf32, #tpu.memory_space<vmem>>, vector<1x1x10x16xf32>
    %513 = vector.shape_cast %512 : vector<1x1x10x16xf32> to vector<10x16xf32>
    %514 = vector.shape_cast %511 : vector<10x16xf32> to vector<1x1x10x16xf32>
    tpu.vector_store %arg9[%c0_149, %c0_150, %c0_151, %c0_152], %514 {strides = array<i32>} : memref<1x8x10x16xf32, #tpu.memory_space<vmem>>, vector<1x1x10x16xf32>,
    return
  }
  func.func @transform_0(%arg0: i32) -> (i32, i32, i32) {
    %c0_i32 = arith.constant 0 : i32
    %c0_i32_0 = arith.constant 0 : i32
    %c0_i32_1 = arith.constant 0 : i32
    return %arg0, %c0_i32, %c0_i32_0 : i32, i32, i32
  }
  func.func @transform_1(%arg0: i32) -> (i32, i32, i32) {
    %c0_i32 = arith.constant 0 : i32
    %c0_i32_0 = arith.constant 0 : i32
    %c0_i32_1 = arith.constant 0 : i32
    return %arg0, %c0_i32, %c0_i32_0 : i32, i32, i32
  }
  func.func @transform_2(%arg0: i32) -> (i32, i32, i32) {
    %c0_i32 = arith.constant 0 : i32
    %c0_i32_0 = arith.constant 0 : i32
    %c0_i32_1 = arith.constant 0 : i32
    return %arg0, %c0_i32, %c0_i32_0 : i32, i32, i32
  }
  func.func @transform_3(%arg0: i32) -> (i32, i32, i32) {
    %c0_i32 = arith.constant 0 : i32
    %c0_i32_0 = arith.constant 0 : i32
    %c0_i32_1 = arith.constant 0 : i32
    return %arg0, %c0_i32, %c0_i32_0 : i32, i32, i32
  }
  func.func @transform_4(%arg0: i32) -> (i32, i32, i32) {
    %c0_i32 = arith.constant 0 : i32
    %c0_i32_0 = arith.constant 0 : i32
    %c0_i32_1 = arith.constant 0 : i32
    return %arg0, %c0_i32, %c0_i32_0 : i32, i32, i32
  }
  func.func @transform_5(%arg0: i32) -> (i32, i32, i32) {
    %c0_i32 = arith.constant 0 : i32
    %c0_i32_0 = arith.constant 0 : i32
    %c0_i32_1 = arith.constant 0 : i32
    return %arg0, %c0_i32, %c0_i32_0 : i32, i32, i32
  }
  func.func @transform_6(%arg0: i32) -> (i32, i32, i32) {
    %c0_i32 = arith.constant 0 : i32
    %c0_i32_0 = arith.constant 0 : i32
    %c0_i32_1 = arith.constant 0 : i32
    return %arg0, %c0_i32, %c0_i32_0 : i32, i32, i32
  }
  func.func @transform_7(%arg0: i32) -> (i32, i32, i32, i32) {
    %c0_i32 = arith.constant 0 : i32
    %c0_i32_0 = arith.constant 0 : i32
    %c0_i32_1 = arith.constant 0 : i32
    %c0_i32_2 = arith.constant 0 : i32
    return %arg0, %c0_i32, %c0_i32_0, %c0_i32_1 : i32, i32, i32, i32
  }
  func.func @transform_8(%arg0: i32) -> (i32, i32, i32, i32) {
    %c0_i32 = arith.constant 0 : i32
    %c0_i32_0 = arith.constant 0 : i32
    %c0_i32_1 = arith.constant 0 : i32
    %c0_i32_2 = arith.constant 0 : i32
    return %arg0, %c0_i32, %c0_i32_0, %c0_i32_1 : i32, i32, i32, i32
  }
}

</mosaic_0001>

<llo_original>
// kernel: tpu_custom_call.1
$region0: #{tpu_custom_call.1}
  #allocation0 [shape = 'u32[]', space=smem, size = 0x4, offset = 0x4, fixed_abs, tag = 'smem constant byte address 0x4 - core index']
  #allocation1 [shape = 'u32[144,128]{1,0:T(1,128)}', space=vmem, size = 0x12000, scoped, tag = 'internal scratch']
  %s0 = inlined_call_operand.vmem [shape: s32[2,10,1], index: 0, kind: input, shape index: {}]
  %s1 = inlined_call_operand.vmem [shape: f32[2,80,32], index: 1, kind: input, shape index: {}]
  %s2 = inlined_call_operand.vmem [shape: f32[2,32,128], index: 2, kind: input, shape index: {}]
  %s3 = inlined_call_operand.vmem [shape: f32[2,32,128], index: 3, kind: input, shape index: {}]
  %s4 = inlined_call_operand.vmem [shape: f32[2,1,128], index: 4, kind: input, shape index: {}]
  %s5 = inlined_call_operand.vmem [shape: f32[2,1,32], index: 5, kind: input, shape index: {}]
  %s6 = inlined_call_operand.vmem [shape: f32[2,1,32], index: 6, kind: input, shape index: {}]
  %s7 = inlined_call_operand.vmem [shape: f32[2,8,10,16], index: 7, kind: output, shape index: {0}]
  %s8 = inlined_call_operand.vmem [shape: f32[2,8,10,16], index: 8, kind: output, shape index: {1}]
  %9 = xla_tuple %s7, %s8
  %s10 = sld [smem:[#allocation0]]
  $region69: #{tpu_custom_call.1} parent=0
    _
  %s12 = ssub.s32 1, %s10
  %s13 = scalar_select 0, %s12, %s10
  loop: start=0, step=1, limit=4
  $region2: #{tpu_custom_call.1} parent=0 // loop_pre_header
    _
  $region3: #{tpu_custom_call.1} parent=0 // loop_header
    %s15 = sphi 0, %s19
    %p16 = scmp.ge.s32.totalorder %s15, 4
    %s25 = sphi 0, %s27
    %s28 = sphi 0, %s25
    %s29 = sphi 0, %s28
    %s45 = sphi 0, %s29
    %s51 = sphi 0, %s53
    %s54 = sphi 0, %s51
    %s55 = sphi 0, %s54
    %s71 = sphi 0, %s55
    %s77 = sphi 0, %s79
    %s80 = sphi 0, %s77
    %s81 = sphi 0, %s80
    %s97 = sphi 0, %s81
    %s103 = sphi 0, %s105
    %s106 = sphi 0, %s103
    %s107 = sphi 0, %s106
    %s123 = sphi 0, %s107
    %s129 = sphi 0, %s131
    %s132 = sphi 0, %s129
    %s133 = sphi 0, %s132
    %s149 = sphi 0, %s133
    %s155 = sphi 0, %s157
    %s158 = sphi 0, %s155
    %s159 = sphi 0, %s158
    %s175 = sphi 0, %s159
    %s181 = sphi 0, %s183
    %s184 = sphi 0, %s181
    %s185 = sphi 0, %s184
    %s201 = sphi 0, %s185
    %s207 = sphi 0, %s209
    %s210 = sphi 0, %s207
    %s211 = sphi 0, %s210
    %s227 = sphi 0, %s211
    %s233 = sphi 0, %s235
    %s236 = sphi 0, %s233
    %s237 = sphi 0, %s236
    %s253 = sphi 0, %s237
  $region4: #{tpu_custom_call.1} parent=0 // loop_header_branch
    %18 = sbr.rel (%p16) target = $region8
  $region5: #{tpu_custom_call.1} parent=0 // loop_body
    %s20 = ssub.s32 %s15, 1
    %s21 = ssub.s32 %s15, 2
    %s22 = sadd.s32 %s15, 1
    %s23 = ssub.s32 %s15, %s22
    %p24 = scmp.eq.s32.totalorder %s23, 0
    %s26 = sadd.s32 %s25, 1
    %s27 = scalar_select %p24, %s25, %s26
    %p30 = pneg %p24
    %p31 = scmp.eq.s32.totalorder %s15, 1
    %p32 = por %p30, %p31
    %p33 = scmp.ne.s32.totalorder %s25, %s28
    %p34 = scmp.eq.s32.totalorder %s15, 0
    %p35 = por %p33, %p34
    %p36 = scmp.ne.s32.totalorder %s25, %s28
    %p37 = scmp.eq.s32.totalorder %s20, 1
    %p38 = por %p36, %p37
    %p39 = scmp.ne.s32.totalorder %s28, %s29
    %p40 = scmp.eq.s32.totalorder %s20, 0
    %p41 = por %p39, %p40
    %p42 = scmp.ne.s32.totalorder %s28, %s29
    %p43 = scmp.eq.s32.totalorder %s21, 1
    %p44 = por %p42, %p43
    %p46 = scmp.ne.s32.totalorder %s29, %s45
    %p47 = scmp.eq.s32.totalorder %s21, 0
    %p48 = por %p46, %p47
    %s49 = ssub.s32 %s15, %s22
    %p50 = scmp.eq.s32.totalorder %s49, 0
    %s52 = sadd.s32 %s51, 1
    %s53 = scalar_select %p50, %s51, %s52
    %p56 = pneg %p50
    %p57 = scmp.eq.s32.totalorder %s15, 1
    %p58 = por %p56, %p57
    %p59 = scmp.ne.s32.totalorder %s51, %s54
    %p60 = scmp.eq.s32.totalorder %s15, 0
    %p61 = por %p59, %p60
    %p62 = scmp.ne.s32.totalorder %s51, %s54
    %p63 = scmp.eq.s32.totalorder %s20, 1
    %p64 = por %p62, %p63
    %p65 = scmp.ne.s32.totalorder %s54, %s55
    %p66 = scmp.eq.s32.totalorder %s20, 0
    %p67 = por %p65, %p66
    %p68 = scmp.ne.s32.totalorder %s54, %s55
    %p69 = scmp.eq.s32.totalorder %s21, 1
    %p70 = por %p68, %p69
    %p72 = scmp.ne.s32.totalorder %s55, %s71
    %p73 = scmp.eq.s32.totalorder %s21, 0
    %p74 = por %p72, %p73
    %s75 = ssub.s32 %s15, %s22
    %p76 = scmp.eq.s32.totalorder %s75, 0
    %s78 = sadd.s32 %s77, 1
    %s79 = scalar_select %p76, %s77, %s78
    %p82 = pneg %p76
    %p83 = scmp.eq.s32.totalorder %s15, 1
    %p84 = por %p82, %p83
    %p85 = scmp.ne.s32.totalorder %s77, %s80
    %p86 = scmp.eq.s32.totalorder %s15, 0
    %p87 = por %p85, %p86
    %p88 = scmp.ne.s32.totalorder %s77, %s80
    %p89 = scmp.eq.s32.totalorder %s20, 1
    %p90 = por %p88, %p89
    %p91 = scmp.ne.s32.totalorder %s80, %s81
    %p92 = scmp.eq.s32.totalorder %s20, 0
    %p93 = por %p91, %p92
    %p94 = scmp.ne.s32.totalorder %s80, %s81
    %p95 = scmp.eq.s32.totalorder %s21, 1
    %p96 = por %p94, %p95
    %p98 = scmp.ne.s32.totalorder %s81, %s97
    %p99 = scmp.eq.s32.totalorder %s21, 0
    %p100 = por %p98, %p99
    %s101 = ssub.s32 %s15, %s22
    %p102 = scmp.eq.s32.totalorder %s101, 0
    %s104 = sadd.s32 %s103, 1
    %s105 = scalar_select %p102, %s103, %s104
    %p108 = pneg %p102
    %p109 = scmp.eq.s32.totalorder %s15, 1
    %p110 = por %p108, %p109
    %p111 = scmp.ne.s32.totalorder %s103, %s106
    %p112 = scmp.eq.s32.totalorder %s15, 0
    %p113 = por %p111, %p112
    %p114 = scmp.ne.s32.totalorder %s103, %s106
    %p115 = scmp.eq.s32.totalorder %s20, 1
    %p116 = por %p114, %p115
    %p117 = scmp.ne.s32.totalorder %s106, %s107
    %p118 = scmp.eq.s32.totalorder %s20, 0
    %p119 = por %p117, %p118
    %p120 = scmp.ne.s32.totalorder %s106, %s107
    %p121 = scmp.eq.s32.totalorder %s21, 1
    %p122 = por %p120, %p121
    %p124 = scmp.ne.s32.totalorder %s107, %s123
    %p125 = scmp.eq.s32.totalorder %s21, 0
    %p126 = por %p124, %p125
    %s127 = ssub.s32 %s15, %s22
    %p128 = scmp.eq.s32.totalorder %s127, 0
    %s130 = sadd.s32 %s129, 1
    %s131 = scalar_select %p128, %s129, %s130
    %p134 = pneg %p128
    %p135 = scmp.eq.s32.totalorder %s15, 1
    %p136 = por %p134, %p135
    %p137 = scmp.ne.s32.totalorder %s129, %s132
    %p138 = scmp.eq.s32.totalorder %s15, 0
    %p139 = por %p137, %p138
    %p140 = scmp.ne.s32.totalorder %s129, %s132
    %p141 = scmp.eq.s32.totalorder %s20, 1
    %p142 = por %p140, %p141
    %p143 = scmp.ne.s32.totalorder %s132, %s133
    %p144 = scmp.eq.s32.totalorder %s20, 0
    %p145 = por %p143, %p144
    %p146 = scmp.ne.s32.totalorder %s132, %s133
    %p147 = scmp.eq.s32.totalorder %s21, 1
    %p148 = por %p146, %p147
    %p150 = scmp.ne.s32.totalorder %s133, %s149
    %p151 = scmp.eq.s32.totalorder %s21, 0
    %p152 = por %p150, %p151
    %s153 = ssub.s32 %s15, %s22
    %p154 = scmp.eq.s32.totalorder %s153, 0
    %s156 = sadd.s32 %s155, 1
    %s157 = scalar_select %p154, %s155, %s156
    %p160 = pneg %p154
    %p161 = scmp.eq.s32.totalorder %s15, 1
    %p162 = por %p160, %p161
    %p163 = scmp.ne.s32.totalorder %s155, %s158
    %p164 = scmp.eq.s32.totalorder %s15, 0
    %p165 = por %p163, %p164
    %p166 = scmp.ne.s32.totalorder %s155, %s158
    %p167 = scmp.eq.s32.totalorder %s20, 1
    %p168 = por %p166, %p167
    %p169 = scmp.ne.s32.totalorder %s158, %s159
    %p170 = scmp.eq.s32.totalorder %s20, 0
    %p171 = por %p169, %p170
    %p172 = scmp.ne.s32.totalorder %s158, %s159
    %p173 = scmp.eq.s32.totalorder %s21, 1
    %p174 = por %p172, %p173
    %p176 = scmp.ne.s32.totalorder %s159, %s175
    %p177 = scmp.eq.s32.totalorder %s21, 0
    %p178 = por %p176, %p177
    %s179 = ssub.s32 %s15, %s22
    %p180 = scmp.eq.s32.totalorder %s179, 0
    %s182 = sadd.s32 %s181, 1
    %s183 = scalar_select %p180, %s181, %s182
    %p186 = pneg %p180
    %p187 = scmp.eq.s32.totalorder %s15, 1
    %p188 = por %p186, %p187
    %p189 = scmp.ne.s32.totalorder %s181, %s184
    %p190 = scmp.eq.s32.totalorder %s15, 0
    %p191 = por %p189, %p190
    %p192 = scmp.ne.s32.totalorder %s181, %s184
    %p193 = scmp.eq.s32.totalorder %s20, 1
    %p194 = por %p192, %p193
    %p195 = scmp.ne.s32.totalorder %s184, %s185
    %p196 = scmp.eq.s32.totalorder %s20, 0
    %p197 = por %p195, %p196
    %p198 = scmp.ne.s32.totalorder %s184, %s185
    %p199 = scmp.eq.s32.totalorder %s21, 1
    %p200 = por %p198, %p199
    %p202 = scmp.ne.s32.totalorder %s185, %s201
    %p203 = scmp.eq.s32.totalorder %s21, 0
    %p204 = por %p202, %p203
    %s205 = ssub.s32 %s15, %s22
    %p206 = scmp.eq.s32.totalorder %s205, 0
    %s208 = sadd.s32 %s207, 1
    %s209 = scalar_select %p206, %s207, %s208
    %p212 = pneg %p206
    %p213 = scmp.eq.s32.totalorder %s15, 1
    %p214 = por %p212, %p213
    %p215 = scmp.ne.s32.totalorder %s207, %s210
    %p216 = scmp.eq.s32.totalorder %s15, 0
    %p217 = por %p215, %p216
    %p218 = scmp.ne.s32.totalorder %s207, %s210
    %p219 = scmp.eq.s32.totalorder %s20, 1
    %p220 = por %p218, %p219
    %p221 = scmp.ne.s32.totalorder %s210, %s211
    %p222 = scmp.eq.s32.totalorder %s20, 0
    %p223 = por %p221, %p222
    %p224 = scmp.ne.s32.totalorder %s210, %s211
    %p225 = scmp.eq.s32.totalorder %s21, 1
    %p226 = por %p224, %p225
    %p228 = scmp.ne.s32.totalorder %s211, %s227
    %p229 = scmp.eq.s32.totalorder %s21, 0
    %p230 = por %p228, %p229
    %s231 = ssub.s32 %s15, %s22
    %p232 = scmp.eq.s32.totalorder %s231, 0
    %s234 = sadd.s32 %s233, 1
    %s235 = scalar_select %p232, %s233, %s234
    %p238 = pneg %p232
    %p239 = scmp.eq.s32.totalorder %s15, 1
    %p240 = por %p238, %p239
    %p241 = scmp.ne.s32.totalorder %s233, %s236
    %p242 = scmp.eq.s32.totalorder %s15, 0
    %p243 = por %p241, %p242
    %p244 = scmp.ne.s32.totalorder %s233, %s236
    %p245 = scmp.eq.s32.totalorder %s20, 1
    %p246 = por %p244, %p245
    %p247 = scmp.ne.s32.totalorder %s236, %s237
    %p248 = scmp.eq.s32.totalorder %s20, 0
    %p249 = por %p247, %p248
    %p250 = scmp.ne.s32.totalorder %s236, %s237
    %p251 = scmp.eq.s32.totalorder %s21, 1
    %p252 = por %p250, %p251
    %p254 = scmp.ne.s32.totalorder %s237, %s253
    %p255 = scmp.eq.s32.totalorder %s21, 0
    %p256 = por %p254, %p255
    %p257 = scmp.le.s32.totalorder 1, %s15
    %p258 = scmp.lt.s32.totalorder %s15, 3
    %p259 = pnand %p257, %p258
    %p260 = pneg %p259
    // Predicated region
    $region9: #{tpu_custom_call.1} parent=5 // pred_check
      _
    $region10: #{tpu_custom_call.1} parent=5 // pred_check_branch
      %262 = sbr.rel (%p259) target = $region12
    $region11: #{tpu_custom_call.1} parent=5 // pred_region
      %s263 = ssub.s32 %s15, 1
    $region12: #{tpu_custom_call.1} parent=5 // pred_fallthru
      _
    %p264 = scmp.lt.s32.totalorder %s15, 2
    // Predicated region
    $region13: #{tpu_custom_call.1} parent=5 // pred_check
      %p265 = pneg %p264
    $region14: #{tpu_custom_call.1} parent=5 // pred_check_branch
      %267 = sbr.rel (%p265) target = $region16
    $region15: #{tpu_custom_call.1} parent=5 // pred_region
      // Predicated region
      $region17: #{tpu_custom_call.1} parent=15 // pred_check
        %p268 = pneg %p35
      $region18: #{tpu_custom_call.1} parent=15 // pred_check_branch
        %270 = sbr.rel (%p268) target = $region20
      $region19: #{tpu_custom_call.1} parent=15 // pred_region
        %p271 = scmp.lt.s32.totalorder %s15, 1
        %s272 = scalar_select %p271, %s15, 1
        %s273 = smul.addr %s272, 2
        %s274 = smul.addr %s273, 8
        %s275 = scalar_lea.vmem %s0, %s274
      $region20: #{tpu_custom_call.1} parent=15 // pred_fallthru
        _
      // Predicated region
      $region21: #{tpu_custom_call.1} parent=15 // pred_check
        %p276 = pneg %p61
      $region22: #{tpu_custom_call.1} parent=15 // pred_check_branch
        %278 = sbr.rel (%p276) target = $region24
      $region23: #{tpu_custom_call.1} parent=15 // pred_region
        %p279 = scmp.lt.s32.totalorder %s15, 1
        %s280 = scalar_select %p279, %s15, 1
        %s281 = smul.addr %s280, 10
        %s282 = smul.addr %s281, 8
        %s283 = scalar_lea.vmem %s1, %s282
      $region24: #{tpu_custom_call.1} parent=15 // pred_fallthru
        _
      // Predicated region
      $region25: #{tpu_custom_call.1} parent=15 // pred_check
        %p284 = pneg %p87
      $region26: #{tpu_custom_call.1} parent=15 // pred_check_branch
        %286 = sbr.rel (%p284) target = $region28
      $region27: #{tpu_custom_call.1} parent=15 // pred_region
        %p287 = scmp.lt.s32.totalorder %s15, 1
        %s288 = scalar_select %p287, %s15, 1
        %s289 = smul.addr %s288, 4
        %s290 = smul.addr %s289, 8
        %s291 = scalar_lea.vmem %s2, %s290
      $region28: #{tpu_custom_call.1} parent=15 // pred_fallthru
        _
      // Predicated region
      $region29: #{tpu_custom_call.1} parent=15 // pred_check
        %p292 = pneg %p113
      $region30: #{tpu_custom_call.1} parent=15 // pred_check_branch
        %294 = sbr.rel (%p292) target = $region32
      $region31: #{tpu_custom_call.1} parent=15 // pred_region
        %p295 = scmp.lt.s32.totalorder %s15, 1
        %s296 = scalar_select %p295, %s15, 1
        %s297 = smul.addr %s296, 4
        %s298 = smul.addr %s297, 8
        %s299 = scalar_lea.vmem %s3, %s298
      $region32: #{tpu_custom_call.1} parent=15 // pred_fallthru
        _
      // Predicated region
      $region33: #{tpu_custom_call.1} parent=15 // pred_check
        %p300 = pneg %p139
      $region34: #{tpu_custom_call.1} parent=15 // pred_check_branch
        %302 = sbr.rel (%p300) target = $region36
      $region35: #{tpu_custom_call.1} parent=15 // pred_region
        %p303 = scmp.lt.s32.totalorder %s15, 1
        %s304 = scalar_select %p303, %s15, 1
        %s305 = scalar_lea.vmem %s4, %s304
      $region36: #{tpu_custom_call.1} parent=15 // pred_fallthru
        _
      // Predicated region
      $region37: #{tpu_custom_call.1} parent=15 // pred_check
        %p306 = pneg %p165
      $region38: #{tpu_custom_call.1} parent=15 // pred_check_branch
        %308 = sbr.rel (%p306) target = $region40
      $region39: #{tpu_custom_call.1} parent=15 // pred_region
        %p309 = scmp.lt.s32.totalorder %s15, 1
        %s310 = scalar_select %p309, %s15, 1
        %s311 = scalar_lea.vmem %s5, %s310
      $region40: #{tpu_custom_call.1} parent=15 // pred_fallthru
        _
      // Predicated region
      $region41: #{tpu_custom_call.1} parent=15 // pred_check
        %p312 = pneg %p191
      $region42: #{tpu_custom_call.1} parent=15 // pred_check_branch
        %314 = sbr.rel (%p312) target = $region44
      $region43: #{tpu_custom_call.1} parent=15 // pred_region
        %p315 = scmp.lt.s32.totalorder %s15, 1
        %s316 = scalar_select %p315, %s15, 1
        %s317 = scalar_lea.vmem %s6, %s316
      $region44: #{tpu_custom_call.1} parent=15 // pred_fallthru
        _
    $region16: #{tpu_custom_call.1} parent=5 // pred_fallthru
      _
    %p318 = scmp.le.s32.totalorder 1, %s15
    %p319 = scmp.lt.s32.totalorder %s15, 3
    %p320 = pnand %p318, %p319
    %p321 = pneg %p320
    // Predicated region
    $region45: #{tpu_custom_call.1} parent=5 // pred_check
      _
    $region46: #{tpu_custom_call.1} parent=5 // pred_check_branch
      %323 = sbr.rel (%p320) target = $region48
    $region47: #{tpu_custom_call.1} parent=5 // pred_region
      %s324 = ssub.s32 %s15, 1
      %p325 = scmp.lt.s32.totalorder %s20, 1
      %s326 = scalar_select %p325, %s20, 1
      %s327 = smul.addr %s326, 2
      %s328 = smul.addr %s327, 8
      %s329 = scalar_lea.vmem %s0, %s328
      %p330 = pneg %p41
      %p331 = pneg %p38
      %p332 = scmp.lt.s32.totalorder %s20, 1
      %s333 = scalar_select %p332, %s20, 1
      %s334 = smul.addr %s333, 10
      %s335 = smul.addr %s334, 8
      %s336 = scalar_lea.vmem %s1, %s335
      %p337 = pneg %p67
      %p338 = pneg %p64
      %p339 = scmp.lt.s32.totalorder %s20, 1
      %s340 = scalar_select %p339, %s20, 1
      %s341 = smul.addr %s340, 4
      %s342 = smul.addr %s341, 8
      %s343 = scalar_lea.vmem %s2, %s342
      %p344 = pneg %p93
      %p345 = pneg %p90
      %p346 = scmp.lt.s32.totalorder %s20, 1
      %s347 = scalar_select %p346, %s20, 1
      %s348 = smul.addr %s347, 4
      %s349 = smul.addr %s348, 8
      %s350 = scalar_lea.vmem %s3, %s349
      %p351 = pneg %p119
      %p352 = pneg %p116
      %p353 = scmp.lt.s32.totalorder %s20, 1
      %s354 = scalar_select %p353, %s20, 1
      %s355 = scalar_lea.vmem %s4, %s354
      %p356 = pneg %p145
      %p357 = pneg %p142
      %p358 = scmp.lt.s32.totalorder %s20, 1
      %s359 = scalar_select %p358, %s20, 1
      %s360 = scalar_lea.vmem %s5, %s359
      %p361 = pneg %p171
      %p362 = pneg %p168
      %p363 = scmp.lt.s32.totalorder %s20, 1
      %s364 = scalar_select %p363, %s20, 1
      %s365 = scalar_lea.vmem %s6, %s364
      %p366 = pneg %p197
      %p367 = pneg %p194
      %p368 = pneg %p223
      %p369 = pneg %p220
      %p370 = scmp.lt.s32.totalorder %s20, 1
      %s371 = scalar_select %p370, %s20, 1
      %s372 = smul.addr %s371, 16
      %s373 = smul.addr %s372, 8
      %s374 = scalar_lea.vmem %s7, %s373
      %p375 = pneg %p249
      %p376 = pneg %p246
      %p377 = scmp.lt.s32.totalorder %s20, 1
      %s378 = scalar_select %p377, %s20, 1
      %s379 = smul.addr %s378, 16
      %s380 = smul.addr %s379, 8
      %s381 = scalar_lea.vmem %s8, %s380
      %p382 = scmp.lt.s32.totalorder %s20, 1
      %s383 = scalar_select %p382, %s20, 1
      %s384 = smul.addr %s383, 2
      %s385 = smul.addr %s384, 8
      %s386 = scalar_lea.vmem %s0, %s385
      %p387 = scmp.lt.s32.totalorder %s20, 1
      %s388 = scalar_select %p387, %s20, 1
      %s389 = smul.addr %s388, 10
      %s390 = smul.addr %s389, 8
      %s391 = scalar_lea.vmem %s1, %s390
      %p392 = scmp.lt.s32.totalorder %s20, 1
      %s393 = scalar_select %p392, %s20, 1
      %s394 = smul.addr %s393, 4
      %s395 = smul.addr %s394, 8
      %s396 = scalar_lea.vmem %s2, %s395
      %p397 = scmp.lt.s32.totalorder %s20, 1
      %s398 = scalar_select %p397, %s20, 1
      %s399 = smul.addr %s398, 4
      %s400 = smul.addr %s399, 8
      %s401 = scalar_lea.vmem %s3, %s400
      %p402 = scmp.lt.s32.totalorder %s20, 1
      %s403 = scalar_select %p402, %s20, 1
      %s404 = scalar_lea.vmem %s4, %s403
      %p405 = scmp.lt.s32.totalorder %s20, 1
      %s406 = scalar_select %p405, %s20, 1
      %s407 = scalar_lea.vmem %s5, %s406
      %p408 = scmp.lt.s32.totalorder %s20, 1
      %s409 = scalar_select %p408, %s20, 1
      %s410 = scalar_lea.vmem %s6, %s409
      %p411 = scmp.lt.s32.totalorder %s20, 1
      %s412 = scalar_select %p411, %s20, 1
      %s413 = smul.addr %s412, 16
      %s414 = smul.addr %s413, 8
      %s415 = scalar_lea.vmem %s7, %s414
      %p416 = scmp.lt.s32.totalorder %s20, 1
      %s417 = scalar_select %p416, %s20, 1
      %s418 = smul.addr %s417, 16
      %s419 = smul.addr %s418, 8
      %s420 = scalar_lea.vmem %s8, %s419
      %v421 = vld [vmem:[%s391] sm:$0xff]
      %v422 = vld [vmem:[%s391 + $0x8] sm:$0xff]
      %v423 = vld [vmem:[%s391 + $0x10] sm:$0xff]
      %v424 = vld [vmem:[%s391 + $0x18] sm:$0xff]
      %v425 = vld [vmem:[%s391 + $0x20] sm:$0xff]
      %v426 = vld [vmem:[%s391 + $0x28] sm:$0xff]
      %v427 = vld [vmem:[%s391 + $0x30] sm:$0xff]
      %v428 = vld [vmem:[%s391 + $0x38] sm:$0xff]
      %v429 = vld [vmem:[%s391 + $0x40] sm:$0xff]
      %v430 = vld [vmem:[%s391 + $0x48] sm:$0xff]
      %v431 = vld [vmem:[%s396] sm:$0xff]
      %v432 = vld [vmem:[%s396 + $0x8] sm:$0xff]
      %v433 = vld [vmem:[%s396 + $0x10] sm:$0xff]
      %v434 = vld [vmem:[%s396 + $0x18] sm:$0xff]
      %v435 = vld [vmem:[%s404] sm:$0x1]
      %v437 = vlaneseq
      %v438 = vshrl.u32 %v437, 7
      %v439 = vsub.s32 0, %v438
      %v440 = vrot.slane %v435, %v439
      %vm442 = vcmask 261120
      %v444 = vsel %vm442, %v421, 0
      %v447 = vsel %vm442, %v422, 0
      %v450 = vsel %vm442, %v423, 0
      %v453 = vsel %vm442, %v424, 0
      %v456 = vsel %vm442, %v425, 0
      %v459 = vsel %vm442, %v426, 0
      %v462 = vsel %vm442, %v427, 0
      %v465 = vsel %vm442, %v428, 0
      %v468 = vsel %vm442, %v429, 0
      %v471 = vsel %vm442, %v430, 0
      %473 = vmatprep.subr.mxu0 0.0
      %474 = vmatpush1.msra.mxu0 0.0
      %475 = vmatprep.subr.mxu0 0.0
      %476 = vmatpush1.msra.mxu0 0.0
      %477 = vmatprep.subr.mxu0 0.0
      %478 = vmatpush1.msra.mxu0 0.0
      %479 = vmatprep.subr.mxu0 0.0
      %480 = vmatpush1.msra.mxu0 0.0
      %481 = vmatprep.subr.mxu0 0.0
      %482 = vmatpush1.msra.mxu0 0.0
      %483 = vmatprep.subr.mxu0 0.0
      %484 = vmatpush1.msra.mxu0 0.0
      %485 = vmatprep.subr.mxu0 0.0
      %486 = vmatpush1.msra.mxu0 0.0
      %487 = vmatprep.subr.mxu0 0.0
      %488 = vmatpush1.msra.mxu0 0.0
      %489 = vmatprep.subr.mxu0 0.0
      %490 = vmatpush1.msra.mxu0 0.0
      %491 = vmatprep.subr.mxu0 0.0
      %492 = vmatpush1.msra.mxu0 0.0
      %493 = vmatprep.subr.mxu0 0.0
      %494 = vmatpush1.msra.mxu0 0.0
      %495 = vmatprep.subr.mxu0 0.0
      %496 = vmatpush1.msra.mxu0 0.0
      %497 = vmatprep.subr.mxu0 0.0
      %498 = vmatpush1.msra.mxu0 %v434
      %499 = vmatprep.subr.mxu0 0.0
      %500 = vmatpush1.msra.mxu0 %v433
      %501 = vmatprep.subr.mxu0 0.0
      %502 = vmatpush1.msra.mxu0 %v432
      %503 = vmatprep.subr.mxu0 0.0
      %504 = vmatpush1.msra.mxu0 %v431
      %505 = vmatprep.subr.mxu0 0.0
      %506 = vmatpush2.msra.mxu0 0.0
      %507 = vmatprep.subr.mxu0 0.0
      %508 = vmatpush2.msra.mxu0 0.0
      %509 = vmatprep.subr.mxu0 0.0
      %510 = vmatpush2.msra.mxu0 0.0
      %511 = vmatprep.subr.mxu0 0.0
      %512 = vmatpush2.msra.mxu0 0.0
      %513 = vmatprep.subr.mxu0 0.0
      %514 = vmatpush2.msra.mxu0 0.0
      %515 = vmatprep.subr.mxu0 0.0
      %516 = vmatpush2.msra.mxu0 0.0
      %517 = vmatprep.subr.mxu0 0.0
      %518 = vmatpush2.msra.mxu0 0.0
      %519 = vmatprep.subr.mxu0 0.0
      %520 = vmatpush2.msra.mxu0 0.0
      %521 = vmatprep.subr.mxu0 0.0
      %522 = vmatpush2.msra.mxu0 0.0
      %523 = vmatprep.subr.mxu0 0.0
      %524 = vmatpush2.msra.mxu0 0.0
      %525 = vmatprep.subr.mxu0 0.0
      %526 = vmatpush2.msra.mxu0 0.0
      %527 = vmatprep.subr.mxu0 0.0
      %528 = vmatpush2.msra.mxu0 0.0
      %529 = vmatprep.subr.mxu0 0.0
      %530 = vmatpush2.msra.mxu0 0.0
      %531 = vmatprep.subr.mxu0 0.0
      %532 = vmatpush2.msra.mxu0 0.0
      %533 = vmatprep.subr.mxu0 0.0
      %534 = vmatpush2.msra.mxu0 0.0
      %535 = vmatprep.subr.mxu0 0.0
      %536 = vmatpush2.msra.mxu0 0.0
      %537 = vmatprep.mubr.f32.mxu0 0.0
      %538 = vmatmul.mubr.f32.gmra.mxu0 %v444
      %v539 = vpop.f32.mrf.mxu0
      %v540 = vadd.f32 %v440, %v539
      %v541 = vpop.f32.mrf.mxu0
      %542 = vmatprep.mubr.f32.mxu0 0.0
      %543 = vmatmul.mubr.f32.gmra.mxu0 %v447
      %v544 = vpop.f32.mrf.mxu0
      %v545 = vadd.f32 %v440, %v544
      %v546 = vpop.f32.mrf.mxu0
      %547 = vmatprep.mubr.f32.mxu0 0.0
      %548 = vmatmul.mubr.f32.gmra.mxu0 %v450
      %v549 = vpop.f32.mrf.mxu0
      %v550 = vadd.f32 %v440, %v549
      %v551 = vpop.f32.mrf.mxu0
      %552 = vmatprep.mubr.f32.mxu0 0.0
      %553 = vmatmul.mubr.f32.gmra.mxu0 %v453
      %v554 = vpop.f32.mrf.mxu0
      %v555 = vadd.f32 %v440, %v554
      %v556 = vpop.f32.mrf.mxu0
      %557 = vmatprep.mubr.f32.mxu0 0.0
      %558 = vmatmul.mubr.f32.gmra.mxu0 %v456
      %v559 = vpop.f32.mrf.mxu0
      %v560 = vadd.f32 %v440, %v559
      %v561 = vpop.f32.mrf.mxu0
      %562 = vmatprep.mubr.f32.mxu0 0.0
      %563 = vmatmul.mubr.f32.gmra.mxu0 %v459
      %v564 = vpop.f32.mrf.mxu0
      %v565 = vadd.f32 %v440, %v564
      %v566 = vpop.f32.mrf.mxu0
      %567 = vmatprep.mubr.f32.mxu0 0.0
      %568 = vmatmul.mubr.f32.gmra.mxu0 %v462
      %v569 = vpop.f32.mrf.mxu0
      %v570 = vadd.f32 %v440, %v569
      %v571 = vpop.f32.mrf.mxu0
      %572 = vmatprep.mubr.f32.mxu0 0.0
      %573 = vmatmul.mubr.f32.gmra.mxu0 %v465
      %v574 = vpop.f32.mrf.mxu0
      %v575 = vadd.f32 %v440, %v574
      %v576 = vpop.f32.mrf.mxu0
      %577 = vmatprep.mubr.f32.mxu0 0.0
      %578 = vmatmul.mubr.f32.gmra.mxu0 %v468
      %v579 = vpop.f32.mrf.mxu0
      %v580 = vadd.f32 %v440, %v579
      %v581 = vpop.f32.mrf.mxu0
      %582 = vmatprep.mubr.f32.mxu0 0.0
      %583 = vmatmul.mubr.f32.gmra.mxu0 %v471
      %v584 = vpop.f32.mrf.mxu0
      %v585 = vadd.f32 %v440, %v584
      %v586 = vpop.f32.mrf.mxu0
      %587 = vdwg.mxu0
      %v588 = vld [vmem:[%s401] sm:$0xff]
      %v589 = vld [vmem:[%s401 + $0x8] sm:$0xff]
      %v590 = vld [vmem:[%s401 + $0x10] sm:$0xff]
      %v591 = vld [vmem:[%s401 + $0x18] sm:$0xff]
      %v592 = vld [vmem:[%s386] sm:$0xff]
      %v593 = vld [vmem:[%s386 + $0x8] sm:$0x3]
      %v594 = vlaneseq
      %v595 = vand.u32 %v594, 127
      %vm596 = vcmp.lt.s32.totalorder %v595, 0
      %v597 = vsub.s32 0, %v595
      %v598 = vsel %vm596, %v597, %v595
      %v599 = vshrl.u32 %v598, 5
      %v600 = vand.u32 %v598, 31
      %v601 = vsub.s32 0, %v600
      %v602 = vsel %vm596, %v601, %v600
      %vm603 = vcmp.ne.s32.totalorder %v602, 0
      %vm604 = vcmp.lt.s32.totalorder %v602, 0
      %vm605 = vmand %vm604, %vm603
      %v606 = vadd.s32 %v602, 32
      %v607 = vsel %vm605, %v606, %v602
      %vm608 = vcmp.lt.s32.totalorder %v607, 16
      %vm609 = vcmp.lt.s32.totalorder %v595, 16
      %v610 = vld [vmem:[%s407] sm:$0x1]
      %v612 = vlaneseq
      %v613 = vshrl.u32 %v612, 7
      %v614 = vsub.s32 0, %v613
      %v615 = vrot.slane %v610, %v614
      %v617 = vld [vmem:[%s410] sm:$0x1]
      %v619 = vlaneseq
      %v620 = vshrl.u32 %v619, 7
      %v621 = vsub.s32 0, %v620
      %v622 = vrot.slane %v617, %v621
      %v624 = vsel %vm608, 1, 0
      %vm625 = vcmp.eq.s32.totalorder %v624, 1
      %vm628 = vcmask 1041408
      %v629 = vrot.slane %v580, 6
      %v630 = vrot.slane %v585, 6
      %v631 = vsel %vm628, %v629, %v630
      %v634 = vsel %vm625, %v540, %v631
      %v635 = vsel %vm625, %v545, %v630
      %v636 = vsel %vm442, %v615, 0
      %638 = vmatprep.subr.mxu0 0.0
      %639 = vmatpush1.msra.mxu0 0.0
      %640 = vmatprep.subr.mxu0 0.0
      %641 = vmatpush1.msra.mxu0 0.0
      %642 = vmatprep.subr.mxu0 0.0
      %643 = vmatpush1.msra.mxu0 0.0
      %644 = vmatprep.subr.mxu0 0.0
      %645 = vmatpush1.msra.mxu0 0.0
      %646 = vmatprep.subr.mxu0 0.0
      %647 = vmatpush1.msra.mxu0 0.0
      %648 = vmatprep.subr.mxu0 0.0
      %649 = vmatpush1.msra.mxu0 0.0
      %650 = vmatprep.subr.mxu0 0.0
      %651 = vmatpush1.msra.mxu0 0.0
      %652 = vmatprep.subr.mxu0 0.0
      %653 = vmatpush1.msra.mxu0 0.0
      %654 = vmatprep.subr.mxu0 0.0
      %655 = vmatpush1.msra.mxu0 0.0
      %656 = vmatprep.subr.mxu0 0.0
      %657 = vmatpush1.msra.mxu0 0.0
      %658 = vmatprep.subr.mxu0 0.0
      %659 = vmatpush1.msra.mxu0 0.0
      %660 = vmatprep.subr.mxu0 0.0
      %661 = vmatpush1.msra.mxu0 0.0
      %662 = vmatprep.subr.mxu0 0.0
      %663 = vmatpush1.msra.mxu0 %v591
      %664 = vmatprep.subr.mxu0 0.0
      %665 = vmatpush1.msra.mxu0 %v590
      %666 = vmatprep.subr.mxu0 0.0
      %667 = vmatpush1.msra.mxu0 %v589
      %668 = vmatprep.subr.mxu0 0.0
      %669 = vmatpush1.msra.mxu0 %v588
      %670 = vmatprep.subr.mxu0 0.0
      %671 = vmatpush2.msra.mxu0 0.0
      %672 = vmatprep.subr.mxu0 0.0
      %673 = vmatpush2.msra.mxu0 0.0
      %674 = vmatprep.subr.mxu0 0.0
      %675 = vmatpush2.msra.mxu0 0.0
      %676 = vmatprep.subr.mxu0 0.0
      %677 = vmatpush2.msra.mxu0 0.0
      %678 = vmatprep.subr.mxu0 0.0
      %679 = vmatpush2.msra.mxu0 0.0
      %680 = vmatprep.subr.mxu0 0.0
      %681 = vmatpush2.msra.mxu0 0.0
      %682 = vmatprep.subr.mxu0 0.0
      %683 = vmatpush2.msra.mxu0 0.0
      %684 = vmatprep.subr.mxu0 0.0
      %685 = vmatpush2.msra.mxu0 0.0
      %686 = vmatprep.subr.mxu0 0.0
      %687 = vmatpush2.msra.mxu0 0.0
      %688 = vmatprep.subr.mxu0 0.0
      %689 = vmatpush2.msra.mxu0 0.0
      %690 = vmatprep.subr.mxu0 0.0
      %691 = vmatpush2.msra.mxu0 0.0
      %692 = vmatprep.subr.mxu0 0.0
      %693 = vmatpush2.msra.mxu0 0.0
      %694 = vmatprep.subr.mxu0 0.0
      %695 = vmatpush2.msra.mxu0 0.0
      %696 = vmatprep.subr.mxu0 0.0
      %697 = vmatpush2.msra.mxu0 0.0
      %698 = vmatprep.subr.mxu0 0.0
      %699 = vmatpush2.msra.mxu0 0.0
      %700 = vmatprep.subr.mxu0 0.0
      %701 = vmatpush2.msra.mxu0 0.0
      %702 = vmatprep.mubr.f32.mxu0 0.0
      %703 = vmatmul.mubr.f32.gmra.mxu0 %v636
      %v704 = vpop.f32.mrf.mxu0
      %v705 = vadd.f32 0.0, %v704
      %v706 = vpop.f32.mrf.mxu0
      %707 = vmatprep.mubr.f32.mxu0 0.0
      %708 = vmatmul.mubr.f32.gmra.mxu0 %v636
      %v709 = vpop.f32.mrf.mxu0
      %v710 = vadd.f32 0.0, %v709
      %v711 = vpop.f32.mrf.mxu0
      %712 = vdwg.mxu0
      %v713 = vadd.f32 %v634, %v705
      %v714 = vadd.f32 %v635, %v710
      %v715 = vxor.u32 %v713, 2147483648
      %v716 = vxor.u32 %v714, 2147483648
      %v717 = vmul.f32 %v715, 1.442695
      %v718 = vpow.pop %v717
      %v719 = vmul.f32 %v716, 1.442695
      %v720 = vpow.pop %v719
      %v721 = vadd.f32 %v718, 1.0
      %v722 = vadd.f32 %v720, 1.0
      %v723 = vrcp.pop %v721
      %v724 = vmul.f32 1.0, %v723
      %v725 = vrcp.pop %v722
      %v726 = vmul.f32 1.0, %v725
      %v727 = vtanh.pop %v713
      %v728 = vtanh.pop %v714
      %729 = vrot.lane.b32.xlu0 %v622, 32
      %v730 = vpop.permute.xlu0 %729
      %v732 = vmul.f32 %v724, %v730
      %v733 = vmul.f32 %v726, %v730
      %736 = vrot.lane.b32.xlu0 %v727, 64
      %v737 = vpop.permute.xlu0 %736
      %738 = vrot.lane.b32.xlu0 %v728, 64
      %v739 = vpop.permute.xlu0 %738
      %v742 = vmul.f32 %v724, %v737
      %v743 = vmul.f32 %v726, %v739
      %746 = vrot.lane.b32.xlu0 %v742, 32
      %v747 = vpop.permute.xlu0 %746
      %748 = vrot.lane.b32.xlu0 %v743, 32
      %v749 = vpop.permute.xlu0 %748
      %v752 = vadd.f32 %v732, %v747
      %v753 = vadd.f32 %v733, %v749
      %v754 = vtanh.pop %v752
      %v755 = vtanh.pop %v753
      %758 = vrot.lane.b32.xlu0 %v754, 64
      %v759 = vpop.permute.xlu0 %758
      %760 = vrot.lane.b32.xlu0 %v755, 64
      %v761 = vpop.permute.xlu0 %760
      %v764 = vmul.f32 %v724, %v759
      %v765 = vmul.f32 %v726, %v761
      %vm766 = vcmp.gt.s32.totalorder %v592, 0
      %vm767 = vcmp.gt.s32.totalorder %v593, 0
      %vm768 = vcmp.gt.s32.totalorder %v592, 7
      %vm769 = vcmp.gt.s32.totalorder %v593, 7
      %v770 = vsel %vm609, 0, 7
      %771 = vset.pattern.permute.xlu0 0
      %772 = vperm.xlu0 %771, %v592
      %v773 = vpop.permute.xlu0 %772
      %774 = vset.pattern.permute.xlu0 0
      %775 = vperm.xlu0 %774, %v593
      %v776 = vpop.permute.xlu0 %775
      %vm777 = vcmp.lt.s32.totalorder %v770, %v773
      %vm778 = vcmp.lt.s32.totalorder %v770, %v776
      %781 = vrot.lane.b32.xlu0 %v764, 32
      %v782 = vpop.permute.xlu0 %781
      %783 = vrot.lane.b32.xlu0 %v765, 32
      %v784 = vpop.permute.xlu0 %783
      %v787 = vsel %vm777, %v782, %v615
      %v788 = vsel %vm778, %v784, %v615
      %791 = vrot.lane.b32.xlu0 %v752, 96
      %v792 = vpop.permute.xlu0 %791
      %793 = vrot.lane.b32.xlu0 %v753, 96
      %v794 = vpop.permute.xlu0 %793
      %v797 = vsel %vm777, %v792, %v622
      %v798 = vsel %vm778, %v794, %v622
      %v799 = vsel %vm766, 1, 0
      %v800 = vsel %vm767, 1, 0
      %801 = vset.pattern.permute.xlu0 0
      %802 = vperm.xlu0 %801, %v799
      %v803 = vpop.permute.xlu0 %802
      %804 = vset.pattern.permute.xlu0 0
      %805 = vperm.xlu0 %804, %v800
      %v806 = vpop.permute.xlu0 %805
      %vm807 = vcmp.eq.s32.totalorder %v803, 1
      %vm808 = vcmp.eq.s32.totalorder %v806, 1
      %v809 = vsel %vm807, %v764, 0.0
      %v810 = vsel %vm808, %v765, 0.0
      %813 = vrot.lane.b32.xlu0 %v809, 32
      %v814 = vpop.permute.xlu0 %813
      %815 = vrot.lane.b32.xlu0 %v810, 32
      %v816 = vpop.permute.xlu0 %815
      %vm819 = vcmask 130048
      %820 = vst.msk [vmem:[%s415] sm:$0xff] %vm819, %v814
      %vm821 = vcmask 123904
      %822 = vst.msk [vmem:[%s415 + $0x8] sm:$0x3] %vm821, %v816
      %v823 = vsel %vm768, 1, 0
      %v824 = vsel %vm769, 1, 0
      %825 = vset.pattern.permute.xlu0 0
      %826 = vperm.xlu0 %825, %v823
      %v827 = vpop.permute.xlu0 %826
      %828 = vset.pattern.permute.xlu0 0
      %829 = vperm.xlu0 %828, %v824
      %v830 = vpop.permute.xlu0 %829
      %vm831 = vcmp.eq.s32.totalorder %v827, 1
      %vm832 = vcmp.eq.s32.totalorder %v830, 1
      %v833 = vsel %vm831, %v764, 0.0
      %v834 = vsel %vm832, %v765, 0.0
      %837 = vrot.lane.b32.xlu0 %v833, 16
      %v838 = vpop.permute.xlu0 %837
      %839 = vrot.lane.b32.xlu0 %v834, 16
      %v840 = vpop.permute.xlu0 %839
      %s843 = scalar_lea.vmem %s420, 112
      %844 = vst.msk [vmem:[%s843] sm:$0xff] %vm819, %v838
      %845 = vst.msk [vmem:[%s843 + $0x8] sm:$0x3] %vm821, %v840
      %vm847 = vcmask 1045504
      %v848 = vrot.slane %v575, 2
      %v849 = vrot.slane %v580, 2
      %v850 = vsel %vm847, %v848, %v849
      %v853 = vsel %vm625, %v545, %v850
      %v854 = vsel %vm625, %v550, %v849
      %v856 = vsel %vm442, %v787, 0
      %v859 = vsel %vm442, %v788, 0
      %861 = vmatprep.subr.mxu0 0.0
      %862 = vmatpush1.msra.mxu0 0.0
      %863 = vmatprep.subr.mxu0 0.0
      %864 = vmatpush1.msra.mxu0 0.0
      %865 = vmatprep.subr.mxu0 0.0
      %866 = vmatpush1.msra.mxu0 0.0
      %867 = vmatprep.subr.mxu0 0.0
      %868 = vmatpush1.msra.mxu0 0.0
      %869 = vmatprep.subr.mxu0 0.0
      %870 = vmatpush1.msra.mxu0 0.0
      %871 = vmatprep.subr.mxu0 0.0
      %872 = vmatpush1.msra.mxu0 0.0
      %873 = vmatprep.subr.mxu0 0.0
      %874 = vmatpush1.msra.mxu0 0.0
      %875 = vmatprep.subr.mxu0 0.0
      %876 = vmatpush1.msra.mxu0 0.0
      %877 = vmatprep.subr.mxu0 0.0
      %878 = vmatpush1.msra.mxu0 0.0
      %879 = vmatprep.subr.mxu0 0.0
      %880 = vmatpush1.msra.mxu0 0.0
      %881 = vmatprep.subr.mxu0 0.0
      %882 = vmatpush1.msra.mxu0 0.0
      %883 = vmatprep.subr.mxu0 0.0
      %884 = vmatpush1.msra.mxu0 0.0
      %885 = vmatprep.subr.mxu0 0.0
      %886 = vmatpush1.msra.mxu0 %v591
      %887 = vmatprep.subr.mxu0 0.0
      %888 = vmatpush1.msra.mxu0 %v590
      %889 = vmatprep.subr.mxu0 0.0
      %890 = vmatpush1.msra.mxu0 %v589
      %891 = vmatprep.subr.mxu0 0.0
      %892 = vmatpush1.msra.mxu0 %v588
      %893 = vmatprep.subr.mxu0 0.0
      %894 = vmatpush2.msra.mxu0 0.0
      %895 = vmatprep.subr.mxu0 0.0
      %896 = vmatpush2.msra.mxu0 0.0
      %897 = vmatprep.subr.mxu0 0.0
      %898 = vmatpush2.msra.mxu0 0.0
      %899 = vmatprep.subr.mxu0 0.0
      %900 = vmatpush2.msra.mxu0 0.0
      %901 = vmatprep.subr.mxu0 0.0
      %902 = vmatpush2.msra.mxu0 0.0
      %903 = vmatprep.subr.mxu0 0.0
      %904 = vmatpush2.msra.mxu0 0.0
      %905 = vmatprep.subr.mxu0 0.0
      %906 = vmatpush2.msra.mxu0 0.0
      %907 = vmatprep.subr.mxu0 0.0
      %908 = vmatpush2.msra.mxu0 0.0
      %909 = vmatprep.subr.mxu0 0.0
      %910 = vmatpush2.msra.mxu0 0.0
      %911 = vmatprep.subr.mxu0 0.0
      %912 = vmatpush2.msra.mxu0 0.0
      %913 = vmatprep.subr.mxu0 0.0
      %914 = vmatpush2.msra.mxu0 0.0
      %915 = vmatprep.subr.mxu0 0.0
      %916 = vmatpush2.msra.mxu0 0.0
      %917 = vmatprep.subr.mxu0 0.0
      %918 = vmatpush2.msra.mxu0 0.0
      %919 = vmatprep.subr.mxu0 0.0
      %920 = vmatpush2.msra.mxu0 0.0
      %921 = vmatprep.subr.mxu0 0.0
      %922 = vmatpush2.msra.mxu0 0.0
      %923 = vmatprep.subr.mxu0 0.0
      %924 = vmatpush2.msra.mxu0 0.0
      %925 = vmatprep.mubr.f32.mxu0 0.0
      %926 = vmatmul.mubr.f32.gmra.mxu0 %v856
      %v927 = vpop.f32.mrf.mxu0
      %v928 = vadd.f32 0.0, %v927
      %v929 = vpop.f32.mrf.mxu0
      %930 = vmatprep.mubr.f32.mxu0 0.0
      %931 = vmatmul.mubr.f32.gmra.mxu0 %v859
      %v932 = vpop.f32.mrf.mxu0
      %v933 = vadd.f32 0.0, %v932
      %v934 = vpop.f32.mrf.mxu0
      %935 = vdwg.mxu0
      %v938 = vrot.slane %v928, 6
      %v939 = vrot.slane %v933, 6
      %v940 = vsel %vm628, %v938, %v939
      %v943 = vadd.f32 %v853, %v938
      %v944 = vadd.f32 %v854, %v940
      %v945 = vxor.u32 %v943, 2147483648
      %v946 = vxor.u32 %v944, 2147483648
      %v947 = vmul.f32 %v945, 1.442695
      %v948 = vpow.pop %v947
      %v949 = vmul.f32 %v946, 1.442695
      %v950 = vpow.pop %v949
      %v951 = vadd.f32 %v948, 1.0
      %v952 = vadd.f32 %v950, 1.0
      %v953 = vrcp.pop %v951
      %v954 = vmul.f32 1.0, %v953
      %v955 = vrcp.pop %v952
      %v956 = vmul.f32 1.0, %v955
      %v957 = vtanh.pop %v943
      %v958 = vtanh.pop %v944
      %v961 = vrot.slane %v797, 6
      %v962 = vrot.slane %v798, 6
      %v963 = vsel %vm628, %v961, %v962
      %964 = vrot.lane.b32.xlu0 %v961, 32
      %v965 = vpop.permute.xlu0 %964
      %966 = vrot.lane.b32.xlu0 %v963, 32
      %v967 = vpop.permute.xlu0 %966
      %v970 = vmul.f32 %v954, %v965
      %v971 = vmul.f32 %v956, %v967
      %974 = vrot.lane.b32.xlu0 %v957, 64
      %v975 = vpop.permute.xlu0 %974
      %976 = vrot.lane.b32.xlu0 %v958, 64
      %v977 = vpop.permute.xlu0 %976
      %v980 = vmul.f32 %v954, %v975
      %v981 = vmul.f32 %v956, %v977
      %984 = vrot.lane.b32.xlu0 %v980, 32
      %v985 = vpop.permute.xlu0 %984
      %986 = vrot.lane.b32.xlu0 %v981, 32
      %v987 = vpop.permute.xlu0 %986
      %v990 = vadd.f32 %v970, %v985
      %v991 = vadd.f32 %v971, %v987
      %v992 = vtanh.pop %v990
      %v993 = vtanh.pop %v991
      %996 = vrot.lane.b32.xlu0 %v992, 64
      %v997 = vpop.permute.xlu0 %996
      %998 = vrot.lane.b32.xlu0 %v993, 64
      %v999 = vpop.permute.xlu0 %998
      %v1002 = vmul.f32 %v954, %v997
      %v1003 = vmul.f32 %v956, %v999
      %vm1004 = vcmp.gt.s32.totalorder %v592, 1
      %vm1005 = vcmp.gt.s32.totalorder %v593, 1
      %vm1006 = vcmp.gt.s32.totalorder %v592, 6
      %vm1007 = vcmp.gt.s32.totalorder %v593, 6
      %v1008 = vsel %vm609, 1, 6
      %vm1009 = vcmp.lt.s32.totalorder %v1008, %v773
      %vm1010 = vcmp.lt.s32.totalorder %v1008, %v776
      %v1013 = vrot.slane %v1002, 2
      %v1014 = vrot.slane %v1003, 2
      %v1015 = vsel %vm847, %v1013, %v1014
      %1016 = vrot.lane.b32.xlu0 %v1015, 32
      %v1017 = vpop.permute.xlu0 %1016
      %1018 = vrot.lane.b32.xlu0 %v1014, 32
      %v1019 = vpop.permute.xlu0 %1018
      %v1022 = vsel %vm1009, %v1017, %v787
      %v1023 = vsel %vm1010, %v1019, %v788
      %v1026 = vrot.slane %v990, 2
      %v1027 = vrot.slane %v991, 2
      %v1028 = vsel %vm847, %v1026, %v1027
      %1029 = vrot.lane.b32.xlu0 %v1028, 96
      %v1030 = vpop.permute.xlu0 %1029
      %1031 = vrot.lane.b32.xlu0 %v1027, 96
      %v1032 = vpop.permute.xlu0 %1031
      %v1035 = vsel %vm1009, %v1030, %v797
      %v1036 = vsel %vm1010, %v1032, %v798
      %v1037 = vsel %vm1004, 1, 0
      %v1038 = vsel %vm1005, 1, 0
      %1039 = vset.pattern.permute.xlu0 0
      %1040 = vperm.xlu0 %1039, %v1037
      %v1041 = vpop.permute.xlu0 %1040
      %1042 = vset.pattern.permute.xlu0 0
      %1043 = vperm.xlu0 %1042, %v1038
      %v1044 = vpop.permute.xlu0 %1043
      %vm1045 = vcmp.eq.s32.totalorder %v1041, 1
      %vm1046 = vcmp.eq.s32.totalorder %v1044, 1
      %v1047 = vsel %vm1045, %v1017, 0.0
      %v1048 = vsel %vm1046, %v1019, 0.0
      %s1049 = scalar_lea.vmem %s415, 16
      %1050 = vst.msk [vmem:[%s1049] sm:$0xff] %vm819, %v1047
      %1051 = vst.msk [vmem:[%s1049 + $0x8] sm:$0x3] %vm821, %v1048
      %v1052 = vsel %vm1006, 1, 0
      %v1053 = vsel %vm1007, 1, 0
      %1054 = vset.pattern.permute.xlu0 0
      %1055 = vperm.xlu0 %1054, %v1052
      %v1056 = vpop.permute.xlu0 %1055
      %1057 = vset.pattern.permute.xlu0 0
      %1058 = vperm.xlu0 %1057, %v1053
      %v1059 = vpop.permute.xlu0 %1058
      %vm1060 = vcmp.eq.s32.totalorder %v1056, 1
      %vm1061 = vcmp.eq.s32.totalorder %v1059, 1
      %1062 = vrot.lane.b32.xlu0 %v1015, 16
      %v1063 = vpop.permute.xlu0 %1062
      %1064 = vrot.lane.b32.xlu0 %v1014, 16
      %v1065 = vpop.permute.xlu0 %1064
      %v1068 = vsel %vm1060, %v1063, 0.0
      %v1069 = vsel %vm1061, %v1065, 0.0
      %s1070 = scalar_lea.vmem %s420, 96
      %1071 = vst.msk [vmem:[%s1070] sm:$0xff] %vm819, %v1068
      %1072 = vst.msk [vmem:[%s1070 + $0x8] sm:$0x3] %vm821, %v1069
      %v1074 = vrot.slane %v570, 6
      %v1075 = vrot.slane %v575, 6
      %v1076 = vsel %vm628, %v1074, %v1075
      %v1079 = vsel %vm625, %v550, %v1074
      %v1080 = vsel %vm625, %v555, %v1076
      %v1082 = vsel %vm442, %v1022, 0
      %v1085 = vsel %vm442, %v1023, 0
      %1087 = vmatprep.subr.mxu0 0.0
      %1088 = vmatpush1.msra.mxu0 0.0
      %1089 = vmatprep.subr.mxu0 0.0
      %1090 = vmatpush1.msra.mxu0 0.0
      %1091 = vmatprep.subr.mxu0 0.0
      %1092 = vmatpush1.msra.mxu0 0.0
      %1093 = vmatprep.subr.mxu0 0.0
      %1094 = vmatpush1.msra.mxu0 0.0
      %1095 = vmatprep.subr.mxu0 0.0
      %1096 = vmatpush1.msra.mxu0 0.0
      %1097 = vmatprep.subr.mxu0 0.0
      %1098 = vmatpush1.msra.mxu0 0.0
      %1099 = vmatprep.subr.mxu0 0.0
      %1100 = vmatpush1.msra.mxu0 0.0
      %1101 = vmatprep.subr.mxu0 0.0
      %1102 = vmatpush1.msra.mxu0 0.0
      %1103 = vmatprep.subr.mxu0 0.0
      %1104 = vmatpush1.msra.mxu0 0.0
      %1105 = vmatprep.subr.mxu0 0.0
      %1106 = vmatpush1.msra.mxu0 0.0
      %1107 = vmatprep.subr.mxu0 0.0
      %1108 = vmatpush1.msra.mxu0 0.0
      %1109 = vmatprep.subr.mxu0 0.0
      %1110 = vmatpush1.msra.mxu0 0.0
      %1111 = vmatprep.subr.mxu0 0.0
      %1112 = vmatpush1.msra.mxu0 %v591
      %1113 = vmatprep.subr.mxu0 0.0
      %1114 = vmatpush1.msra.mxu0 %v590
      %1115 = vmatprep.subr.mxu0 0.0
      %1116 = vmatpush1.msra.mxu0 %v589
      %1117 = vmatprep.subr.mxu0 0.0
      %1118 = vmatpush1.msra.mxu0 %v588
      %1119 = vmatprep.subr.mxu0 0.0
      %1120 = vmatpush2.msra.mxu0 0.0
      %1121 = vmatprep.subr.mxu0 0.0
      %1122 = vmatpush2.msra.mxu0 0.0
      %1123 = vmatprep.subr.mxu0 0.0
      %1124 = vmatpush2.msra.mxu0 0.0
      %1125 = vmatprep.subr.mxu0 0.0
      %1126 = vmatpush2.msra.mxu0 0.0
      %1127 = vmatprep.subr.mxu0 0.0
      %1128 = vmatpush2.msra.mxu0 0.0
      %1129 = vmatprep.subr.mxu0 0.0
      %1130 = vmatpush2.msra.mxu0 0.0
      %1131 = vmatprep.subr.mxu0 0.0
      %1132 = vmatpush2.msra.mxu0 0.0
      %1133 = vmatprep.subr.mxu0 0.0
      %1134 = vmatpush2.msra.mxu0 0.0
      %1135 = vmatprep.subr.mxu0 0.0
      %1136 = vmatpush2.msra.mxu0 0.0
      %1137 = vmatprep.subr.mxu0 0.0
      %1138 = vmatpush2.msra.mxu0 0.0
      %1139 = vmatprep.subr.mxu0 0.0
      %1140 = vmatpush2.msra.mxu0 0.0
      %1141 = vmatprep.subr.mxu0 0.0
      %1142 = vmatpush2.msra.mxu0 0.0
      %1143 = vmatprep.subr.mxu0 0.0
      %1144 = vmatpush2.msra.mxu0 0.0
      %1145 = vmatprep.subr.mxu0 0.0
      %1146 = vmatpush2.msra.mxu0 0.0
      %1147 = vmatprep.subr.mxu0 0.0
      %1148 = vmatpush2.msra.mxu0 0.0
      %1149 = vmatprep.subr.mxu0 0.0
      %1150 = vmatpush2.msra.mxu0 0.0
      %1151 = vmatprep.mubr.f32.mxu0 0.0
      %1152 = vmatmul.mubr.f32.gmra.mxu0 %v1082
      %v1153 = vpop.f32.mrf.mxu0
      %v1154 = vadd.f32 0.0, %v1153
      %v1155 = vpop.f32.mrf.mxu0
      %1156 = vmatprep.mubr.f32.mxu0 0.0
      %1157 = vmatmul.mubr.f32.gmra.mxu0 %v1085
      %v1158 = vpop.f32.mrf.mxu0
      %v1159 = vadd.f32 0.0, %v1158
      %v1160 = vpop.f32.mrf.mxu0
      %1161 = vdwg.mxu0
      %vm1164 = vcmask 1043456
      %v1165 = vrot.slane %v1154, 4
      %v1166 = vrot.slane %v1159, 4
      %v1167 = vsel %vm1164, %v1165, %v1166
      %v1170 = vadd.f32 %v1079, %v1165
      %v1171 = vadd.f32 %v1080, %v1167
      %v1172 = vxor.u32 %v1170, 2147483648
      %v1173 = vxor.u32 %v1171, 2147483648
      %v1174 = vmul.f32 %v1172, 1.442695
      %v1175 = vpow.pop %v1174
      %v1176 = vmul.f32 %v1173, 1.442695
      %v1177 = vpow.pop %v1176
      %v1178 = vadd.f32 %v1175, 1.0
      %v1179 = vadd.f32 %v1177, 1.0
      %v1180 = vrcp.pop %v1178
      %v1181 = vmul.f32 1.0, %v1180
      %v1182 = vrcp.pop %v1179
      %v1183 = vmul.f32 1.0, %v1182
      %v1184 = vtanh.pop %v1170
      %v1185 = vtanh.pop %v1171
      %v1188 = vrot.slane %v1035, 4
      %v1189 = vrot.slane %v1036, 4
      %v1190 = vsel %vm1164, %v1188, %v1189
      %1191 = vrot.lane.b32.xlu0 %v1188, 32
      %v1192 = vpop.permute.xlu0 %1191
      %1193 = vrot.lane.b32.xlu0 %v1190, 32
      %v1194 = vpop.permute.xlu0 %1193
      %v1197 = vmul.f32 %v1181, %v1192
      %v1198 = vmul.f32 %v1183, %v1194
      %1201 = vrot.lane.b32.xlu0 %v1184, 64
      %v1202 = vpop.permute.xlu0 %1201
      %1203 = vrot.lane.b32.xlu0 %v1185, 64
      %v1204 = vpop.permute.xlu0 %1203
      %v1207 = vmul.f32 %v1181, %v1202
      %v1208 = vmul.f32 %v1183, %v1204
      %1211 = vrot.lane.b32.xlu0 %v1207, 32
      %v1212 = vpop.permute.xlu0 %1211
      %1213 = vrot.lane.b32.xlu0 %v1208, 32
      %v1214 = vpop.permute.xlu0 %1213
      %v1217 = vadd.f32 %v1197, %v1212
      %v1218 = vadd.f32 %v1198, %v1214
      %v1219 = vtanh.pop %v1217
      %v1220 = vtanh.pop %v1218
      %1223 = vrot.lane.b32.xlu0 %v1219, 64
      %v1224 = vpop.permute.xlu0 %1223
      %1225 = vrot.lane.b32.xlu0 %v1220, 64
      %v1226 = vpop.permute.xlu0 %1225
      %v1229 = vmul.f32 %v1181, %v1224
      %v1230 = vmul.f32 %v1183, %v1226
      %vm1231 = vcmp.gt.s32.totalorder %v592, 2
      %vm1232 = vcmp.gt.s32.totalorder %v593, 2
      %vm1233 = vcmp.gt.s32.totalorder %v592, 5
      %vm1234 = vcmp.gt.s32.totalorder %v593, 5
      %v1235 = vsel %vm609, 2, 5
      %vm1236 = vcmp.lt.s32.totalorder %v1235, %v773
      %vm1237 = vcmp.lt.s32.totalorder %v1235, %v776
      %v1240 = vrot.slane %v1229, 4
      %v1241 = vrot.slane %v1230, 4
      %v1242 = vsel %vm1164, %v1240, %v1241
      %1243 = vrot.lane.b32.xlu0 %v1242, 32
      %v1244 = vpop.permute.xlu0 %1243
      %1245 = vrot.lane.b32.xlu0 %v1241, 32
      %v1246 = vpop.permute.xlu0 %1245
      %v1249 = vsel %vm1236, %v1244, %v1022
      %v1250 = vsel %vm1237, %v1246, %v1023
      %v1253 = vrot.slane %v1217, 4
      %v1254 = vrot.slane %v1218, 4
      %v1255 = vsel %vm1164, %v1253, %v1254
      %1256 = vrot.lane.b32.xlu0 %v1255, 96
      %v1257 = vpop.permute.xlu0 %1256
      %1258 = vrot.lane.b32.xlu0 %v1254, 96
      %v1259 = vpop.permute.xlu0 %1258
      %v1262 = vsel %vm1236, %v1257, %v1035
      %v1263 = vsel %vm1237, %v1259, %v1036
      %v1264 = vsel %vm1231, 1, 0
      %v1265 = vsel %vm1232, 1, 0
      %1266 = vset.pattern.permute.xlu0 0
      %1267 = vperm.xlu0 %1266, %v1264
      %v1268 = vpop.permute.xlu0 %1267
      %1269 = vset.pattern.permute.xlu0 0
      %1270 = vperm.xlu0 %1269, %v1265
      %v1271 = vpop.permute.xlu0 %1270
      %vm1272 = vcmp.eq.s32.totalorder %v1268, 1
      %vm1273 = vcmp.eq.s32.totalorder %v1271, 1
      %v1274 = vsel %vm1272, %v1244, 0.0
      %v1275 = vsel %vm1273, %v1246, 0.0
      %s1276 = scalar_lea.vmem %s415, 32
      %1277 = vst.msk [vmem:[%s1276] sm:$0xff] %vm819, %v1274
      %1278 = vst.msk [vmem:[%s1276 + $0x8] sm:$0x3] %vm821, %v1275
      %v1279 = vsel %vm1233, 1, 0
      %v1280 = vsel %vm1234, 1, 0
      %1281 = vset.pattern.permute.xlu0 0
      %1282 = vperm.xlu0 %1281, %v1279
      %v1283 = vpop.permute.xlu0 %1282
      %1284 = vset.pattern.permute.xlu0 0
      %1285 = vperm.xlu0 %1284, %v1280
      %v1286 = vpop.permute.xlu0 %1285
      %vm1287 = vcmp.eq.s32.totalorder %v1283, 1
      %vm1288 = vcmp.eq.s32.totalorder %v1286, 1
      %1289 = vrot.lane.b32.xlu0 %v1242, 16
      %v1290 = vpop.permute.xlu0 %1289
      %1291 = vrot.lane.b32.xlu0 %v1241, 16
      %v1292 = vpop.permute.xlu0 %1291
      %v1295 = vsel %vm1287, %v1290, 0.0
      %v1296 = vsel %vm1288, %v1292, 0.0
      %s1297 = scalar_lea.vmem %s420, 80
      %1298 = vst.msk [vmem:[%s1297] sm:$0xff] %vm819, %v1295
      %1299 = vst.msk [vmem:[%s1297 + $0x8] sm:$0x3] %vm821, %v1296
      %v1301 = vrot.slane %v565, 2
      %v1302 = vrot.slane %v570, 2
      %v1303 = vsel %vm847, %v1301, %v1302
      %v1306 = vsel %vm625, %v555, %v1301
      %v1307 = vsel %vm625, %v560, %v1303
      %v1309 = vsel %vm442, %v1249, 0
      %v1312 = vsel %vm442, %v1250, 0
      %1314 = vmatprep.subr.mxu0 0.0
      %1315 = vmatpush1.msra.mxu0 0.0
      %1316 = vmatprep.subr.mxu0 0.0
      %1317 = vmatpush1.msra.mxu0 0.0
      %1318 = vmatprep.subr.mxu0 0.0
      %1319 = vmatpush1.msra.mxu0 0.0
      %1320 = vmatprep.subr.mxu0 0.0
      %1321 = vmatpush1.msra.mxu0 0.0
      %1322 = vmatprep.subr.mxu0 0.0
      %1323 = vmatpush1.msra.mxu0 0.0
      %1324 = vmatprep.subr.mxu0 0.0
      %1325 = vmatpush1.msra.mxu0 0.0
      %1326 = vmatprep.subr.mxu0 0.0
      %1327 = vmatpush1.msra.mxu0 0.0
      %1328 = vmatprep.subr.mxu0 0.0
      %1329 = vmatpush1.msra.mxu0 0.0
      %1330 = vmatprep.subr.mxu0 0.0
      %1331 = vmatpush1.msra.mxu0 0.0
      %1332 = vmatprep.subr.mxu0 0.0
      %1333 = vmatpush1.msra.mxu0 0.0
      %1334 = vmatprep.subr.mxu0 0.0
      %1335 = vmatpush1.msra.mxu0 0.0
      %1336 = vmatprep.subr.mxu0 0.0
      %1337 = vmatpush1.msra.mxu0 0.0
      %1338 = vmatprep.subr.mxu0 0.0
      %1339 = vmatpush1.msra.mxu0 %v591
      %1340 = vmatprep.subr.mxu0 0.0
      %1341 = vmatpush1.msra.mxu0 %v590
      %1342 = vmatprep.subr.mxu0 0.0
      %1343 = vmatpush1.msra.mxu0 %v589
      %1344 = vmatprep.subr.mxu0 0.0
      %1345 = vmatpush1.msra.mxu0 %v588
      %1346 = vmatprep.subr.mxu0 0.0
      %1347 = vmatpush2.msra.mxu0 0.0
      %1348 = vmatprep.subr.mxu0 0.0
      %1349 = vmatpush2.msra.mxu0 0.0
      %1350 = vmatprep.subr.mxu0 0.0
      %1351 = vmatpush2.msra.mxu0 0.0
      %1352 = vmatprep.subr.mxu0 0.0
      %1353 = vmatpush2.msra.mxu0 0.0
      %1354 = vmatprep.subr.mxu0 0.0
      %1355 = vmatpush2.msra.mxu0 0.0
      %1356 = vmatprep.subr.mxu0 0.0
      %1357 = vmatpush2.msra.mxu0 0.0
      %1358 = vmatprep.subr.mxu0 0.0
      %1359 = vmatpush2.msra.mxu0 0.0
      %1360 = vmatprep.subr.mxu0 0.0
      %1361 = vmatpush2.msra.mxu0 0.0
      %1362 = vmatprep.subr.mxu0 0.0
      %1363 = vmatpush2.msra.mxu0 0.0
      %1364 = vmatprep.subr.mxu0 0.0
      %1365 = vmatpush2.msra.mxu0 0.0
      %1366 = vmatprep.subr.mxu0 0.0
      %1367 = vmatpush2.msra.mxu0 0.0
      %1368 = vmatprep.subr.mxu0 0.0
      %1369 = vmatpush2.msra.mxu0 0.0
      %1370 = vmatprep.subr.mxu0 0.0
      %1371 = vmatpush2.msra.mxu0 0.0
      %1372 = vmatprep.subr.mxu0 0.0
      %1373 = vmatpush2.msra.mxu0 0.0
      %1374 = vmatprep.subr.mxu0 0.0
      %1375 = vmatpush2.msra.mxu0 0.0
      %1376 = vmatprep.subr.mxu0 0.0
      %1377 = vmatpush2.msra.mxu0 0.0
      %1378 = vmatprep.mubr.f32.mxu0 0.0
      %1379 = vmatmul.mubr.f32.gmra.mxu0 %v1309
      %v1380 = vpop.f32.mrf.mxu0
      %v1381 = vadd.f32 0.0, %v1380
      %v1382 = vpop.f32.mrf.mxu0
      %1383 = vmatprep.mubr.f32.mxu0 0.0
      %1384 = vmatmul.mubr.f32.gmra.mxu0 %v1312
      %v1385 = vpop.f32.mrf.mxu0
      %v1386 = vadd.f32 0.0, %v1385
      %v1387 = vpop.f32.mrf.mxu0
      %1388 = vdwg.mxu0
      %v1391 = vrot.slane %v1381, 2
      %v1392 = vrot.slane %v1386, 2
      %v1393 = vsel %vm847, %v1391, %v1392
      %v1396 = vadd.f32 %v1306, %v1391
      %v1397 = vadd.f32 %v1307, %v1393
      %v1398 = vxor.u32 %v1396, 2147483648
      %v1399 = vxor.u32 %v1397, 2147483648
      %v1400 = vmul.f32 %v1398, 1.442695
      %v1401 = vpow.pop %v1400
      %v1402 = vmul.f32 %v1399, 1.442695
      %v1403 = vpow.pop %v1402
      %v1404 = vadd.f32 %v1401, 1.0
      %v1405 = vadd.f32 %v1403, 1.0
      %v1406 = vrcp.pop %v1404
      %v1407 = vmul.f32 1.0, %v1406
      %v1408 = vrcp.pop %v1405
      %v1409 = vmul.f32 1.0, %v1408
      %v1410 = vtanh.pop %v1396
      %v1411 = vtanh.pop %v1397
      %v1414 = vrot.slane %v1262, 2
      %v1415 = vrot.slane %v1263, 2
      %v1416 = vsel %vm847, %v1414, %v1415
      %1417 = vrot.lane.b32.xlu0 %v1414, 32
      %v1418 = vpop.permute.xlu0 %1417
      %1419 = vrot.lane.b32.xlu0 %v1416, 32
      %v1420 = vpop.permute.xlu0 %1419
      %v1423 = vmul.f32 %v1407, %v1418
      %v1424 = vmul.f32 %v1409, %v1420
      %1427 = vrot.lane.b32.xlu0 %v1410, 64
      %v1428 = vpop.permute.xlu0 %1427
      %1429 = vrot.lane.b32.xlu0 %v1411, 64
      %v1430 = vpop.permute.xlu0 %1429
      %v1433 = vmul.f32 %v1407, %v1428
      %v1434 = vmul.f32 %v1409, %v1430
      %1437 = vrot.lane.b32.xlu0 %v1433, 32
      %v1438 = vpop.permute.xlu0 %1437
      %1439 = vrot.lane.b32.xlu0 %v1434, 32
      %v1440 = vpop.permute.xlu0 %1439
      %v1443 = vadd.f32 %v1423, %v1438
      %v1444 = vadd.f32 %v1424, %v1440
      %v1445 = vtanh.pop %v1443
      %v1446 = vtanh.pop %v1444
      %1449 = vrot.lane.b32.xlu0 %v1445, 64
      %v1450 = vpop.permute.xlu0 %1449
      %1451 = vrot.lane.b32.xlu0 %v1446, 64
      %v1452 = vpop.permute.xlu0 %1451
      %v1455 = vmul.f32 %v1407, %v1450
      %v1456 = vmul.f32 %v1409, %v1452
      %vm1457 = vcmp.gt.s32.totalorder %v592, 3
      %vm1458 = vcmp.gt.s32.totalorder %v593, 3
      %vm1459 = vcmp.gt.s32.totalorder %v592, 4
      %vm1460 = vcmp.gt.s32.totalorder %v593, 4
      %v1461 = vsel %vm609, 3, 4
      %vm1462 = vcmp.lt.s32.totalorder %v1461, %v773
      %vm1463 = vcmp.lt.s32.totalorder %v1461, %v776
      %v1466 = vrot.slane %v1455, 6
      %v1467 = vrot.slane %v1456, 6
      %v1468 = vsel %vm628, %v1466, %v1467
      %1469 = vrot.lane.b32.xlu0 %v1468, 32
      %v1470 = vpop.permute.xlu0 %1469
      %1471 = vrot.lane.b32.xlu0 %v1467, 32
      %v1472 = vpop.permute.xlu0 %1471
      %v1475 = vsel %vm1462, %v1470, %v1249
      %v1476 = vsel %vm1463, %v1472, %v1250
      %v1479 = vrot.slane %v1443, 6
      %v1480 = vrot.slane %v1444, 6
      %v1481 = vsel %vm628, %v1479, %v1480
      %1482 = vrot.lane.b32.xlu0 %v1481, 96
      %v1483 = vpop.permute.xlu0 %1482
      %1484 = vrot.lane.b32.xlu0 %v1480, 96
      %v1485 = vpop.permute.xlu0 %1484
      %v1488 = vsel %vm1462, %v1483, %v1262
      %v1489 = vsel %vm1463, %v1485, %v1263
      %v1490 = vsel %vm1457, 1, 0
      %v1491 = vsel %vm1458, 1, 0
      %1492 = vset.pattern.permute.xlu0 0
      %1493 = vperm.xlu0 %1492, %v1490
      %v1494 = vpop.permute.xlu0 %1493
      %1495 = vset.pattern.permute.xlu0 0
      %1496 = vperm.xlu0 %1495, %v1491
      %v1497 = vpop.permute.xlu0 %1496
      %vm1498 = vcmp.eq.s32.totalorder %v1494, 1
      %vm1499 = vcmp.eq.s32.totalorder %v1497, 1
      %v1500 = vsel %vm1498, %v1470, 0.0
      %v1501 = vsel %vm1499, %v1472, 0.0
      %s1502 = scalar_lea.vmem %s415, 48
      %1503 = vst.msk [vmem:[%s1502] sm:$0xff] %vm819, %v1500
      %1504 = vst.msk [vmem:[%s1502 + $0x8] sm:$0x3] %vm821, %v1501
      %v1505 = vsel %vm1459, 1, 0
      %v1506 = vsel %vm1460, 1, 0
      %1507 = vset.pattern.permute.xlu0 0
      %1508 = vperm.xlu0 %1507, %v1505
      %v1509 = vpop.permute.xlu0 %1508
      %1510 = vset.pattern.permute.xlu0 0
      %1511 = vperm.xlu0 %1510, %v1506
      %v1512 = vpop.permute.xlu0 %1511
      %vm1513 = vcmp.eq.s32.totalorder %v1509, 1
      %vm1514 = vcmp.eq.s32.totalorder %v1512, 1
      %1515 = vrot.lane.b32.xlu0 %v1468, 16
      %v1516 = vpop.permute.xlu0 %1515
      %1517 = vrot.lane.b32.xlu0 %v1467, 16
      %v1518 = vpop.permute.xlu0 %1517
      %v1521 = vsel %vm1513, %v1516, 0.0
      %v1522 = vsel %vm1514, %v1518, 0.0
      %s1523 = scalar_lea.vmem %s420, 64
      %1524 = vst.msk [vmem:[%s1523] sm:$0xff] %vm819, %v1521
      %1525 = vst.msk [vmem:[%s1523 + $0x8] sm:$0x3] %vm821, %v1522
      %v1528 = vrot.slane %v555, 6
      %v1529 = vrot.slane %v560, 6
      %v1530 = vsel %vm628, %v1528, %v1529
      %v1533 = vsel %vm625, %v565, %v1530
      %v1534 = vsel %vm625, %v570, %v1529
      %v1536 = vsel %vm442, %v1475, 0
      %v1539 = vsel %vm442, %v1476, 0
      %1541 = vmatprep.subr.mxu0 0.0
      %1542 = vmatpush1.msra.mxu0 0.0
      %1543 = vmatprep.subr.mxu0 0.0
      %1544 = vmatpush1.msra.mxu0 0.0
      %1545 = vmatprep.subr.mxu0 0.0
      %1546 = vmatpush1.msra.mxu0 0.0
      %1547 = vmatprep.subr.mxu0 0.0
      %1548 = vmatpush1.msra.mxu0 0.0
      %1549 = vmatprep.subr.mxu0 0.0
      %1550 = vmatpush1.msra.mxu0 0.0
      %1551 = vmatprep.subr.mxu0 0.0
      %1552 = vmatpush1.msra.mxu0 0.0
      %1553 = vmatprep.subr.mxu0 0.0
      %1554 = vmatpush1.msra.mxu0 0.0
      %1555 = vmatprep.subr.mxu0 0.0
      %1556 = vmatpush1.msra.mxu0 0.0
      %1557 = vmatprep.subr.mxu0 0.0
      %1558 = vmatpush1.msra.mxu0 0.0
      %1559 = vmatprep.subr.mxu0 0.0
      %1560 = vmatpush1.msra.mxu0 0.0
      %1561 = vmatprep.subr.mxu0 0.0
      %1562 = vmatpush1.msra.mxu0 0.0
      %1563 = vmatprep.subr.mxu0 0.0
      %1564 = vmatpush1.msra.mxu0 0.0
      %1565 = vmatprep.subr.mxu0 0.0
      %1566 = vmatpush1.msra.mxu0 %v591
      %1567 = vmatprep.subr.mxu0 0.0
      %1568 = vmatpush1.msra.mxu0 %v590
      %1569 = vmatprep.subr.mxu0 0.0
      %1570 = vmatpush1.msra.mxu0 %v589
      %1571 = vmatprep.subr.mxu0 0.0
      %1572 = vmatpush1.msra.mxu0 %v588
      %1573 = vmatprep.subr.mxu0 0.0
      %1574 = vmatpush2.msra.mxu0 0.0
      %1575 = vmatprep.subr.mxu0 0.0
      %1576 = vmatpush2.msra.mxu0 0.0
      %1577 = vmatprep.subr.mxu0 0.0
      %1578 = vmatpush2.msra.mxu0 0.0
      %1579 = vmatprep.subr.mxu0 0.0
      %1580 = vmatpush2.msra.mxu0 0.0
      %1581 = vmatprep.subr.mxu0 0.0
      %1582 = vmatpush2.msra.mxu0 0.0
      %1583 = vmatprep.subr.mxu0 0.0
      %1584 = vmatpush2.msra.mxu0 0.0
      %1585 = vmatprep.subr.mxu0 0.0
      %1586 = vmatpush2.msra.mxu0 0.0
      %1587 = vmatprep.subr.mxu0 0.0
      %1588 = vmatpush2.msra.mxu0 0.0
      %1589 = vmatprep.subr.mxu0 0.0
      %1590 = vmatpush2.msra.mxu0 0.0
      %1591 = vmatprep.subr.mxu0 0.0
      %1592 = vmatpush2.msra.mxu0 0.0
      %1593 = vmatprep.subr.mxu0 0.0
      %1594 = vmatpush2.msra.mxu0 0.0
      %1595 = vmatprep.subr.mxu0 0.0
      %1596 = vmatpush2.msra.mxu0 0.0
      %1597 = vmatprep.subr.mxu0 0.0
      %1598 = vmatpush2.msra.mxu0 0.0
      %1599 = vmatprep.subr.mxu0 0.0
      %1600 = vmatpush2.msra.mxu0 0.0
      %1601 = vmatprep.subr.mxu0 0.0
      %1602 = vmatpush2.msra.mxu0 0.0
      %1603 = vmatprep.subr.mxu0 0.0
      %1604 = vmatpush2.msra.mxu0 0.0
      %1605 = vmatprep.mubr.f32.mxu0 0.0
      %1606 = vmatmul.mubr.f32.gmra.mxu0 %v1536
      %v1607 = vpop.f32.mrf.mxu0
      %v1608 = vadd.f32 0.0, %v1607
      %v1609 = vpop.f32.mrf.mxu0
      %1610 = vmatprep.mubr.f32.mxu0 0.0
      %1611 = vmatmul.mubr.f32.gmra.mxu0 %v1539
      %v1612 = vpop.f32.mrf.mxu0
      %v1613 = vadd.f32 0.0, %v1612
      %v1614 = vpop.f32.mrf.mxu0
      %1615 = vdwg.mxu0
      %v1616 = vadd.f32 %v1533, %v1608
      %v1617 = vadd.f32 %v1534, %v1613
      %v1618 = vxor.u32 %v1616, 2147483648
      %v1619 = vxor.u32 %v1617, 2147483648
      %v1620 = vmul.f32 %v1618, 1.442695
      %v1621 = vpow.pop %v1620
      %v1622 = vmul.f32 %v1619, 1.442695
      %v1623 = vpow.pop %v1622
      %v1624 = vadd.f32 %v1621, 1.0
      %v1625 = vadd.f32 %v1623, 1.0
      %v1626 = vrcp.pop %v1624
      %v1627 = vmul.f32 1.0, %v1626
      %v1628 = vrcp.pop %v1625
      %v1629 = vmul.f32 1.0, %v1628
      %v1630 = vtanh.pop %v1616
      %v1631 = vtanh.pop %v1617
      %1634 = vrot.lane.b32.xlu0 %v1488, 32
      %v1635 = vpop.permute.xlu0 %1634
      %1636 = vrot.lane.b32.xlu0 %v1489, 32
      %v1637 = vpop.permute.xlu0 %1636
      %v1640 = vmul.f32 %v1627, %v1635
      %v1641 = vmul.f32 %v1629, %v1637
      %1644 = vrot.lane.b32.xlu0 %v1630, 64
      %v1645 = vpop.permute.xlu0 %1644
      %1646 = vrot.lane.b32.xlu0 %v1631, 64
      %v1647 = vpop.permute.xlu0 %1646
      %v1650 = vmul.f32 %v1627, %v1645
      %v1651 = vmul.f32 %v1629, %v1647
      %1654 = vrot.lane.b32.xlu0 %v1650, 32
      %v1655 = vpop.permute.xlu0 %1654
      %1656 = vrot.lane.b32.xlu0 %v1651, 32
      %v1657 = vpop.permute.xlu0 %1656
      %v1660 = vadd.f32 %v1640, %v1655
      %v1661 = vadd.f32 %v1641, %v1657
      %v1662 = vtanh.pop %v1660
      %v1663 = vtanh.pop %v1661
      %1666 = vrot.lane.b32.xlu0 %v1662, 64
      %v1667 = vpop.permute.xlu0 %1666
      %1668 = vrot.lane.b32.xlu0 %v1663, 64
      %v1669 = vpop.permute.xlu0 %1668
      %v1672 = vmul.f32 %v1627, %v1667
      %v1673 = vmul.f32 %v1629, %v1669
      %v1674 = vsel %vm609, 4, 3
      %vm1675 = vcmp.lt.s32.totalorder %v1674, %v773
      %vm1676 = vcmp.lt.s32.totalorder %v1674, %v776
      %1679 = vrot.lane.b32.xlu0 %v1672, 32
      %v1680 = vpop.permute.xlu0 %1679
      %1681 = vrot.lane.b32.xlu0 %v1673, 32
      %v1682 = vpop.permute.xlu0 %1681
      %v1685 = vsel %vm1675, %v1680, %v1475
      %v1686 = vsel %vm1676, %v1682, %v1476
      %1689 = vrot.lane.b32.xlu0 %v1660, 96
      %v1690 = vpop.permute.xlu0 %1689
      %1691 = vrot.lane.b32.xlu0 %v1661, 96
      %v1692 = vpop.permute.xlu0 %1691
      %v1695 = vsel %vm1675, %v1690, %v1488
      %v1696 = vsel %vm1676, %v1692, %v1489
      %v1697 = vsel %vm1513, %v1672, 0.0
      %v1698 = vsel %vm1514, %v1673, 0.0
      %1701 = vrot.lane.b32.xlu0 %v1697, 32
      %v1702 = vpop.permute.xlu0 %1701
      %1703 = vrot.lane.b32.xlu0 %v1698, 32
      %v1704 = vpop.permute.xlu0 %1703
      %s1707 = scalar_lea.vmem %s415, 64
      %1708 = vst.msk [vmem:[%s1707] sm:$0xff] %vm819, %v1702
      %1709 = vst.msk [vmem:[%s1707 + $0x8] sm:$0x3] %vm821, %v1704
      %v1710 = vsel %vm1498, %v1672, 0.0
      %v1711 = vsel %vm1499, %v1673, 0.0
      %1714 = vrot.lane.b32.xlu0 %v1710, 16
      %v1715 = vpop.permute.xlu0 %1714
      %1716 = vrot.lane.b32.xlu0 %v1711, 16
      %v1717 = vpop.permute.xlu0 %1716
      %s1720 = scalar_lea.vmem %s420, 48
      %1721 = vst.msk [vmem:[%s1720] sm:$0xff] %vm819, %v1715
      %1722 = vst.msk [vmem:[%s1720 + $0x8] sm:$0x3] %vm821, %v1717
      %v1724 = vrot.slane %v550, 2
      %v1725 = vrot.slane %v555, 2
      %v1726 = vsel %vm847, %v1724, %v1725
      %v1729 = vsel %vm625, %v570, %v1726
      %v1730 = vsel %vm625, %v575, %v1725
      %v1732 = vsel %vm442, %v1685, 0
      %v1735 = vsel %vm442, %v1686, 0
      %1737 = vmatprep.subr.mxu0 0.0
      %1738 = vmatpush1.msra.mxu0 0.0
      %1739 = vmatprep.subr.mxu0 0.0
      %1740 = vmatpush1.msra.mxu0 0.0
      %1741 = vmatprep.subr.mxu0 0.0
      %1742 = vmatpush1.msra.mxu0 0.0
      %1743 = vmatprep.subr.mxu0 0.0
      %1744 = vmatpush1.msra.mxu0 0.0
      %1745 = vmatprep.subr.mxu0 0.0
      %1746 = vmatpush1.msra.mxu0 0.0
      %1747 = vmatprep.subr.mxu0 0.0
      %1748 = vmatpush1.msra.mxu0 0.0
      %1749 = vmatprep.subr.mxu0 0.0
      %1750 = vmatpush1.msra.mxu0 0.0
      %1751 = vmatprep.subr.mxu0 0.0
      %1752 = vmatpush1.msra.mxu0 0.0
      %1753 = vmatprep.subr.mxu0 0.0
      %1754 = vmatpush1.msra.mxu0 0.0
      %1755 = vmatprep.subr.mxu0 0.0
      %1756 = vmatpush1.msra.mxu0 0.0
      %1757 = vmatprep.subr.mxu0 0.0
      %1758 = vmatpush1.msra.mxu0 0.0
      %1759 = vmatprep.subr.mxu0 0.0
      %1760 = vmatpush1.msra.mxu0 0.0
      %1761 = vmatprep.subr.mxu0 0.0
      %1762 = vmatpush1.msra.mxu0 %v591
      %1763 = vmatprep.subr.mxu0 0.0
      %1764 = vmatpush1.msra.mxu0 %v590
      %1765 = vmatprep.subr.mxu0 0.0
      %1766 = vmatpush1.msra.mxu0 %v589
      %1767 = vmatprep.subr.mxu0 0.0
      %1768 = vmatpush1.msra.mxu0 %v588
      %1769 = vmatprep.subr.mxu0 0.0
      %1770 = vmatpush2.msra.mxu0 0.0
      %1771 = vmatprep.subr.mxu0 0.0
      %1772 = vmatpush2.msra.mxu0 0.0
      %1773 = vmatprep.subr.mxu0 0.0
      %1774 = vmatpush2.msra.mxu0 0.0
      %1775 = vmatprep.subr.mxu0 0.0
      %1776 = vmatpush2.msra.mxu0 0.0
      %1777 = vmatprep.subr.mxu0 0.0
      %1778 = vmatpush2.msra.mxu0 0.0
      %1779 = vmatprep.subr.mxu0 0.0
      %1780 = vmatpush2.msra.mxu0 0.0
      %1781 = vmatprep.subr.mxu0 0.0
      %1782 = vmatpush2.msra.mxu0 0.0
      %1783 = vmatprep.subr.mxu0 0.0
      %1784 = vmatpush2.msra.mxu0 0.0
      %1785 = vmatprep.subr.mxu0 0.0
      %1786 = vmatpush2.msra.mxu0 0.0
      %1787 = vmatprep.subr.mxu0 0.0
      %1788 = vmatpush2.msra.mxu0 0.0
      %1789 = vmatprep.subr.mxu0 0.0
      %1790 = vmatpush2.msra.mxu0 0.0
      %1791 = vmatprep.subr.mxu0 0.0
      %1792 = vmatpush2.msra.mxu0 0.0
      %1793 = vmatprep.subr.mxu0 0.0
      %1794 = vmatpush2.msra.mxu0 0.0
      %1795 = vmatprep.subr.mxu0 0.0
      %1796 = vmatpush2.msra.mxu0 0.0
      %1797 = vmatprep.subr.mxu0 0.0
      %1798 = vmatpush2.msra.mxu0 0.0
      %1799 = vmatprep.subr.mxu0 0.0
      %1800 = vmatpush2.msra.mxu0 0.0
      %1801 = vmatprep.mubr.f32.mxu0 0.0
      %1802 = vmatmul.mubr.f32.gmra.mxu0 %v1732
      %v1803 = vpop.f32.mrf.mxu0
      %v1804 = vadd.f32 0.0, %v1803
      %v1805 = vpop.f32.mrf.mxu0
      %1806 = vmatprep.mubr.f32.mxu0 0.0
      %1807 = vmatmul.mubr.f32.gmra.mxu0 %v1735
      %v1808 = vpop.f32.mrf.mxu0
      %v1809 = vadd.f32 0.0, %v1808
      %v1810 = vpop.f32.mrf.mxu0
      %1811 = vdwg.mxu0
      %v1814 = vrot.slane %v1804, 6
      %v1815 = vrot.slane %v1809, 6
      %v1816 = vsel %vm628, %v1814, %v1815
      %v1819 = vadd.f32 %v1729, %v1814
      %v1820 = vadd.f32 %v1730, %v1816
      %v1821 = vxor.u32 %v1819, 2147483648
      %v1822 = vxor.u32 %v1820, 2147483648
      %v1823 = vmul.f32 %v1821, 1.442695
      %v1824 = vpow.pop %v1823
      %v1825 = vmul.f32 %v1822, 1.442695
      %v1826 = vpow.pop %v1825
      %v1827 = vadd.f32 %v1824, 1.0
      %v1828 = vadd.f32 %v1826, 1.0
      %v1829 = vrcp.pop %v1827
      %v1830 = vmul.f32 1.0, %v1829
      %v1831 = vrcp.pop %v1828
      %v1832 = vmul.f32 1.0, %v1831
      %v1833 = vtanh.pop %v1819
      %v1834 = vtanh.pop %v1820
      %v1837 = vrot.slane %v1695, 6
      %v1838 = vrot.slane %v1696, 6
      %v1839 = vsel %vm628, %v1837, %v1838
      %1840 = vrot.lane.b32.xlu0 %v1837, 32
      %v1841 = vpop.permute.xlu0 %1840
      %1842 = vrot.lane.b32.xlu0 %v1839, 32
      %v1843 = vpop.permute.xlu0 %1842
      %v1846 = vmul.f32 %v1830, %v1841
      %v1847 = vmul.f32 %v1832, %v1843
      %1850 = vrot.lane.b32.xlu0 %v1833, 64
      %v1851 = vpop.permute.xlu0 %1850
      %1852 = vrot.lane.b32.xlu0 %v1834, 64
      %v1853 = vpop.permute.xlu0 %1852
      %v1856 = vmul.f32 %v1830, %v1851
      %v1857 = vmul.f32 %v1832, %v1853
      %1860 = vrot.lane.b32.xlu0 %v1856, 32
      %v1861 = vpop.permute.xlu0 %1860
      %1862 = vrot.lane.b32.xlu0 %v1857, 32
      %v1863 = vpop.permute.xlu0 %1862
      %v1866 = vadd.f32 %v1846, %v1861
      %v1867 = vadd.f32 %v1847, %v1863
      %v1868 = vtanh.pop %v1866
      %v1869 = vtanh.pop %v1867
      %1872 = vrot.lane.b32.xlu0 %v1868, 64
      %v1873 = vpop.permute.xlu0 %1872
      %1874 = vrot.lane.b32.xlu0 %v1869, 64
      %v1875 = vpop.permute.xlu0 %1874
      %v1878 = vmul.f32 %v1830, %v1873
      %v1879 = vmul.f32 %v1832, %v1875
      %v1880 = vsel %vm609, 5, 2
      %vm1881 = vcmp.lt.s32.totalorder %v1880, %v773
      %vm1882 = vcmp.lt.s32.totalorder %v1880, %v776
      %v1885 = vrot.slane %v1878, 2
      %v1886 = vrot.slane %v1879, 2
      %v1887 = vsel %vm847, %v1885, %v1886
      %1888 = vrot.lane.b32.xlu0 %v1887, 32
      %v1889 = vpop.permute.xlu0 %1888
      %1890 = vrot.lane.b32.xlu0 %v1886, 32
      %v1891 = vpop.permute.xlu0 %1890
      %v1894 = vsel %vm1881, %v1889, %v1685
      %v1895 = vsel %vm1882, %v1891, %v1686
      %v1898 = vrot.slane %v1866, 2
      %v1899 = vrot.slane %v1867, 2
      %v1900 = vsel %vm847, %v1898, %v1899
      %1901 = vrot.lane.b32.xlu0 %v1900, 96
      %v1902 = vpop.permute.xlu0 %1901
      %1903 = vrot.lane.b32.xlu0 %v1899, 96
      %v1904 = vpop.permute.xlu0 %1903
      %v1907 = vsel %vm1881, %v1902, %v1695
      %v1908 = vsel %vm1882, %v1904, %v1696
      %v1909 = vsel %vm1287, %v1889, 0.0
      %v1910 = vsel %vm1288, %v1891, 0.0
      %s1911 = scalar_lea.vmem %s415, 80
      %1912 = vst.msk [vmem:[%s1911] sm:$0xff] %vm819, %v1909
      %1913 = vst.msk [vmem:[%s1911 + $0x8] sm:$0x3] %vm821, %v1910
      %1914 = vrot.lane.b32.xlu0 %v1887, 16
      %v1915 = vpop.permute.xlu0 %1914
      %1916 = vrot.lane.b32.xlu0 %v1886, 16
      %v1917 = vpop.permute.xlu0 %1916
      %v1920 = vsel %vm1272, %v1915, 0.0
      %v1921 = vsel %vm1273, %v1917, 0.0
      %s1922 = scalar_lea.vmem %s420, 32
      %1923 = vst.msk [vmem:[%s1922] sm:$0xff] %vm819, %v1920
      %1924 = vst.msk [vmem:[%s1922 + $0x8] sm:$0x3] %vm821, %v1921
      %v1926 = vrot.slane %v545, 6
      %v1927 = vrot.slane %v550, 6
      %v1928 = vsel %vm628, %v1926, %v1927
      %v1931 = vsel %vm625, %v575, %v1926
      %v1932 = vsel %vm625, %v580, %v1928
      %v1934 = vsel %vm442, %v1894, 0
      %v1937 = vsel %vm442, %v1895, 0
      %1939 = vmatprep.subr.mxu0 0.0
      %1940 = vmatpush1.msra.mxu0 0.0
      %1941 = vmatprep.subr.mxu0 0.0
      %1942 = vmatpush1.msra.mxu0 0.0
      %1943 = vmatprep.subr.mxu0 0.0
      %1944 = vmatpush1.msra.mxu0 0.0
      %1945 = vmatprep.subr.mxu0 0.0
      %1946 = vmatpush1.msra.mxu0 0.0
      %1947 = vmatprep.subr.mxu0 0.0
      %1948 = vmatpush1.msra.mxu0 0.0
      %1949 = vmatprep.subr.mxu0 0.0
      %1950 = vmatpush1.msra.mxu0 0.0
      %1951 = vmatprep.subr.mxu0 0.0
      %1952 = vmatpush1.msra.mxu0 0.0
      %1953 = vmatprep.subr.mxu0 0.0
      %1954 = vmatpush1.msra.mxu0 0.0
      %1955 = vmatprep.subr.mxu0 0.0
      %1956 = vmatpush1.msra.mxu0 0.0
      %1957 = vmatprep.subr.mxu0 0.0
      %1958 = vmatpush1.msra.mxu0 0.0
      %1959 = vmatprep.subr.mxu0 0.0
      %1960 = vmatpush1.msra.mxu0 0.0
      %1961 = vmatprep.subr.mxu0 0.0
      %1962 = vmatpush1.msra.mxu0 0.0
      %1963 = vmatprep.subr.mxu0 0.0
      %1964 = vmatpush1.msra.mxu0 %v591
      %1965 = vmatprep.subr.mxu0 0.0
      %1966 = vmatpush1.msra.mxu0 %v590
      %1967 = vmatprep.subr.mxu0 0.0
      %1968 = vmatpush1.msra.mxu0 %v589
      %1969 = vmatprep.subr.mxu0 0.0
      %1970 = vmatpush1.msra.mxu0 %v588
      %1971 = vmatprep.subr.mxu0 0.0
      %1972 = vmatpush2.msra.mxu0 0.0
      %1973 = vmatprep.subr.mxu0 0.0
      %1974 = vmatpush2.msra.mxu0 0.0
      %1975 = vmatprep.subr.mxu0 0.0
      %1976 = vmatpush2.msra.mxu0 0.0
      %1977 = vmatprep.subr.mxu0 0.0
      %1978 = vmatpush2.msra.mxu0 0.0
      %1979 = vmatprep.subr.mxu0 0.0
      %1980 = vmatpush2.msra.mxu0 0.0
      %1981 = vmatprep.subr.mxu0 0.0
      %1982 = vmatpush2.msra.mxu0 0.0
      %1983 = vmatprep.subr.mxu0 0.0
      %1984 = vmatpush2.msra.mxu0 0.0
      %1985 = vmatprep.subr.mxu0 0.0
      %1986 = vmatpush2.msra.mxu0 0.0
      %1987 = vmatprep.subr.mxu0 0.0
      %1988 = vmatpush2.msra.mxu0 0.0
      %1989 = vmatprep.subr.mxu0 0.0
      %1990 = vmatpush2.msra.mxu0 0.0
      %1991 = vmatprep.subr.mxu0 0.0
      %1992 = vmatpush2.msra.mxu0 0.0
      %1993 = vmatprep.subr.mxu0 0.0
      %1994 = vmatpush2.msra.mxu0 0.0
      %1995 = vmatprep.subr.mxu0 0.0
      %1996 = vmatpush2.msra.mxu0 0.0
      %1997 = vmatprep.subr.mxu0 0.0
      %1998 = vmatpush2.msra.mxu0 0.0
      %1999 = vmatprep.subr.mxu0 0.0
      %2000 = vmatpush2.msra.mxu0 0.0
      %2001 = vmatprep.subr.mxu0 0.0
      %2002 = vmatpush2.msra.mxu0 0.0
      %2003 = vmatprep.mubr.f32.mxu0 0.0
      %2004 = vmatmul.mubr.f32.gmra.mxu0 %v1934
      %v2005 = vpop.f32.mrf.mxu0
      %v2006 = vadd.f32 0.0, %v2005
      %v2007 = vpop.f32.mrf.mxu0
      %2008 = vmatprep.mubr.f32.mxu0 0.0
      %2009 = vmatmul.mubr.f32.gmra.mxu0 %v1937
      %v2010 = vpop.f32.mrf.mxu0
      %v2011 = vadd.f32 0.0, %v2010
      %v2012 = vpop.f32.mrf.mxu0
      %2013 = vdwg.mxu0
      %v2016 = vrot.slane %v2006, 4
      %v2017 = vrot.slane %v2011, 4
      %v2018 = vsel %vm1164, %v2016, %v2017
      %v2021 = vadd.f32 %v1931, %v2016
      %v2022 = vadd.f32 %v1932, %v2018
      %v2023 = vxor.u32 %v2021, 2147483648
      %v2024 = vxor.u32 %v2022, 2147483648
      %v2025 = vmul.f32 %v2023, 1.442695
      %v2026 = vpow.pop %v2025
      %v2027 = vmul.f32 %v2024, 1.442695
      %v2028 = vpow.pop %v2027
      %v2029 = vadd.f32 %v2026, 1.0
      %v2030 = vadd.f32 %v2028, 1.0
      %v2031 = vrcp.pop %v2029
      %v2032 = vmul.f32 1.0, %v2031
      %v2033 = vrcp.pop %v2030
      %v2034 = vmul.f32 1.0, %v2033
      %v2035 = vtanh.pop %v2021
      %v2036 = vtanh.pop %v2022
      %v2039 = vrot.slane %v1907, 4
      %v2040 = vrot.slane %v1908, 4
      %v2041 = vsel %vm1164, %v2039, %v2040
      %2042 = vrot.lane.b32.xlu0 %v2039, 32
      %v2043 = vpop.permute.xlu0 %2042
      %2044 = vrot.lane.b32.xlu0 %v2041, 32
      %v2045 = vpop.permute.xlu0 %2044
      %v2048 = vmul.f32 %v2032, %v2043
      %v2049 = vmul.f32 %v2034, %v2045
      %2052 = vrot.lane.b32.xlu0 %v2035, 64
      %v2053 = vpop.permute.xlu0 %2052
      %2054 = vrot.lane.b32.xlu0 %v2036, 64
      %v2055 = vpop.permute.xlu0 %2054
      %v2058 = vmul.f32 %v2032, %v2053
      %v2059 = vmul.f32 %v2034, %v2055
      %2062 = vrot.lane.b32.xlu0 %v2058, 32
      %v2063 = vpop.permute.xlu0 %2062
      %2064 = vrot.lane.b32.xlu0 %v2059, 32
      %v2065 = vpop.permute.xlu0 %2064
      %v2068 = vadd.f32 %v2048, %v2063
      %v2069 = vadd.f32 %v2049, %v2065
      %v2070 = vtanh.pop %v2068
      %v2071 = vtanh.pop %v2069
      %2074 = vrot.lane.b32.xlu0 %v2070, 64
      %v2075 = vpop.permute.xlu0 %2074
      %2076 = vrot.lane.b32.xlu0 %v2071, 64
      %v2077 = vpop.permute.xlu0 %2076
      %v2080 = vmul.f32 %v2032, %v2075
      %v2081 = vmul.f32 %v2034, %v2077
      %v2082 = vsel %vm609, 6, 1
      %vm2083 = vcmp.lt.s32.totalorder %v2082, %v773
      %vm2084 = vcmp.lt.s32.totalorder %v2082, %v776
      %v2087 = vrot.slane %v2080, 4
      %v2088 = vrot.slane %v2081, 4
      %v2089 = vsel %vm1164, %v2087, %v2088
      %2090 = vrot.lane.b32.xlu0 %v2089, 32
      %v2091 = vpop.permute.xlu0 %2090
      %2092 = vrot.lane.b32.xlu0 %v2088, 32
      %v2093 = vpop.permute.xlu0 %2092
      %v2096 = vsel %vm2083, %v2091, %v1894
      %v2097 = vsel %vm2084, %v2093, %v1895
      %v2100 = vrot.slane %v2068, 4
      %v2101 = vrot.slane %v2069, 4
      %v2102 = vsel %vm1164, %v2100, %v2101
      %2103 = vrot.lane.b32.xlu0 %v2102, 96
      %v2104 = vpop.permute.xlu0 %2103
      %2105 = vrot.lane.b32.xlu0 %v2101, 96
      %v2106 = vpop.permute.xlu0 %2105
      %v2109 = vsel %vm2083, %v2104, %v1907
      %v2110 = vsel %vm2084, %v2106, %v1908
      %v2111 = vsel %vm1060, %v2091, 0.0
      %v2112 = vsel %vm1061, %v2093, 0.0
      %s2113 = scalar_lea.vmem %s415, 96
      %2114 = vst.msk [vmem:[%s2113] sm:$0xff] %vm819, %v2111
      %2115 = vst.msk [vmem:[%s2113 + $0x8] sm:$0x3] %vm821, %v2112
      %2116 = vrot.lane.b32.xlu0 %v2089, 16
      %v2117 = vpop.permute.xlu0 %2116
      %2118 = vrot.lane.b32.xlu0 %v2088, 16
      %v2119 = vpop.permute.xlu0 %2118
      %v2122 = vsel %vm1045, %v2117, 0.0
      %v2123 = vsel %vm1046, %v2119, 0.0
      %s2124 = scalar_lea.vmem %s420, 16
      %2125 = vst.msk [vmem:[%s2124] sm:$0xff] %vm819, %v2122
      %2126 = vst.msk [vmem:[%s2124 + $0x8] sm:$0x3] %vm821, %v2123
      %v2128 = vrot.slane %v540, 2
      %v2129 = vrot.slane %v545, 2
      %v2130 = vsel %vm847, %v2128, %v2129
      %v2133 = vsel %vm625, %v580, %v2128
      %v2134 = vsel %vm625, %v585, %v2130
      %v2136 = vsel %vm442, %v2096, 0
      %v2139 = vsel %vm442, %v2097, 0
      %2141 = vmatprep.subr.mxu0 0.0
      %2142 = vmatpush1.msra.mxu0 0.0
      %2143 = vmatprep.subr.mxu0 0.0
      %2144 = vmatpush1.msra.mxu0 0.0
      %2145 = vmatprep.subr.mxu0 0.0
      %2146 = vmatpush1.msra.mxu0 0.0
      %2147 = vmatprep.subr.mxu0 0.0
      %2148 = vmatpush1.msra.mxu0 0.0
      %2149 = vmatprep.subr.mxu0 0.0
      %2150 = vmatpush1.msra.mxu0 0.0
      %2151 = vmatprep.subr.mxu0 0.0
      %2152 = vmatpush1.msra.mxu0 0.0
      %2153 = vmatprep.subr.mxu0 0.0
      %2154 = vmatpush1.msra.mxu0 0.0
      %2155 = vmatprep.subr.mxu0 0.0
      %2156 = vmatpush1.msra.mxu0 0.0
      %2157 = vmatprep.subr.mxu0 0.0
      %2158 = vmatpush1.msra.mxu0 0.0
      %2159 = vmatprep.subr.mxu0 0.0
      %2160 = vmatpush1.msra.mxu0 0.0
      %2161 = vmatprep.subr.mxu0 0.0
      %2162 = vmatpush1.msra.mxu0 0.0
      %2163 = vmatprep.subr.mxu0 0.0
      %2164 = vmatpush1.msra.mxu0 0.0
      %2165 = vmatprep.subr.mxu0 0.0
      %2166 = vmatpush1.msra.mxu0 %v591
      %2167 = vmatprep.subr.mxu0 0.0
      %2168 = vmatpush1.msra.mxu0 %v590
      %2169 = vmatprep.subr.mxu0 0.0
      %2170 = vmatpush1.msra.mxu0 %v589
      %2171 = vmatprep.subr.mxu0 0.0
      %2172 = vmatpush1.msra.mxu0 %v588
      %2173 = vmatprep.subr.mxu0 0.0
      %2174 = vmatpush2.msra.mxu0 0.0
      %2175 = vmatprep.subr.mxu0 0.0
      %2176 = vmatpush2.msra.mxu0 0.0
      %2177 = vmatprep.subr.mxu0 0.0
      %2178 = vmatpush2.msra.mxu0 0.0
      %2179 = vmatprep.subr.mxu0 0.0
      %2180 = vmatpush2.msra.mxu0 0.0
      %2181 = vmatprep.subr.mxu0 0.0
      %2182 = vmatpush2.msra.mxu0 0.0
      %2183 = vmatprep.subr.mxu0 0.0
      %2184 = vmatpush2.msra.mxu0 0.0
      %2185 = vmatprep.subr.mxu0 0.0
      %2186 = vmatpush2.msra.mxu0 0.0
      %2187 = vmatprep.subr.mxu0 0.0
      %2188 = vmatpush2.msra.mxu0 0.0
      %2189 = vmatprep.subr.mxu0 0.0
      %2190 = vmatpush2.msra.mxu0 0.0
      %2191 = vmatprep.subr.mxu0 0.0
      %2192 = vmatpush2.msra.mxu0 0.0
      %2193 = vmatprep.subr.mxu0 0.0
      %2194 = vmatpush2.msra.mxu0 0.0
      %2195 = vmatprep.subr.mxu0 0.0
      %2196 = vmatpush2.msra.mxu0 0.0
      %2197 = vmatprep.subr.mxu0 0.0
      %2198 = vmatpush2.msra.mxu0 0.0
      %2199 = vmatprep.subr.mxu0 0.0
      %2200 = vmatpush2.msra.mxu0 0.0
      %2201 = vmatprep.subr.mxu0 0.0
      %2202 = vmatpush2.msra.mxu0 0.0
      %2203 = vmatprep.subr.mxu0 0.0
      %2204 = vmatpush2.msra.mxu0 0.0
      %2205 = vmatprep.mubr.f32.mxu0 0.0
      %2206 = vmatmul.mubr.f32.gmra.mxu0 %v2136
      %v2207 = vpop.f32.mrf.mxu0
      %v2208 = vadd.f32 0.0, %v2207
      %v2209 = vpop.f32.mrf.mxu0
      %2210 = vmatprep.mubr.f32.mxu0 0.0
      %2211 = vmatmul.mubr.f32.gmra.mxu0 %v2139
      %v2212 = vpop.f32.mrf.mxu0
      %v2213 = vadd.f32 0.0, %v2212
      %v2214 = vpop.f32.mrf.mxu0
      %2215 = vdwg.mxu0
      %v2218 = vrot.slane %v2208, 2
      %v2219 = vrot.slane %v2213, 2
      %v2220 = vsel %vm847, %v2218, %v2219
      %v2223 = vadd.f32 %v2133, %v2218
      %v2224 = vadd.f32 %v2134, %v2220
      %v2225 = vxor.u32 %v2223, 2147483648
      %v2226 = vxor.u32 %v2224, 2147483648
      %v2227 = vmul.f32 %v2225, 1.442695
      %v2228 = vpow.pop %v2227
      %v2229 = vmul.f32 %v2226, 1.442695
      %v2230 = vpow.pop %v2229
      %v2231 = vadd.f32 %v2228, 1.0
      %v2232 = vadd.f32 %v2230, 1.0
      %v2233 = vrcp.pop %v2231
      %v2234 = vmul.f32 1.0, %v2233
      %v2235 = vrcp.pop %v2232
      %v2236 = vmul.f32 1.0, %v2235
      %v2237 = vtanh.pop %v2223
      %v2238 = vtanh.pop %v2224
      %v2241 = vrot.slane %v2109, 2
      %v2242 = vrot.slane %v2110, 2
      %v2243 = vsel %vm847, %v2241, %v2242
      %2244 = vrot.lane.b32.xlu0 %v2241, 32
      %v2245 = vpop.permute.xlu0 %2244
      %2246 = vrot.lane.b32.xlu0 %v2243, 32
      %v2247 = vpop.permute.xlu0 %2246
      %v2250 = vmul.f32 %v2234, %v2245
      %v2251 = vmul.f32 %v2236, %v2247
      %2254 = vrot.lane.b32.xlu0 %v2237, 64
      %v2255 = vpop.permute.xlu0 %2254
      %2256 = vrot.lane.b32.xlu0 %v2238, 64
      %v2257 = vpop.permute.xlu0 %2256
      %v2260 = vmul.f32 %v2234, %v2255
      %v2261 = vmul.f32 %v2236, %v2257
      %2264 = vrot.lane.b32.xlu0 %v2260, 32
      %v2265 = vpop.permute.xlu0 %2264
      %2266 = vrot.lane.b32.xlu0 %v2261, 32
      %v2267 = vpop.permute.xlu0 %2266
      %v2270 = vadd.f32 %v2250, %v2265
      %v2271 = vadd.f32 %v2251, %v2267
      %v2272 = vtanh.pop %v2270
      %v2273 = vtanh.pop %v2271
      %2276 = vrot.lane.b32.xlu0 %v2272, 64
      %v2277 = vpop.permute.xlu0 %2276
      %2278 = vrot.lane.b32.xlu0 %v2273, 64
      %v2279 = vpop.permute.xlu0 %2278
      %v2282 = vmul.f32 %v2234, %v2277
      %v2283 = vmul.f32 %v2236, %v2279
      %v2286 = vrot.slane %v2282, 6
      %v2287 = vrot.slane %v2283, 6
      %v2288 = vsel %vm628, %v2286, %v2287
      %2289 = vrot.lane.b32.xlu0 %v2288, 32
      %v2290 = vpop.permute.xlu0 %2289
      %2291 = vrot.lane.b32.xlu0 %v2287, 32
      %v2292 = vpop.permute.xlu0 %2291
      %v2295 = vsel %vm831, %v2290, 0.0
      %v2296 = vsel %vm832, %v2292, 0.0
      %s2297 = scalar_lea.vmem %s415, 112
      %2298 = vst.msk [vmem:[%s2297] sm:$0xff] %vm819, %v2295
      %2299 = vst.msk [vmem:[%s2297 + $0x8] sm:$0x3] %vm821, %v2296
      %2300 = vrot.lane.b32.xlu0 %v2288, 16
      %v2301 = vpop.permute.xlu0 %2300
      %2302 = vrot.lane.b32.xlu0 %v2287, 16
      %v2303 = vpop.permute.xlu0 %2302
      %v2306 = vsel %vm807, %v2301, 0.0
      %v2307 = vsel %vm808, %v2303, 0.0
      %2308 = vst.msk [vmem:[%s420] sm:$0xff] %vm819, %v2306
      %2309 = vst.msk [vmem:[%s420 + $0x8] sm:$0x3] %vm821, %v2307
      %p2310 = scmp.lt.s32.totalorder %s20, 1
      %s2311 = scalar_select %p2310, %s20, 1
      %s2312 = smul.addr %s2311, 16
      %s2313 = smul.addr %s2312, 8
      %s2314 = scalar_lea.vmem %s7, %s2313
      %p2315 = scmp.lt.s32.totalorder %s20, 1
      %s2316 = scalar_select %p2315, %s20, 1
      %s2317 = smul.addr %s2316, 16
      %s2318 = smul.addr %s2317, 8
      %s2319 = scalar_lea.vmem %s8, %s2318
      // Predicated region
      $region49: #{tpu_custom_call.1} parent=47 // pred_check
        %p2320 = pneg %p220
      $region50: #{tpu_custom_call.1} parent=47 // pred_check_branch
        %2322 = sbr.rel (%p2320) target = $region52
      $region51: #{tpu_custom_call.1} parent=47 // pred_region
        _
      $region52: #{tpu_custom_call.1} parent=47 // pred_fallthru
        _
      // Predicated region
      $region53: #{tpu_custom_call.1} parent=47 // pred_check
        %p2323 = pneg %p246
      $region54: #{tpu_custom_call.1} parent=47 // pred_check_branch
        %2325 = sbr.rel (%p2323) target = $region56
      $region55: #{tpu_custom_call.1} parent=47 // pred_region
        _
      $region56: #{tpu_custom_call.1} parent=47 // pred_fallthru
        _
    $region48: #{tpu_custom_call.1} parent=5 // pred_fallthru
      _
    %p2326 = scmp.le.s32.totalorder 2, %s15
    // Predicated region
    $region57: #{tpu_custom_call.1} parent=5 // pred_check
      %p2327 = pneg %p2326
    $region58: #{tpu_custom_call.1} parent=5 // pred_check_branch
      %2329 = sbr.rel (%p2327) target = $region60
    $region59: #{tpu_custom_call.1} parent=5 // pred_region
      %s2330 = ssub.s32 %s15, 2
      // Predicated region
      $region61: #{tpu_custom_call.1} parent=59 // pred_check
        %p2331 = pneg %p226
      $region62: #{tpu_custom_call.1} parent=59 // pred_check_branch
        %2333 = sbr.rel (%p2331) target = $region64
      $region63: #{tpu_custom_call.1} parent=59 // pred_region
        %p2334 = scmp.lt.s32.totalorder %s21, 1
        %s2335 = scalar_select %p2334, %s21, 1
        %s2336 = smul.addr %s2335, 16
        %s2337 = smul.addr %s2336, 8
        %s2338 = scalar_lea.vmem %s7, %s2337
      $region64: #{tpu_custom_call.1} parent=59 // pred_fallthru
        _
      // Predicated region
      $region65: #{tpu_custom_call.1} parent=59 // pred_check
        %p2339 = pneg %p252
      $region66: #{tpu_custom_call.1} parent=59 // pred_check_branch
        %2341 = sbr.rel (%p2339) target = $region68
      $region67: #{tpu_custom_call.1} parent=59 // pred_region
        %p2342 = scmp.lt.s32.totalorder %s21, 1
        %s2343 = scalar_select %p2342, %s21, 1
        %s2344 = smul.addr %s2343, 16
        %s2345 = smul.addr %s2344, 8
        %s2346 = scalar_lea.vmem %s8, %s2345
      $region68: #{tpu_custom_call.1} parent=59 // pred_fallthru
        _
    $region60: #{tpu_custom_call.1} parent=5 // pred_fallthru
      _
  $region6: #{tpu_custom_call.1} parent=0 // loop_footer
    %s19 = sadd.s32 1, %s15
  $region7: #{tpu_custom_call.1} parent=0 // loop_footer_branch
    %14 = sbr.rel target = $region3
  $region8: #{tpu_custom_call.1} parent=0 // loop_exit
    _

</llo_original>
